<compile_context>
chip_gen: v5e
topology: v5e:2x2
jax: 0.10.0
libtpu: 0.0.40
codegen_flags: <defaults>
</compile_context>

<pallas_src>
import functools

import jax
import jax.numpy as jnp
from jax import lax
from jax.experimental import pallas as pl
from jax.experimental.pallas import tpu as pltpu


# ----------------------------- Pallas kernel -----------------------------

def _slice2d(ref, r0, c0, nr, nc, stride):
    """Static (optionally strided) 2-D spatial slice of a (R, C, ch) ref."""
    if stride == 1:
        return ref[r0:r0 + nr, c0:c0 + nc, :]
    return ref[pl.ds(r0, nr, stride), pl.ds(c0, nc, stride), :]


def _bottleneck_kernel(x_ref, w1_ref, b1_ref, w2_ref, b2_ref, w3_ref, b3_ref,
                       *rest, stride, has_projection):
    """Fully fused Bottleneck forward for one image (NHWC tile in VMEM).

    BN scales are pre-folded into the weights; biases are per-output-channel.
    """
    if has_projection:
        ws_ref, bs_ref, o_ref, ypad_ref = rest
    else:
        o_ref, ypad_ref = rest

    H, W, Cin = x_ref.shape
    planes = w1_ref.shape[1]
    Ho, Wo, cout = o_ref.shape

    x = x_ref[...]                                          # (H, W, Cin)
    x2d = x.reshape(H * W, Cin)

    # ---- conv1 (1x1) + bn1 (scale folded) + relu ----
    y = jnp.dot(x2d, w1_ref[...], preferred_element_type=jnp.float32)
    y = jnp.maximum(y + b1_ref[...], 0.0)                   # (H*W, planes) f32

    # ---- conv1 output, zero padded (pad=1), kept entirely in VMEM ----
    # Only the 1-px border needs zeroing; the interior is fully overwritten.
    zrow = jnp.zeros((1, W + 2, planes), jnp.float32)
    zcol = jnp.zeros((H + 2, 1, planes), jnp.float32)
    ypad_ref[0:1, :, :] = zrow
    ypad_ref[H + 1:H + 2, :, :] = zrow
    ypad_ref[:, 0:1, :] = zcol
    ypad_ref[:, W + 1:W + 2, :] = zcol
    ypad_ref[1:H + 1, 1:W + 1, :] = y.reshape(H, W, planes)

    # ---- conv2 (3x3, stride, pad=1) + bn2 (folded) + relu ----
    # 9 shifted-slice matmuls accumulated in f32 (no im2col materialization).
    acc = jnp.zeros((Ho * Wo, planes), jnp.float32)
    for dy in range(3):
        for dx in range(3):
            patch = _slice2d(ypad_ref, dy, dx, Ho, Wo, stride)
            acc = acc + jnp.dot(patch.reshape(Ho * Wo, planes),
                                w2_ref[dy * 3 + dx],
                                preferred_element_type=jnp.float32)
    z = jnp.maximum(acc + b2_ref[...], 0.0)                 # (Ho*Wo, planes)

    # ---- conv3 (1x1) + bn3 (folded) ----
    out = jnp.dot(z, w3_ref[...], preferred_element_type=jnp.float32) + b3_ref[...]

    # ---- shortcut: reuses the VMEM-resident input tile ----
    if has_projection:
        if stride == 1:
            xs = x2d
        else:
            xs = _slice2d(x_ref, 0, 0, Ho, Wo, stride).reshape(Ho * Wo, Cin)
        sc = jnp.dot(xs, ws_ref[...], preferred_element_type=jnp.float32) + bs_ref[...]
    else:
        # PyTorch identity shortcut (stride == 1 and in_planes == 4*planes).
        sc = x2d

    # ---- residual add + relu ----
    o_ref[...] = jnp.maximum(out + sc, 0.0).reshape(Ho, Wo, cout).astype(o_ref.dtype)


# ----------------------------- pallas_call wrapper -----------------------------

def bottleneck_forward(x_nchw, params, stride=1):
    x = jnp.transpose(x_nchw, (0, 2, 3, 1)).astype(jnp.float32)   # NHWC
    N, H, W, Cin = x.shape
    planes = params["w1"].shape[1]
    cout = params["w3"].shape[1]
    Ho = (H + 2 - 3) // stride + 1
    Wo = (W + 2 - 3) // stride + 1
    has_projection = "ws" in params

    # Fold BN scale into conv weights (scales the output-channel axis).
    w1 = params["w1"] * params["s1"]                  # (Cin, planes)
    w2 = params["w2"] * params["s2"]                  # (9, planes, planes)
    w3 = params["w3"] * params["s3"]                  # (planes, cout)

    in_specs = [
        pl.BlockSpec((pl.Squeezed(), H, W, Cin), lambda n: (n, 0, 0, 0)),
        pl.BlockSpec((Cin, planes), lambda n: (0, 0)),
        pl.BlockSpec((1, planes), lambda n: (0, 0)),
        pl.BlockSpec((9, planes, planes), lambda n: (0, 0, 0)),
        pl.BlockSpec((1, planes), lambda n: (0, 0)),
        pl.BlockSpec((planes, cout), lambda n: (0, 0)),
        pl.BlockSpec((1, cout), lambda n: (0, 0)),
    ]
    args = [x, w1, params["b1"], w2, params["b2"], w3, params["b3"]]
    if has_projection:
        ws = params["ws"] * params["ss"]              # (Cin, cout)
        in_specs += [pl.BlockSpec((Cin, cout), lambda n: (0, 0)),
                     pl.BlockSpec((1, cout), lambda n: (0, 0))]
        args += [ws, params["bs"]]

    kernel = functools.partial(_bottleneck_kernel, stride=stride,
                               has_projection=has_projection)
    out = pl.pallas_call(
        kernel,
        out_shape=jax.ShapeDtypeStruct((N, Ho, Wo, cout), jnp.float32),
        grid_spec=pltpu.PrefetchScalarGridSpec(
            num_scalar_prefetch=0,
            grid=(N,),
            in_specs=in_specs,
            out_specs=pl.BlockSpec((pl.Squeezed(), Ho, Wo, cout),
                                   lambda n: (n, 0, 0, 0)),
            scratch_shapes=[pltpu.VMEM((H + 2, W + 2, planes), jnp.float32)],
        ),
        compiler_params=pltpu.CompilerParams(
            dimension_semantics=("parallel",),
            vmem_limit_bytes=64 * 1024 * 1024,
        ),
    )(*args)
    return jnp.transpose(out, (0, 3, 1, 2))                       # back to NCHW


# ----------------------------- reference (pure JAX) -----------------------------

def _conv_nhwc(x, w_hwio, stride, padding):
    return lax.conv_general_dilated(
        x, w_hwio, (stride, stride), padding,
        dimension_numbers=("NHWC", "HWIO", "NHWC"))


def bottleneck_reference(x_nchw, params, stride=1):
    x = jnp.transpose(x_nchw, (0, 2, 3, 1))
    Cin = x.shape[-1]
    planes = params["w1"].shape[1]
    cout = params["w3"].shape[1]

    def bn(y, s, b):
        return y * s.reshape(1, 1, 1, -1) + b.reshape(1, 1, 1, -1)

    out = jax.nn.relu(bn(_conv_nhwc(x, params["w1"].reshape(1, 1, Cin, planes), 1,
                                    "VALID"), params["s1"], params["b1"]))
    out = jax.nn.relu(bn(_conv_nhwc(out, params["w2"].reshape(3, 3, planes, planes),
                                    stride, [(1, 1), (1, 1)]),
                         params["s2"], params["b2"]))
    out = bn(_conv_nhwc(out, params["w3"].reshape(1, 1, planes, cout), 1, "VALID"),
             params["s3"], params["b3"])
    if "ws" in params:
        sc = bn(_conv_nhwc(x, params["ws"].reshape(1, 1, Cin, cout), stride,
                           "VALID"), params["ss"], params["bs"])
    else:
        sc = x
    out = jax.nn.relu(out + sc)
    return jnp.transpose(out, (0, 3, 1, 2))


# ----------------------------- parameter init -----------------------------

def make_params(key, in_planes, planes, stride=1, expansion=4, eps=1e-5):
    ks = jax.random.split(key, 20)
    cout = planes * expansion
    needs_proj = (stride != 1) or (in_planes != cout)

    def bn_fold(kg, kb, km, kv, c):
        gamma = jax.random.uniform(kg, (c,), minval=0.5, maxval=1.5)
        beta = jax.random.normal(kb, (c,)) * 0.1
        mean = jax.random.normal(km, (c,)) * 0.1
        var = jax.random.uniform(kv, (c,), minval=0.5, maxval=1.5)
        scale = gamma / jnp.sqrt(var + eps)
        bias = beta - mean * scale
        return (scale.reshape(1, c).astype(jnp.float32),
                bias.reshape(1, c).astype(jnp.float32))

    w1 = (jax.random.normal(ks[0], (in_planes, planes)) * 0.1).astype(jnp.float32)
    w2 = (jax.random.normal(ks[1], (3, 3, planes, planes)) * 0.1).astype(jnp.float32)
    w2 = w2.reshape(9, planes, planes)            # w2[dy*3+dx] = (Cin, Cout) tap
    w3 = (jax.random.normal(ks[2], (planes, cout)) * 0.1).astype(jnp.float32)

    s1, b1 = bn_fold(ks[4], ks[5], ks[6], ks[7], planes)
    s2, b2 = bn_fold(ks[8], ks[9], ks[10], ks[11], planes)
    s3, b3 = bn_fold(ks[12], ks[13], ks[14], ks[15], cout)

    params = dict(w1=w1, s1=s1, b1=b1, w2=w2, s2=s2, b2=b2, w3=w3, s3=s3, b3=b3)
    if needs_proj:
        ws = (jax.random.normal(ks[3], (in_planes, cout)) * 0.1).astype(jnp.float32)
        ss, bs = bn_fold(ks[16], ks[17], ks[18], ks[19], cout)
        params.update(ws=ws, ss=ss, bs=bs)
    return params


# ----------------------------- main -----------------------------

if __name__ == "__main__":
    key = jax.random.PRNGKey(0)
    k_x1, k_p1, k_x2, k_p2 = jax.random.split(key, 4)

    # Case 1: projection shortcut (in_planes != expansion*planes), stride=1.
    batch, in_planes, planes, spatial, stride = 2, 4, 4, 16, 1
    x = jax.random.normal(k_x1, (batch, in_planes, spatial, spatial), jnp.float32)
    params = make_params(k_p1, in_planes, planes, stride=stride)
    out = jax.block_until_ready(bottleneck_forward(x, params, stride=stride))
    ref = bottleneck_reference(x, params, stride=stride)
    assert out.shape == (batch, planes * 4, spatial, spatial), out.shape
    assert jnp.allclose(out, ref, atol=1e-4, rtol=1e-4), float(jnp.max(jnp.abs(out - ref)))

    # Case 2: identity shortcut (in_planes == expansion*planes), stride=1.
    in_planes2, planes2 = 16, 4
    x2 = jax.random.normal(k_x2, (batch, in_planes2, spatial, spatial), jnp.float32)
    params2 = make_params(k_p2, in_planes2, planes2, stride=1)
    out2 = jax.block_until_ready(bottleneck_forward(x2, params2, stride=1))
    ref2 = bottleneck_reference(x2, params2, stride=1)
    assert out2.shape == (batch, planes2 * 4, spatial, spatial), out2.shape
    assert jnp.allclose(out2, ref2, atol=1e-4, rtol=1e-4), float(jnp.max(jnp.abs(out2 - ref2)))

    print("KERNEL_OK")
</pallas_src>

<mosaic_0001>
module attributes {stable_mosaic.version = 11 : i64} {
  func.func @_bottleneck_kernel(%arg0: i32, %arg1: memref<1x16x16x4xf32, #tpu.memory_space<vmem>>, %arg2: memref<4x4xf32, #tpu.memory_space<vmem>>, %arg3: memref<1x4xf32, #tpu.memory_space<vmem>>, %arg4: memref<9x4x4xf32, #tpu.memory_space<vmem>>, %arg5: memref<1x4xf32, #tpu.memory_space<vmem>>, %arg6: memref<4x16xf32, #tpu.memory_space<vmem>>, %arg7: memref<1x16xf32, #tpu.memory_space<vmem>>, %arg8: memref<4x16xf32, #tpu.memory_space<vmem>>, %arg9: memref<1x16xf32, #tpu.memory_space<vmem>>, %arg10: memref<1x16x16x16xf32, #tpu.memory_space<vmem>>, %arg11: memref<18x18x4xf32, #tpu.memory_space<vmem>>) attributes {dimension_semantics = [#tpu.dimension_semantics<parallel>], iteration_bounds = array<i64: 2>, scalar_prefetch = 0 : i64, scratch_operands = 1 : i64, tpu.core_type = #tpu.core_type<tc>, window_params = [{transform_indices = @transform_0, window_bounds = array<i64: 1, 16, 16, 4>}, {pipeline_mode = #tpu.pipeline_mode<synchronous>, transform_indices = @transform_1, window_bounds = array<i64: 4, 4>}, {pipeline_mode = #tpu.pipeline_mode<synchronous>, transform_indices = @transform_2, window_bounds = array<i64: 1, 4>}, {pipeline_mode = #tpu.pipeline_mode<synchronous>, transform_indices = @transform_3, window_bounds = array<i64: 9, 4, 4>}, {pipeline_mode = #tpu.pipeline_mode<synchronous>, transform_indices = @transform_4, window_bounds = array<i64: 1, 4>}, {pipeline_mode = #tpu.pipeline_mode<synchronous>, transform_indices = @transform_5, window_bounds = array<i64: 4, 16>}, {pipeline_mode = #tpu.pipeline_mode<synchronous>, transform_indices = @transform_6, window_bounds = array<i64: 1, 16>}, {pipeline_mode = #tpu.pipeline_mode<synchronous>, transform_indices = @transform_7, window_bounds = array<i64: 4, 16>}, {pipeline_mode = #tpu.pipeline_mode<synchronous>, transform_indices = @transform_8, window_bounds = array<i64: 1, 16>}, {transform_indices = @transform_9, window_bounds = array<i64: 1, 16, 16, 16>}]} {
    %c0 = arith.constant 0 : index
    %c0_0 = arith.constant 0 : index
    %c0_1 = arith.constant 0 : index
    %c0_2 = arith.constant 0 : index
    %0 = vector.load %arg1[%c0, %c0_0, %c0_1, %c0_2] : memref<1x16x16x4xf32, #tpu.memory_space<vmem>>, vector<1x16x16x4xf32>
    %1 = vector.shape_cast %0 : vector<1x16x16x4xf32> to vector<16x16x4xf32>
    %2 = vector.shape_cast %1 : vector<16x16x4xf32> to vector<256x4xf32>
    %c0_3 = arith.constant 0 : index
    %c0_4 = arith.constant 0 : index
    %3 = vector.load %arg2[%c0_3, %c0_4] : memref<4x4xf32, #tpu.memory_space<vmem>>, vector<4x4xf32>
    %cst = arith.constant dense<0.000000e+00> : vector<256x4xf32>
    %4 = tpu.matmul %2, %3, %cst {dimension_numbers = #tpu.dot_dimension_numbers<[1], [0], [0], [1], [0, 0, 1, 1], [], []>} : vector<256x4xf32>, vector<4x4xf32>, vector<256x4xf32> -> vector<256x4xf32>
    %c0_5 = arith.constant 0 : index
    %c0_6 = arith.constant 0 : index
    %5 = vector.load %arg3[%c0_5, %c0_6] : memref<1x4xf32, #tpu.memory_space<vmem>>, vector<1x4xf32>
    %6 = vector.broadcast %5 : vector<1x4xf32> to vector<256x4xf32>
    %7 = arith.addf %4, %6 : vector<256x4xf32>
    %cst_7 = arith.constant 0.000000e+00 : f32
    %8 = vector.broadcast %cst_7 : f32 to vector<256x4xf32>
    %9 = arith.maximumf %7, %8 : vector<256x4xf32>
    %cst_8 = arith.constant 0.000000e+00 : f32
    %10 = vector.broadcast %cst_8 : f32 to vector<1x18x4xf32>
    %cst_9 = arith.constant 0.000000e+00 : f32
    %11 = vector.broadcast %cst_9 : f32 to vector<18x1x4xf32>
    %c0_10 = arith.constant 0 : index
    %c0_11 = arith.constant 0 : index
    %c0_12 = arith.constant 0 : index
    %12 = vector.load %arg11[%c0_10, %c0_11, %c0_12] : memref<18x18x4xf32, #tpu.memory_space<vmem>>, vector<1x18x4xf32>
    tpu.vector_store %arg11[%c0_10, %c0_11, %c0_12], %10 {strides = array<i32>} : memref<18x18x4xf32, #tpu.memory_space<vmem>>, vector<1x18x4xf32>,
    %c17 = arith.constant 17 : index
    %c0_13 = arith.constant 0 : index
    %c0_14 = arith.constant 0 : index
    %13 = vector.load %arg11[%c17, %c0_13, %c0_14] : memref<18x18x4xf32, #tpu.memory_space<vmem>>, vector<1x18x4xf32>
    tpu.vector_store %arg11[%c17, %c0_13, %c0_14], %10 {strides = array<i32>} : memref<18x18x4xf32, #tpu.memory_space<vmem>>, vector<1x18x4xf32>,
    %c0_15 = arith.constant 0 : index
    %c0_16 = arith.constant 0 : index
    %c0_17 = arith.constant 0 : index
    %14 = vector.load %arg11[%c0_15, %c0_16, %c0_17] : memref<18x18x4xf32, #tpu.memory_space<vmem>>, vector<18x1x4xf32>
    tpu.vector_store %arg11[%c0_15, %c0_16, %c0_17], %11 {strides = array<i32>} : memref<18x18x4xf32, #tpu.memory_space<vmem>>, vector<18x1x4xf32>,
    %c0_18 = arith.constant 0 : index
    %c17_19 = arith.constant 17 : index
    %c0_20 = arith.constant 0 : index
    %15 = vector.load %arg11[%c0_18, %c17_19, %c0_20] : memref<18x18x4xf32, #tpu.memory_space<vmem>>, vector<18x1x4xf32>
    tpu.vector_store %arg11[%c0_18, %c17_19, %c0_20], %11 {strides = array<i32>} : memref<18x18x4xf32, #tpu.memory_space<vmem>>, vector<18x1x4xf32>,
    %16 = vector.shape_cast %9 : vector<256x4xf32> to vector<16x16x4xf32>
    %c1 = arith.constant 1 : index
    %c1_21 = arith.constant 1 : index
    %c0_22 = arith.constant 0 : index
    %17 = vector.load %arg11[%c1, %c1_21, %c0_22] : memref<18x18x4xf32, #tpu.memory_space<vmem>>, vector<16x16x4xf32>
    tpu.vector_store %arg11[%c1, %c1_21, %c0_22], %16 {strides = array<i32>} : memref<18x18x4xf32, #tpu.memory_space<vmem>>, vector<16x16x4xf32>,
    %cst_23 = arith.constant 0.000000e+00 : f32
    %18 = vector.broadcast %cst_23 : f32 to vector<256x4xf32>
    %c0_24 = arith.constant 0 : index
    %c0_25 = arith.constant 0 : index
    %c0_26 = arith.constant 0 : index
    %19 = vector.load %arg11[%c0_24, %c0_25, %c0_26] : memref<18x18x4xf32, #tpu.memory_space<vmem>>, vector<16x16x4xf32>
    %20 = vector.shape_cast %19 : vector<16x16x4xf32> to vector<256x4xf32>
    %c0_27 = arith.constant 0 : index
    %c0_28 = arith.constant 0 : index
    %c0_29 = arith.constant 0 : index
    %21 = vector.load %arg4[%c0_27, %c0_28, %c0_29] : memref<9x4x4xf32, #tpu.memory_space<vmem>>, vector<1x4x4xf32>
    %22 = vector.shape_cast %21 : vector<1x4x4xf32> to vector<4x4xf32>
    %cst_30 = arith.constant dense<0.000000e+00> : vector<256x4xf32>
    %23 = tpu.matmul %20, %22, %cst_30 {dimension_numbers = #tpu.dot_dimension_numbers<[1], [0], [0], [1], [0, 0, 1, 1], [], []>} : vector<256x4xf32>, vector<4x4xf32>, vector<256x4xf32> -> vector<256x4xf32>
    %24 = arith.addf %18, %23 : vector<256x4xf32>
    %c0_31 = arith.constant 0 : index
    %c1_32 = arith.constant 1 : index
    %c0_33 = arith.constant 0 : index
    %25 = vector.load %arg11[%c0_31, %c1_32, %c0_33] : memref<18x18x4xf32, #tpu.memory_space<vmem>>, vector<16x16x4xf32>
    %26 = vector.shape_cast %25 : vector<16x16x4xf32> to vector<256x4xf32>
    %c1_34 = arith.constant 1 : index
    %c0_35 = arith.constant 0 : index
    %c0_36 = arith.constant 0 : index
    %27 = vector.load %arg4[%c1_34, %c0_35, %c0_36] : memref<9x4x4xf32, #tpu.memory_space<vmem>>, vector<1x4x4xf32>
    %28 = vector.shape_cast %27 : vector<1x4x4xf32> to vector<4x4xf32>
    %cst_37 = arith.constant dense<0.000000e+00> : vector<256x4xf32>
    %29 = tpu.matmul %26, %28, %cst_37 {dimension_numbers = #tpu.dot_dimension_numbers<[1], [0], [0], [1], [0, 0, 1, 1], [], []>} : vector<256x4xf32>, vector<4x4xf32>, vector<256x4xf32> -> vector<256x4xf32>
    %30 = arith.addf %24, %29 : vector<256x4xf32>
    %c0_38 = arith.constant 0 : index
    %c2 = arith.constant 2 : index
    %c0_39 = arith.constant 0 : index
    %31 = vector.load %arg11[%c0_38, %c2, %c0_39] : memref<18x18x4xf32, #tpu.memory_space<vmem>>, vector<16x16x4xf32>
    %32 = vector.shape_cast %31 : vector<16x16x4xf32> to vector<256x4xf32>
    %c2_40 = arith.constant 2 : index
    %c0_41 = arith.constant 0 : index
    %c0_42 = arith.constant 0 : index
    %33 = vector.load %arg4[%c2_40, %c0_41, %c0_42] : memref<9x4x4xf32, #tpu.memory_space<vmem>>, vector<1x4x4xf32>
    %34 = vector.shape_cast %33 : vector<1x4x4xf32> to vector<4x4xf32>
    %cst_43 = arith.constant dense<0.000000e+00> : vector<256x4xf32>
    %35 = tpu.matmul %32, %34, %cst_43 {dimension_numbers = #tpu.dot_dimension_numbers<[1], [0], [0], [1], [0, 0, 1, 1], [], []>} : vector<256x4xf32>, vector<4x4xf32>, vector<256x4xf32> -> vector<256x4xf32>
    %36 = arith.addf %30, %35 : vector<256x4xf32>
    %c1_44 = arith.constant 1 : index
    %c0_45 = arith.constant 0 : index
    %c0_46 = arith.constant 0 : index
    %37 = vector.load %arg11[%c1_44, %c0_45, %c0_46] : memref<18x18x4xf32, #tpu.memory_space<vmem>>, vector<16x16x4xf32>
    %38 = vector.shape_cast %37 : vector<16x16x4xf32> to vector<256x4xf32>
    %c3 = arith.constant 3 : index
    %c0_47 = arith.constant 0 : index
    %c0_48 = arith.constant 0 : index
    %39 = vector.load %arg4[%c3, %c0_47, %c0_48] : memref<9x4x4xf32, #tpu.memory_space<vmem>>, vector<1x4x4xf32>
    %40 = vector.shape_cast %39 : vector<1x4x4xf32> to vector<4x4xf32>
    %cst_49 = arith.constant dense<0.000000e+00> : vector<256x4xf32>
    %41 = tpu.matmul %38, %40, %cst_49 {dimension_numbers = #tpu.dot_dimension_numbers<[1], [0], [0], [1], [0, 0, 1, 1], [], []>} : vector<256x4xf32>, vector<4x4xf32>, vector<256x4xf32> -> vector<256x4xf32>
    %42 = arith.addf %36, %41 : vector<256x4xf32>
    %c1_50 = arith.constant 1 : index
    %c1_51 = arith.constant 1 : index
    %c0_52 = arith.constant 0 : index
    %43 = vector.load %arg11[%c1_50, %c1_51, %c0_52] : memref<18x18x4xf32, #tpu.memory_space<vmem>>, vector<16x16x4xf32>
    %44 = vector.shape_cast %43 : vector<16x16x4xf32> to vector<256x4xf32>
    %c4 = arith.constant 4 : index
    %c0_53 = arith.constant 0 : index
    %c0_54 = arith.constant 0 : index
    %45 = vector.load %arg4[%c4, %c0_53, %c0_54] : memref<9x4x4xf32, #tpu.memory_space<vmem>>, vector<1x4x4xf32>
    %46 = vector.shape_cast %45 : vector<1x4x4xf32> to vector<4x4xf32>
    %cst_55 = arith.constant dense<0.000000e+00> : vector<256x4xf32>
    %47 = tpu.matmul %44, %46, %cst_55 {dimension_numbers = #tpu.dot_dimension_numbers<[1], [0], [0], [1], [0, 0, 1, 1], [], []>} : vector<256x4xf32>, vector<4x4xf32>, vector<256x4xf32> -> vector<256x4xf32>
    %48 = arith.addf %42, %47 : vector<256x4xf32>
    %c1_56 = arith.constant 1 : index
    %c2_57 = arith.constant 2 : index
    %c0_58 = arith.constant 0 : index
    %49 = vector.load %arg11[%c1_56, %c2_57, %c0_58] : memref<18x18x4xf32, #tpu.memory_space<vmem>>, vector<16x16x4xf32>
    %50 = vector.shape_cast %49 : vector<16x16x4xf32> to vector<256x4xf32>
    %c5 = arith.constant 5 : index
    %c0_59 = arith.constant 0 : index
    %c0_60 = arith.constant 0 : index
    %51 = vector.load %arg4[%c5, %c0_59, %c0_60] : memref<9x4x4xf32, #tpu.memory_space<vmem>>, vector<1x4x4xf32>
    %52 = vector.shape_cast %51 : vector<1x4x4xf32> to vector<4x4xf32>
    %cst_61 = arith.constant dense<0.000000e+00> : vector<256x4xf32>
    %53 = tpu.matmul %50, %52, %cst_61 {dimension_numbers = #tpu.dot_dimension_numbers<[1], [0], [0], [1], [0, 0, 1, 1], [], []>} : vector<256x4xf32>, vector<4x4xf32>, vector<256x4xf32> -> vector<256x4xf32>
    %54 = arith.addf %48, %53 : vector<256x4xf32>
    %c2_62 = arith.constant 2 : index
    %c0_63 = arith.constant 0 : index
    %c0_64 = arith.constant 0 : index
    %55 = vector.load %arg11[%c2_62, %c0_63, %c0_64] : memref<18x18x4xf32, #tpu.memory_space<vmem>>, vector<16x16x4xf32>
    %56 = vector.shape_cast %55 : vector<16x16x4xf32> to vector<256x4xf32>
    %c6 = arith.constant 6 : index
    %c0_65 = arith.constant 0 : index
    %c0_66 = arith.constant 0 : index
    %57 = vector.load %arg4[%c6, %c0_65, %c0_66] : memref<9x4x4xf32, #tpu.memory_space<vmem>>, vector<1x4x4xf32>
    %58 = vector.shape_cast %57 : vector<1x4x4xf32> to vector<4x4xf32>
    %cst_67 = arith.constant dense<0.000000e+00> : vector<256x4xf32>
    %59 = tpu.matmul %56, %58, %cst_67 {dimension_numbers = #tpu.dot_dimension_numbers<[1], [0], [0], [1], [0, 0, 1, 1], [], []>} : vector<256x4xf32>, vector<4x4xf32>, vector<256x4xf32> -> vector<256x4xf32>
    %60 = arith.addf %54, %59 : vector<256x4xf32>
    %c2_68 = arith.constant 2 : index
    %c1_69 = arith.constant 1 : index
    %c0_70 = arith.constant 0 : index
    %61 = vector.load %arg11[%c2_68, %c1_69, %c0_70] : memref<18x18x4xf32, #tpu.memory_space<vmem>>, vector<16x16x4xf32>
    %62 = vector.shape_cast %61 : vector<16x16x4xf32> to vector<256x4xf32>
    %c7 = arith.constant 7 : index
    %c0_71 = arith.constant 0 : index
    %c0_72 = arith.constant 0 : index
    %63 = vector.load %arg4[%c7, %c0_71, %c0_72] : memref<9x4x4xf32, #tpu.memory_space<vmem>>, vector<1x4x4xf32>
    %64 = vector.shape_cast %63 : vector<1x4x4xf32> to vector<4x4xf32>
    %cst_73 = arith.constant dense<0.000000e+00> : vector<256x4xf32>
    %65 = tpu.matmul %62, %64, %cst_73 {dimension_numbers = #tpu.dot_dimension_numbers<[1], [0], [0], [1], [0, 0, 1, 1], [], []>} : vector<256x4xf32>, vector<4x4xf32>, vector<256x4xf32> -> vector<256x4xf32>
    %66 = arith.addf %60, %65 : vector<256x4xf32>
    %c2_74 = arith.constant 2 : index
    %c2_75 = arith.constant 2 : index
    %c0_76 = arith.constant 0 : index
    %67 = vector.load %arg11[%c2_74, %c2_75, %c0_76] : memref<18x18x4xf32, #tpu.memory_space<vmem>>, vector<16x16x4xf32>
    %68 = vector.shape_cast %67 : vector<16x16x4xf32> to vector<256x4xf32>
    %c8 = arith.constant 8 : index
    %c0_77 = arith.constant 0 : index
    %c0_78 = arith.constant 0 : index
    %69 = vector.load %arg4[%c8, %c0_77, %c0_78] : memref<9x4x4xf32, #tpu.memory_space<vmem>>, vector<1x4x4xf32>
    %70 = vector.shape_cast %69 : vector<1x4x4xf32> to vector<4x4xf32>
    %cst_79 = arith.constant dense<0.000000e+00> : vector<256x4xf32>
    %71 = tpu.matmul %68, %70, %cst_79 {dimension_numbers = #tpu.dot_dimension_numbers<[1], [0], [0], [1], [0, 0, 1, 1], [], []>} : vector<256x4xf32>, vector<4x4xf32>, vector<256x4xf32> -> vector<256x4xf32>
    %72 = arith.addf %66, %71 : vector<256x4xf32>
    %c0_80 = arith.constant 0 : index
    %c0_81 = arith.constant 0 : index
    %73 = vector.load %arg5[%c0_80, %c0_81] : memref<1x4xf32, #tpu.memory_space<vmem>>, vector<1x4xf32>
    %74 = vector.broadcast %73 : vector<1x4xf32> to vector<256x4xf32>
    %75 = arith.addf %72, %74 : vector<256x4xf32>
    %cst_82 = arith.constant 0.000000e+00 : f32
    %76 = vector.broadcast %cst_82 : f32 to vector<256x4xf32>
    %77 = arith.maximumf %75, %76 : vector<256x4xf32>
    %c0_83 = arith.constant 0 : index
    %c0_84 = arith.constant 0 : index
    %78 = vector.load %arg6[%c0_83, %c0_84] : memref<4x16xf32, #tpu.memory_space<vmem>>, vector<4x16xf32>
    %cst_85 = arith.constant dense<0.000000e+00> : vector<256x16xf32>
    %79 = tpu.matmul %77, %78, %cst_85 {dimension_numbers = #tpu.dot_dimension_numbers<[1], [0], [0], [1], [0, 0, 1, 1], [], []>} : vector<256x4xf32>, vector<4x16xf32>, vector<256x16xf32> -> vector<256x16xf32>
    %c0_86 = arith.constant 0 : index
    %c0_87 = arith.constant 0 : index
    %80 = vector.load %arg7[%c0_86, %c0_87] : memref<1x16xf32, #tpu.memory_space<vmem>>, vector<1x16xf32>
    %81 = vector.broadcast %80 : vector<1x16xf32> to vector<256x16xf32>
    %82 = arith.addf %79, %81 : vector<256x16xf32>
    %c0_88 = arith.constant 0 : index
    %c0_89 = arith.constant 0 : index
    %83 = vector.load %arg8[%c0_88, %c0_89] : memref<4x16xf32, #tpu.memory_space<vmem>>, vector<4x16xf32>
    %cst_90 = arith.constant dense<0.000000e+00> : vector<256x16xf32>
    %84 = tpu.matmul %2, %83, %cst_90 {dimension_numbers = #tpu.dot_dimension_numbers<[1], [0], [0], [1], [0, 0, 1, 1], [], []>} : vector<256x4xf32>, vector<4x16xf32>, vector<256x16xf32> -> vector<256x16xf32>
    %c0_91 = arith.constant 0 : index
    %c0_92 = arith.constant 0 : index
    %85 = vector.load %arg9[%c0_91, %c0_92] : memref<1x16xf32, #tpu.memory_space<vmem>>, vector<1x16xf32>
    %86 = vector.broadcast %85 : vector<1x16xf32> to vector<256x16xf32>
    %87 = arith.addf %84, %86 : vector<256x16xf32>
    %88 = arith.addf %82, %87 : vector<256x16xf32>
    %cst_93 = arith.constant 0.000000e+00 : f32
    %89 = vector.broadcast %cst_93 : f32 to vector<256x16xf32>
    %90 = arith.maximumf %88, %89 : vector<256x16xf32>
    %91 = vector.shape_cast %90 : vector<256x16xf32> to vector<16x16x16xf32>
    %c0_94 = arith.constant 0 : index
    %c0_95 = arith.constant 0 : index
    %c0_96 = arith.constant 0 : index
    %c0_97 = arith.constant 0 : index
    %92 = vector.load %arg10[%c0_94, %c0_95, %c0_96, %c0_97] : memref<1x16x16x16xf32, #tpu.memory_space<vmem>>, vector<1x16x16x16xf32>
    %93 = vector.shape_cast %92 : vector<1x16x16x16xf32> to vector<16x16x16xf32>
    %94 = vector.shape_cast %91 : vector<16x16x16xf32> to vector<1x16x16x16xf32>
    tpu.vector_store %arg10[%c0_94, %c0_95, %c0_96, %c0_97], %94 {strides = array<i32>} : memref<1x16x16x16xf32, #tpu.memory_space<vmem>>, vector<1x16x16x16xf32>,
    return
  }
  func.func @transform_0(%arg0: i32) -> (i32, i32, i32, i32) {
    %c0_i32 = arith.constant 0 : i32
    %c0_i32_0 = arith.constant 0 : i32
    %c0_i32_1 = arith.constant 0 : i32
    %c0_i32_2 = arith.constant 0 : i32
    return %arg0, %c0_i32, %c0_i32_0, %c0_i32_1 : i32, i32, i32, i32
  }
  func.func @transform_1(%arg0: i32) -> (i32, i32) {
    %c0_i32 = arith.constant 0 : i32
    %c0_i32_0 = arith.constant 0 : i32
    %c0_i32_1 = arith.constant 0 : i32
    return %c0_i32, %c0_i32_0 : i32, i32
  }
  func.func @transform_2(%arg0: i32) -> (i32, i32) {
    %c0_i32 = arith.constant 0 : i32
    %c0_i32_0 = arith.constant 0 : i32
    %c0_i32_1 = arith.constant 0 : i32
    return %c0_i32, %c0_i32_0 : i32, i32
  }
  func.func @transform_3(%arg0: i32) -> (i32, i32, i32) {
    %c0_i32 = arith.constant 0 : i32
    %c0_i32_0 = arith.constant 0 : i32
    %c0_i32_1 = arith.constant 0 : i32
    %c0_i32_2 = arith.constant 0 : i32
    return %c0_i32, %c0_i32_0, %c0_i32_1 : i32, i32, i32
  }
  func.func @transform_4(%arg0: i32) -> (i32, i32) {
    %c0_i32 = arith.constant 0 : i32
    %c0_i32_0 = arith.constant 0 : i32
    %c0_i32_1 = arith.constant 0 : i32
    return %c0_i32, %c0_i32_0 : i32, i32
  }
  func.func @transform_5(%arg0: i32) -> (i32, i32) {
    %c0_i32 = arith.constant 0 : i32
    %c0_i32_0 = arith.constant 0 : i32
    %c0_i32_1 = arith.constant 0 : i32
    return %c0_i32, %c0_i32_0 : i32, i32
  }
  func.func @transform_6(%arg0: i32) -> (i32, i32) {
    %c0_i32 = arith.constant 0 : i32
    %c0_i32_0 = arith.constant 0 : i32
    %c0_i32_1 = arith.constant 0 : i32
    return %c0_i32, %c0_i32_0 : i32, i32
  }
  func.func @transform_7(%arg0: i32) -> (i32, i32) {
    %c0_i32 = arith.constant 0 : i32
    %c0_i32_0 = arith.constant 0 : i32
    %c0_i32_1 = arith.constant 0 : i32
    return %c0_i32, %c0_i32_0 : i32, i32
  }
  func.func @transform_8(%arg0: i32) -> (i32, i32) {
    %c0_i32 = arith.constant 0 : i32
    %c0_i32_0 = arith.constant 0 : i32
    %c0_i32_1 = arith.constant 0 : i32
    return %c0_i32, %c0_i32_0 : i32, i32
  }
  func.func @transform_9(%arg0: i32) -> (i32, i32, i32, i32) {
    %c0_i32 = arith.constant 0 : i32
    %c0_i32_0 = arith.constant 0 : i32
    %c0_i32_1 = arith.constant 0 : i32
    %c0_i32_2 = arith.constant 0 : i32
    return %arg0, %c0_i32, %c0_i32_0, %c0_i32_1 : i32, i32, i32, i32
  }
}

</mosaic_0001>

<llo_original>
// kernel: tpu_custom_call.1
$region0: #{tpu_custom_call.1}
  #allocation0 [shape = 'u32[]', space=smem, size = 0x4, offset = 0x4, fixed_abs, tag = 'smem constant byte address 0x4 - core index']
  #allocation1 [shape = 'u32[72,128]{1,0:T(1,128)}', space=vmem, size = 0x9000, scoped, tag = 'internal scratch']
  #allocation2 [shape = 'f32[18,18,4]{2,1,0:T(8,128)}', space=vmem, size = 0x36000, scoped, tag = 'scratch operand']
  %s0 = inlined_call_operand.vmem [shape: f32[2,16,16,4], index: 0, kind: input, shape index: {}]
  %s1 = inlined_call_operand.vmem [shape: f32[4,4], index: 1, kind: input, shape index: {}]
  %s2 = inlined_call_operand.vmem [shape: f32[1,4], index: 2, kind: input, shape index: {}]
  %s3 = inlined_call_operand.vmem [shape: f32[9,4,4], index: 3, kind: input, shape index: {}]
  %s4 = inlined_call_operand.vmem [shape: f32[1,4], index: 4, kind: input, shape index: {}]
  %s5 = inlined_call_operand.vmem [shape: f32[4,16], index: 5, kind: input, shape index: {}]
  %s6 = inlined_call_operand.vmem [shape: f32[1,16], index: 6, kind: input, shape index: {}]
  %s7 = inlined_call_operand.vmem [shape: f32[4,16], index: 7, kind: input, shape index: {}]
  %s8 = inlined_call_operand.vmem [shape: f32[1,16], index: 8, kind: input, shape index: {}]
  %s9 = inlined_call_operand.hbm [shape: f32[2,16,16,16], index: 9, kind: output, shape index: {}]
  %s10 = sld [smem:[#allocation0]]
  $region69: #{tpu_custom_call.1} parent=0
    _
  %s12 = ssub.s32 1, %s10
  %s13 = scalar_select 0, %s12, %s10
  $region1: #{tpu_custom_call.1} parent=0
    #allocation3 [shape = 'u8[262144]{0}', space=vmem, size = 0x40000, scoped, tag = 'output window, operand 0']
    #allocation4 [shape = 's32[2]{0}', space=sflag, size = 0x8, scoped, tag = 'scoped memory for tpu_custom_call.1']
    %14 = vsyncpa [#allocation4], 0
    %s15 = scalar_lea.sflag [#allocation4], 1
    %16 = vsyncpa %s15, 0
    loop: start=0, step=1, limit=4
    $region2: #{tpu_custom_call.1} parent=1 // loop_pre_header
      _
    $region3: #{tpu_custom_call.1} parent=1 // loop_header
      %s18 = sphi 0, %s22
      %p19 = scmp.ge.s32.totalorder %s18, 4
      %s28 = sphi 0, %s30
      %s31 = sphi 0, %s28
      %s32 = sphi 0, %s31
      %s48 = sphi 0, %s32
      %s52 = sphi 0, %s52
      %s54 = sphi 0, %s52
      %s55 = sphi 0, %s54
      %s69 = sphi 0, %s55
      %s73 = sphi 0, %s73
      %s75 = sphi 0, %s73
      %s76 = sphi 0, %s75
      %s90 = sphi 0, %s76
      %s94 = sphi 0, %s94
      %s96 = sphi 0, %s94
      %s97 = sphi 0, %s96
      %s111 = sphi 0, %s97
      %s115 = sphi 0, %s115
      %s117 = sphi 0, %s115
      %s118 = sphi 0, %s117
      %s132 = sphi 0, %s118
      %s136 = sphi 0, %s136
      %s138 = sphi 0, %s136
      %s139 = sphi 0, %s138
      %s153 = sphi 0, %s139
      %s157 = sphi 0, %s157
      %s159 = sphi 0, %s157
      %s160 = sphi 0, %s159
      %s174 = sphi 0, %s160
      %s178 = sphi 0, %s178
      %s180 = sphi 0, %s178
      %s181 = sphi 0, %s180
      %s195 = sphi 0, %s181
      %s199 = sphi 0, %s199
      %s201 = sphi 0, %s199
      %s202 = sphi 0, %s201
      %s216 = sphi 0, %s202
      %s222 = sphi 0, %s224
      %s225 = sphi 0, %s222
      %s226 = sphi 0, %s225
      %s242 = sphi 0, %s226
    $region4: #{tpu_custom_call.1} parent=1 // loop_header_branch
      %21 = sbr.rel (%p19) target = $region8
    $region5: #{tpu_custom_call.1} parent=1 // loop_body
      %s23 = ssub.s32 %s18, 1
      %s24 = ssub.s32 %s18, 2
      %s25 = sadd.s32 %s18, 1
      %s26 = ssub.s32 %s18, %s25
      %p27 = scmp.eq.s32.totalorder %s26, 0
      %s29 = sadd.s32 %s28, 1
      %s30 = scalar_select %p27, %s28, %s29
      %p33 = pneg %p27
      %p34 = scmp.eq.s32.totalorder %s18, 1
      %p35 = por %p33, %p34
      %p36 = scmp.ne.s32.totalorder %s28, %s31
      %p37 = scmp.eq.s32.totalorder %s18, 0
      %p38 = por %p36, %p37
      %p39 = scmp.ne.s32.totalorder %s28, %s31
      %p40 = scmp.eq.s32.totalorder %s23, 1
      %p41 = por %p39, %p40
      %p42 = scmp.ne.s32.totalorder %s31, %s32
      %p43 = scmp.eq.s32.totalorder %s23, 0
      %p44 = por %p42, %p43
      %p45 = scmp.ne.s32.totalorder %s31, %s32
      %p46 = scmp.eq.s32.totalorder %s24, 1
      %p47 = por %p45, %p46
      %p49 = scmp.ne.s32.totalorder %s32, %s48
      %p50 = scmp.eq.s32.totalorder %s24, 0
      %p51 = por %p49, %p50
      %s53 = sadd.s32 %s52, 1
      %p56 = scmp.eq.s32.totalorder %s18, 1
      %p57 = scmp.ne.s32.totalorder %s52, %s54
      %p58 = scmp.eq.s32.totalorder %s18, 0
      %p59 = por %p57, %p58
      %p60 = scmp.ne.s32.totalorder %s52, %s54
      %p61 = scmp.eq.s32.totalorder %s23, 1
      %p62 = por %p60, %p61
      %p63 = scmp.ne.s32.totalorder %s54, %s55
      %p64 = scmp.eq.s32.totalorder %s23, 0
      %p65 = por %p63, %p64
      %p66 = scmp.ne.s32.totalorder %s54, %s55
      %p67 = scmp.eq.s32.totalorder %s24, 1
      %p68 = por %p66, %p67
      %p70 = scmp.ne.s32.totalorder %s55, %s69
      %p71 = scmp.eq.s32.totalorder %s24, 0
      %p72 = por %p70, %p71
      %s74 = sadd.s32 %s73, 1
      %p77 = scmp.eq.s32.totalorder %s18, 1
      %p78 = scmp.ne.s32.totalorder %s73, %s75
      %p79 = scmp.eq.s32.totalorder %s18, 0
      %p80 = por %p78, %p79
      %p81 = scmp.ne.s32.totalorder %s73, %s75
      %p82 = scmp.eq.s32.totalorder %s23, 1
      %p83 = por %p81, %p82
      %p84 = scmp.ne.s32.totalorder %s75, %s76
      %p85 = scmp.eq.s32.totalorder %s23, 0
      %p86 = por %p84, %p85
      %p87 = scmp.ne.s32.totalorder %s75, %s76
      %p88 = scmp.eq.s32.totalorder %s24, 1
      %p89 = por %p87, %p88
      %p91 = scmp.ne.s32.totalorder %s76, %s90
      %p92 = scmp.eq.s32.totalorder %s24, 0
      %p93 = por %p91, %p92
      %s95 = sadd.s32 %s94, 1
      %p98 = scmp.eq.s32.totalorder %s18, 1
      %p99 = scmp.ne.s32.totalorder %s94, %s96
      %p100 = scmp.eq.s32.totalorder %s18, 0
      %p101 = por %p99, %p100
      %p102 = scmp.ne.s32.totalorder %s94, %s96
      %p103 = scmp.eq.s32.totalorder %s23, 1
      %p104 = por %p102, %p103
      %p105 = scmp.ne.s32.totalorder %s96, %s97
      %p106 = scmp.eq.s32.totalorder %s23, 0
      %p107 = por %p105, %p106
      %p108 = scmp.ne.s32.totalorder %s96, %s97
      %p109 = scmp.eq.s32.totalorder %s24, 1
      %p110 = por %p108, %p109
      %p112 = scmp.ne.s32.totalorder %s97, %s111
      %p113 = scmp.eq.s32.totalorder %s24, 0
      %p114 = por %p112, %p113
      %s116 = sadd.s32 %s115, 1
      %p119 = scmp.eq.s32.totalorder %s18, 1
      %p120 = scmp.ne.s32.totalorder %s115, %s117
      %p121 = scmp.eq.s32.totalorder %s18, 0
      %p122 = por %p120, %p121
      %p123 = scmp.ne.s32.totalorder %s115, %s117
      %p124 = scmp.eq.s32.totalorder %s23, 1
      %p125 = por %p123, %p124
      %p126 = scmp.ne.s32.totalorder %s117, %s118
      %p127 = scmp.eq.s32.totalorder %s23, 0
      %p128 = por %p126, %p127
      %p129 = scmp.ne.s32.totalorder %s117, %s118
      %p130 = scmp.eq.s32.totalorder %s24, 1
      %p131 = por %p129, %p130
      %p133 = scmp.ne.s32.totalorder %s118, %s132
      %p134 = scmp.eq.s32.totalorder %s24, 0
      %p135 = por %p133, %p134
      %s137 = sadd.s32 %s136, 1
      %p140 = scmp.eq.s32.totalorder %s18, 1
      %p141 = scmp.ne.s32.totalorder %s136, %s138
      %p142 = scmp.eq.s32.totalorder %s18, 0
      %p143 = por %p141, %p142
      %p144 = scmp.ne.s32.totalorder %s136, %s138
      %p145 = scmp.eq.s32.totalorder %s23, 1
      %p146 = por %p144, %p145
      %p147 = scmp.ne.s32.totalorder %s138, %s139
      %p148 = scmp.eq.s32.totalorder %s23, 0
      %p149 = por %p147, %p148
      %p150 = scmp.ne.s32.totalorder %s138, %s139
      %p151 = scmp.eq.s32.totalorder %s24, 1
      %p152 = por %p150, %p151
      %p154 = scmp.ne.s32.totalorder %s139, %s153
      %p155 = scmp.eq.s32.totalorder %s24, 0
      %p156 = por %p154, %p155
      %s158 = sadd.s32 %s157, 1
      %p161 = scmp.eq.s32.totalorder %s18, 1
      %p162 = scmp.ne.s32.totalorder %s157, %s159
      %p163 = scmp.eq.s32.totalorder %s18, 0
      %p164 = por %p162, %p163
      %p165 = scmp.ne.s32.totalorder %s157, %s159
      %p166 = scmp.eq.s32.totalorder %s23, 1
      %p167 = por %p165, %p166
      %p168 = scmp.ne.s32.totalorder %s159, %s160
      %p169 = scmp.eq.s32.totalorder %s23, 0
      %p170 = por %p168, %p169
      %p171 = scmp.ne.s32.totalorder %s159, %s160
      %p172 = scmp.eq.s32.totalorder %s24, 1
      %p173 = por %p171, %p172
      %p175 = scmp.ne.s32.totalorder %s160, %s174
      %p176 = scmp.eq.s32.totalorder %s24, 0
      %p177 = por %p175, %p176
      %s179 = sadd.s32 %s178, 1
      %p182 = scmp.eq.s32.totalorder %s18, 1
      %p183 = scmp.ne.s32.totalorder %s178, %s180
      %p184 = scmp.eq.s32.totalorder %s18, 0
      %p185 = por %p183, %p184
      %p186 = scmp.ne.s32.totalorder %s178, %s180
      %p187 = scmp.eq.s32.totalorder %s23, 1
      %p188 = por %p186, %p187
      %p189 = scmp.ne.s32.totalorder %s180, %s181
      %p190 = scmp.eq.s32.totalorder %s23, 0
      %p191 = por %p189, %p190
      %p192 = scmp.ne.s32.totalorder %s180, %s181
      %p193 = scmp.eq.s32.totalorder %s24, 1
      %p194 = por %p192, %p193
      %p196 = scmp.ne.s32.totalorder %s181, %s195
      %p197 = scmp.eq.s32.totalorder %s24, 0
      %p198 = por %p196, %p197
      %s200 = sadd.s32 %s199, 1
      %p203 = scmp.eq.s32.totalorder %s18, 1
      %p204 = scmp.ne.s32.totalorder %s199, %s201
      %p205 = scmp.eq.s32.totalorder %s18, 0
      %p206 = por %p204, %p205
      %p207 = scmp.ne.s32.totalorder %s199, %s201
      %p208 = scmp.eq.s32.totalorder %s23, 1
      %p209 = por %p207, %p208
      %p210 = scmp.ne.s32.totalorder %s201, %s202
      %p211 = scmp.eq.s32.totalorder %s23, 0
      %p212 = por %p210, %p211
      %p213 = scmp.ne.s32.totalorder %s201, %s202
      %p214 = scmp.eq.s32.totalorder %s24, 1
      %p215 = por %p213, %p214
      %p217 = scmp.ne.s32.totalorder %s202, %s216
      %p218 = scmp.eq.s32.totalorder %s24, 0
      %p219 = por %p217, %p218
      %s220 = ssub.s32 %s18, %s25
      %p221 = scmp.eq.s32.totalorder %s220, 0
      %s223 = sadd.s32 %s222, 1
      %s224 = scalar_select %p221, %s222, %s223
      %p227 = pneg %p221
      %p228 = scmp.eq.s32.totalorder %s18, 1
      %p229 = por %p227, %p228
      %p230 = scmp.ne.s32.totalorder %s222, %s225
      %p231 = scmp.eq.s32.totalorder %s18, 0
      %p232 = por %p230, %p231
      %p233 = scmp.ne.s32.totalorder %s222, %s225
      %p234 = scmp.eq.s32.totalorder %s23, 1
      %p235 = por %p233, %p234
      %p236 = scmp.ne.s32.totalorder %s225, %s226
      %p237 = scmp.eq.s32.totalorder %s23, 0
      %p238 = por %p236, %p237
      %p239 = scmp.ne.s32.totalorder %s225, %s226
      %p240 = scmp.eq.s32.totalorder %s24, 1
      %p241 = por %p239, %p240
      %p243 = scmp.ne.s32.totalorder %s226, %s242
      %p244 = scmp.eq.s32.totalorder %s24, 0
      %p245 = por %p243, %p244
      %p246 = scmp.le.s32.totalorder 1, %s18
      %p247 = scmp.lt.s32.totalorder %s18, 3
      %p248 = pnand %p246, %p247
      %p249 = pneg %p248
      // Predicated region
      $region9: #{tpu_custom_call.1} parent=5 // pred_check
        _
      $region10: #{tpu_custom_call.1} parent=5 // pred_check_branch
        %251 = sbr.rel (%p248) target = $region12
      $region11: #{tpu_custom_call.1} parent=5 // pred_region
        %s252 = ssub.s32 %s18, 1
        // Predicated region
        $region13: #{tpu_custom_call.1} parent=11 // pred_check
          %p253 = pneg %p65
        $region14: #{tpu_custom_call.1} parent=11 // pred_check_branch
          %255 = sbr.rel (%p253) target = $region16
        $region15: #{tpu_custom_call.1} parent=11 // pred_region
          _
        $region16: #{tpu_custom_call.1} parent=11 // pred_fallthru
          _
        // Predicated region
        $region17: #{tpu_custom_call.1} parent=11 // pred_check
          %p256 = pneg %p86
        $region18: #{tpu_custom_call.1} parent=11 // pred_check_branch
          %258 = sbr.rel (%p256) target = $region20
        $region19: #{tpu_custom_call.1} parent=11 // pred_region
          _
        $region20: #{tpu_custom_call.1} parent=11 // pred_fallthru
          _
        // Predicated region
        $region21: #{tpu_custom_call.1} parent=11 // pred_check
          %p259 = pneg %p107
        $region22: #{tpu_custom_call.1} parent=11 // pred_check_branch
          %261 = sbr.rel (%p259) target = $region24
        $region23: #{tpu_custom_call.1} parent=11 // pred_region
          _
        $region24: #{tpu_custom_call.1} parent=11 // pred_fallthru
          _
        // Predicated region
        $region25: #{tpu_custom_call.1} parent=11 // pred_check
          %p262 = pneg %p128
        $region26: #{tpu_custom_call.1} parent=11 // pred_check_branch
          %264 = sbr.rel (%p262) target = $region28
        $region27: #{tpu_custom_call.1} parent=11 // pred_region
          _
        $region28: #{tpu_custom_call.1} parent=11 // pred_fallthru
          _
        // Predicated region
        $region29: #{tpu_custom_call.1} parent=11 // pred_check
          %p265 = pneg %p149
        $region30: #{tpu_custom_call.1} parent=11 // pred_check_branch
          %267 = sbr.rel (%p265) target = $region32
        $region31: #{tpu_custom_call.1} parent=11 // pred_region
          _
        $region32: #{tpu_custom_call.1} parent=11 // pred_fallthru
          _
        // Predicated region
        $region33: #{tpu_custom_call.1} parent=11 // pred_check
          %p268 = pneg %p170
        $region34: #{tpu_custom_call.1} parent=11 // pred_check_branch
          %270 = sbr.rel (%p268) target = $region36
        $region35: #{tpu_custom_call.1} parent=11 // pred_region
          _
        $region36: #{tpu_custom_call.1} parent=11 // pred_fallthru
          _
        // Predicated region
        $region37: #{tpu_custom_call.1} parent=11 // pred_check
          %p271 = pneg %p191
        $region38: #{tpu_custom_call.1} parent=11 // pred_check_branch
          %273 = sbr.rel (%p271) target = $region40
        $region39: #{tpu_custom_call.1} parent=11 // pred_region
          _
        $region40: #{tpu_custom_call.1} parent=11 // pred_fallthru
          _
        // Predicated region
        $region41: #{tpu_custom_call.1} parent=11 // pred_check
          %p274 = pneg %p212
        $region42: #{tpu_custom_call.1} parent=11 // pred_check_branch
          %276 = sbr.rel (%p274) target = $region44
        $region43: #{tpu_custom_call.1} parent=11 // pred_region
          _
        $region44: #{tpu_custom_call.1} parent=11 // pred_fallthru
          _
      $region12: #{tpu_custom_call.1} parent=5 // pred_fallthru
        _
      %p277 = scmp.lt.s32.totalorder %s18, 2
      // Predicated region
      $region45: #{tpu_custom_call.1} parent=5 // pred_check
        %p278 = pneg %p277
      $region46: #{tpu_custom_call.1} parent=5 // pred_check_branch
        %280 = sbr.rel (%p278) target = $region48
      $region47: #{tpu_custom_call.1} parent=5 // pred_region
        // Predicated region
        $region49: #{tpu_custom_call.1} parent=47 // pred_check
          %p281 = pneg %p38
        $region50: #{tpu_custom_call.1} parent=47 // pred_check_branch
          %283 = sbr.rel (%p281) target = $region52
        $region51: #{tpu_custom_call.1} parent=47 // pred_region
          %p284 = scmp.lt.s32.totalorder %s18, 1
          %s285 = scalar_select %p284, %s18, 1
          %s286 = smul.addr %s285, 32
          %s287 = smul.addr %s286, 8
          %s288 = scalar_lea.vmem %s0, %s287
        $region52: #{tpu_custom_call.1} parent=47 // pred_fallthru
          _
      $region48: #{tpu_custom_call.1} parent=5 // pred_fallthru
        _
      %p289 = scmp.le.s32.totalorder 1, %s18
      %p290 = scmp.lt.s32.totalorder %s18, 3
      %p291 = pnand %p289, %p290
      %p292 = pneg %p291
      // Predicated region
      $region53: #{tpu_custom_call.1} parent=5 // pred_check
        _
      $region54: #{tpu_custom_call.1} parent=5 // pred_check_branch
        %294 = sbr.rel (%p291) target = $region56
      $region55: #{tpu_custom_call.1} parent=5 // pred_region
        %s295 = ssub.s32 %s18, 1
        %p296 = scmp.lt.s32.totalorder %s23, 1
        %s297 = scalar_select %p296, %s23, 1
        %s298 = smul.addr %s297, 32
        %s299 = smul.addr %s298, 8
        %s300 = scalar_lea.vmem %s0, %s299
        %p301 = pneg %p44
        %p302 = pneg %p41
        %p303 = pneg %p65
        %p304 = pneg %p62
        %p305 = pneg %p86
        %p306 = pneg %p83
        %p307 = pneg %p107
        %p308 = pneg %p104
        %p309 = pneg %p128
        %p310 = pneg %p125
        %p311 = pneg %p149
        %p312 = pneg %p146
        %p313 = pneg %p170
        %p314 = pneg %p167
        %p315 = pneg %p191
        %p316 = pneg %p188
        %p317 = pneg %p212
        %p318 = pneg %p209
        %p319 = pneg %p238
        %p320 = pneg %p235
        %s321 = sand.u32 %s225, 1
        %s322 = scalar_lea.sflag [#allocation4], %s321
        %s323 = sand.u32 %s225, 1
        %s324 = smul.addr %s323, 256
        %s325 = scalar_lea.vmem [#allocation3], %s324
        %p326 = scmp.lt.s32.totalorder %s23, 1
        %s327 = scalar_select %p326, %s23, 1
        %s328 = smul.addr %s327, 32
        %s329 = smul.addr %s328, 8
        %s330 = scalar_lea.vmem %s0, %s329
        %v331 = vld [vmem:[%s330] sm:$0xff]
        %v332 = vld [vmem:[%s330 + $0x8] sm:$0xff]
        %v333 = vld [vmem:[%s330 + $0x10] sm:$0xff]
        %v334 = vld [vmem:[%s330 + $0x18] sm:$0xff]
        %v335 = vld [vmem:[%s330 + $0x20] sm:$0xff]
        %v336 = vld [vmem:[%s330 + $0x28] sm:$0xff]
        %v337 = vld [vmem:[%s330 + $0x30] sm:$0xff]
        %v338 = vld [vmem:[%s330 + $0x38] sm:$0xff]
        %v339 = vld [vmem:[%s330 + $0x40] sm:$0xff]
        %v340 = vld [vmem:[%s330 + $0x48] sm:$0xff]
        %v341 = vld [vmem:[%s330 + $0x50] sm:$0xff]
        %v342 = vld [vmem:[%s330 + $0x58] sm:$0xff]
        %v343 = vld [vmem:[%s330 + $0x60] sm:$0xff]
        %v344 = vld [vmem:[%s330 + $0x68] sm:$0xff]
        %v345 = vld [vmem:[%s330 + $0x70] sm:$0xff]
        %v346 = vld [vmem:[%s330 + $0x78] sm:$0xff]
        %v347 = vld [vmem:[%s330 + $0x80] sm:$0xff]
        %v348 = vld [vmem:[%s330 + $0x88] sm:$0xff]
        %v349 = vld [vmem:[%s330 + $0x90] sm:$0xff]
        %v350 = vld [vmem:[%s330 + $0x98] sm:$0xff]
        %v351 = vld [vmem:[%s330 + $0xa0] sm:$0xff]
        %v352 = vld [vmem:[%s330 + $0xa8] sm:$0xff]
        %v353 = vld [vmem:[%s330 + $0xb0] sm:$0xff]
        %v354 = vld [vmem:[%s330 + $0xb8] sm:$0xff]
        %v355 = vld [vmem:[%s330 + $0xc0] sm:$0xff]
        %v356 = vld [vmem:[%s330 + $0xc8] sm:$0xff]
        %v357 = vld [vmem:[%s330 + $0xd0] sm:$0xff]
        %v358 = vld [vmem:[%s330 + $0xd8] sm:$0xff]
        %v359 = vld [vmem:[%s330 + $0xe0] sm:$0xff]
        %v360 = vld [vmem:[%s330 + $0xe8] sm:$0xff]
        %v361 = vld [vmem:[%s330 + $0xf0] sm:$0xff]
        %v362 = vld [vmem:[%s330 + $0xf8] sm:$0xff]
        %v363 = vld [vmem:[%s1] sm:$0xf]
        %v364 = vld [vmem:[%s2] sm:$0x1]
        %v366 = vperm.slane %v364, 0
        %vm368 = vcmask 31744
        %v370 = vsel %vm368, %v331, 0
        %v373 = vsel %vm368, %v332, 0
        %v376 = vsel %vm368, %v333, 0
        %v379 = vsel %vm368, %v334, 0
        %v382 = vsel %vm368, %v335, 0
        %v385 = vsel %vm368, %v336, 0
        %v388 = vsel %vm368, %v337, 0
        %v391 = vsel %vm368, %v338, 0
        %v394 = vsel %vm368, %v339, 0
        %v397 = vsel %vm368, %v340, 0
        %v400 = vsel %vm368, %v341, 0
        %v403 = vsel %vm368, %v342, 0
        %v406 = vsel %vm368, %v343, 0
        %v409 = vsel %vm368, %v344, 0
        %v412 = vsel %vm368, %v345, 0
        %v415 = vsel %vm368, %v346, 0
        %v418 = vsel %vm368, %v347, 0
        %v421 = vsel %vm368, %v348, 0
        %v424 = vsel %vm368, %v349, 0
        %v427 = vsel %vm368, %v350, 0
        %v430 = vsel %vm368, %v351, 0
        %v433 = vsel %vm368, %v352, 0
        %v436 = vsel %vm368, %v353, 0
        %v439 = vsel %vm368, %v354, 0
        %v442 = vsel %vm368, %v355, 0
        %v445 = vsel %vm368, %v356, 0
        %v448 = vsel %vm368, %v357, 0
        %v451 = vsel %vm368, %v358, 0
        %v454 = vsel %vm368, %v359, 0
        %v457 = vsel %vm368, %v360, 0
        %v460 = vsel %vm368, %v361, 0
        %v463 = vsel %vm368, %v362, 0
        %vm465 = vcmask 1043456
        %v467 = vsel %vm465, %v363, 0
        %469 = vmatpush.msra.mxu0 0.0
        %470 = vmatpush.msra.mxu0 0.0
        %471 = vmatpush.msra.mxu0 0.0
        %472 = vmatpush.msra.mxu0 0.0
        %473 = vmatpush.msra.mxu0 0.0
        %474 = vmatpush.msra.mxu0 0.0
        %475 = vmatpush.msra.mxu0 0.0
        %476 = vmatpush.msra.mxu0 0.0
        %477 = vmatpush.msra.mxu0 0.0
        %478 = vmatpush.msra.mxu0 0.0
        %479 = vmatpush.msra.mxu0 0.0
        %480 = vmatpush.msra.mxu0 0.0
        %481 = vmatpush.msra.mxu0 0.0
        %482 = vmatpush.msra.mxu0 0.0
        %483 = vmatpush.msra.mxu0 0.0
        %484 = vmatpush.msra.mxu0 %v467
        %485 = vmatmul.f32.gmra.mxu0 %v370
        %v486 = vpop.f32.mrf.mxu0
        %v487 = vadd.f32 %v366, %v486
        %488 = vmatmul.f32.gmra.mxu0 %v373
        %v489 = vpop.f32.mrf.mxu0
        %v490 = vadd.f32 %v366, %v489
        %491 = vmatmul.f32.gmra.mxu0 %v376
        %v492 = vpop.f32.mrf.mxu0
        %v493 = vadd.f32 %v366, %v492
        %494 = vmatmul.f32.gmra.mxu0 %v379
        %v495 = vpop.f32.mrf.mxu0
        %v496 = vadd.f32 %v366, %v495
        %497 = vmatmul.f32.gmra.mxu0 %v382
        %v498 = vpop.f32.mrf.mxu0
        %v499 = vadd.f32 %v366, %v498
        %500 = vmatmul.f32.gmra.mxu0 %v385
        %v501 = vpop.f32.mrf.mxu0
        %v502 = vadd.f32 %v366, %v501
        %503 = vmatmul.f32.gmra.mxu0 %v388
        %v504 = vpop.f32.mrf.mxu0
        %v505 = vadd.f32 %v366, %v504
        %506 = vmatmul.f32.gmra.mxu0 %v391
        %v507 = vpop.f32.mrf.mxu0
        %v508 = vadd.f32 %v366, %v507
        %509 = vmatmul.f32.gmra.mxu0 %v394
        %v510 = vpop.f32.mrf.mxu0
        %v511 = vadd.f32 %v366, %v510
        %512 = vmatmul.f32.gmra.mxu0 %v397
        %v513 = vpop.f32.mrf.mxu0
        %v514 = vadd.f32 %v366, %v513
        %515 = vmatmul.f32.gmra.mxu0 %v400
        %v516 = vpop.f32.mrf.mxu0
        %v517 = vadd.f32 %v366, %v516
        %518 = vmatmul.f32.gmra.mxu0 %v403
        %v519 = vpop.f32.mrf.mxu0
        %v520 = vadd.f32 %v366, %v519
        %521 = vmatmul.f32.gmra.mxu0 %v406
        %v522 = vpop.f32.mrf.mxu0
        %v523 = vadd.f32 %v366, %v522
        %524 = vmatmul.f32.gmra.mxu0 %v409
        %v525 = vpop.f32.mrf.mxu0
        %v526 = vadd.f32 %v366, %v525
        %527 = vmatmul.f32.gmra.mxu0 %v412
        %v528 = vpop.f32.mrf.mxu0
        %v529 = vadd.f32 %v366, %v528
        %530 = vmatmul.f32.gmra.mxu0 %v415
        %v531 = vpop.f32.mrf.mxu0
        %v532 = vadd.f32 %v366, %v531
        %533 = vmatmul.f32.gmra.mxu0 %v418
        %v534 = vpop.f32.mrf.mxu0
        %v535 = vadd.f32 %v366, %v534
        %536 = vmatmul.f32.gmra.mxu0 %v421
        %v537 = vpop.f32.mrf.mxu0
        %v538 = vadd.f32 %v366, %v537
        %539 = vmatmul.f32.gmra.mxu0 %v424
        %v540 = vpop.f32.mrf.mxu0
        %v541 = vadd.f32 %v366, %v540
        %542 = vmatmul.f32.gmra.mxu0 %v427
        %v543 = vpop.f32.mrf.mxu0
        %v544 = vadd.f32 %v366, %v543
        %545 = vmatmul.f32.gmra.mxu0 %v430
        %v546 = vpop.f32.mrf.mxu0
        %v547 = vadd.f32 %v366, %v546
        %548 = vmatmul.f32.gmra.mxu0 %v433
        %v549 = vpop.f32.mrf.mxu0
        %v550 = vadd.f32 %v366, %v549
        %551 = vmatmul.f32.gmra.mxu0 %v436
        %v552 = vpop.f32.mrf.mxu0
        %v553 = vadd.f32 %v366, %v552
        %554 = vmatmul.f32.gmra.mxu0 %v439
        %v555 = vpop.f32.mrf.mxu0
        %v556 = vadd.f32 %v366, %v555
        %557 = vmatmul.f32.gmra.mxu0 %v442
        %v558 = vpop.f32.mrf.mxu0
        %v559 = vadd.f32 %v366, %v558
        %560 = vmatmul.f32.gmra.mxu0 %v445
        %v561 = vpop.f32.mrf.mxu0
        %v562 = vadd.f32 %v366, %v561
        %563 = vmatmul.f32.gmra.mxu0 %v448
        %v564 = vpop.f32.mrf.mxu0
        %v565 = vadd.f32 %v366, %v564
        %566 = vmatmul.f32.gmra.mxu0 %v451
        %v567 = vpop.f32.mrf.mxu0
        %v568 = vadd.f32 %v366, %v567
        %569 = vmatmul.f32.gmra.mxu0 %v454
        %v570 = vpop.f32.mrf.mxu0
        %v571 = vadd.f32 %v366, %v570
        %572 = vmatmul.f32.gmra.mxu0 %v457
        %v573 = vpop.f32.mrf.mxu0
        %v574 = vadd.f32 %v366, %v573
        %575 = vmatmul.f32.gmra.mxu0 %v460
        %v576 = vpop.f32.mrf.mxu0
        %v577 = vadd.f32 %v366, %v576
        %578 = vmatmul.f32.gmra.mxu0 %v463
        %v579 = vpop.f32.mrf.mxu0
        %v580 = vadd.f32 %v366, %v579
        %581 = vdwg.mxu0
        %v582 = vmax.f32 %v487, 0.0
        %v583 = vmax.f32 %v490, 0.0
        %v584 = vmax.f32 %v493, 0.0
        %v585 = vmax.f32 %v496, 0.0
        %v586 = vmax.f32 %v499, 0.0
        %v587 = vmax.f32 %v502, 0.0
        %v588 = vmax.f32 %v505, 0.0
        %v589 = vmax.f32 %v508, 0.0
        %v590 = vmax.f32 %v511, 0.0
        %v591 = vmax.f32 %v514, 0.0
        %v592 = vmax.f32 %v517, 0.0
        %v593 = vmax.f32 %v520, 0.0
        %v594 = vmax.f32 %v523, 0.0
        %v595 = vmax.f32 %v526, 0.0
        %v596 = vmax.f32 %v529, 0.0
        %v597 = vmax.f32 %v532, 0.0
        %v598 = vmax.f32 %v535, 0.0
        %v599 = vmax.f32 %v538, 0.0
        %v600 = vmax.f32 %v541, 0.0
        %v601 = vmax.f32 %v544, 0.0
        %v602 = vmax.f32 %v547, 0.0
        %v603 = vmax.f32 %v550, 0.0
        %v604 = vmax.f32 %v553, 0.0
        %v605 = vmax.f32 %v556, 0.0
        %v606 = vmax.f32 %v559, 0.0
        %v607 = vmax.f32 %v562, 0.0
        %v608 = vmax.f32 %v565, 0.0
        %v609 = vmax.f32 %v568, 0.0
        %v610 = vmax.f32 %v571, 0.0
        %v611 = vmax.f32 %v574, 0.0
        %v612 = vmax.f32 %v577, 0.0
        %v613 = vmax.f32 %v580, 0.0
        %614 = vst.msk [vmem:[#allocation2] sm:$0xff] %vm368, 0.0
        %615 = vst.msk [vmem:[#allocation2 + $0x8] sm:$0xff] %vm368, 0.0
        %vm616 = vcmask 25600
        %617 = vst.msk [vmem:[#allocation2 + $0x10] sm:$0x3] %vm616, 0.0
        %s618 = scalar_lea.vmem [#allocation2], 408
        %619 = vst.msk [vmem:[%s618] sm:$0xff] %vm368, 0.0
        %620 = vst.msk [vmem:[%s618 + $0x8] sm:$0xff] %vm368, 0.0
        %621 = vst.msk [vmem:[%s618 + $0x10] sm:$0x3] %vm616, 0.0
        %vm622 = vcmask 24576
        %623 = vst.msk [vmem:[#allocation2] sm:$0x1] %vm622, 0.0
        %624 = vst.msk [vmem:[#allocation2 + $0x18] sm:$0x1] %vm622, 0.0
        %625 = vst.msk [vmem:[#allocation2 + $0x30] sm:$0x1] %vm622, 0.0
        %626 = vst.msk [vmem:[#allocation2 + $0x48] sm:$0x1] %vm622, 0.0
        %627 = vst.msk [vmem:[#allocation2 + $0x60] sm:$0x1] %vm622, 0.0
        %628 = vst.msk [vmem:[#allocation2 + $0x78] sm:$0x1] %vm622, 0.0
        %629 = vst.msk [vmem:[#allocation2 + $0x90] sm:$0x1] %vm622, 0.0
        %630 = vst.msk [vmem:[#allocation2 + $0xa8] sm:$0x1] %vm622, 0.0
        %631 = vst.msk [vmem:[#allocation2 + $0xc0] sm:$0x1] %vm622, 0.0
        %632 = vst.msk [vmem:[#allocation2 + $0xd8] sm:$0x1] %vm622, 0.0
        %633 = vst.msk [vmem:[#allocation2 + $0xf0] sm:$0x1] %vm622, 0.0
        %634 = vst.msk [vmem:[#allocation2 + $0x108] sm:$0x1] %vm622, 0.0
        %635 = vst.msk [vmem:[#allocation2 + $0x120] sm:$0x1] %vm622, 0.0
        %636 = vst.msk [vmem:[#allocation2 + $0x138] sm:$0x1] %vm622, 0.0
        %637 = vst.msk [vmem:[#allocation2 + $0x150] sm:$0x1] %vm622, 0.0
        %638 = vst.msk [vmem:[#allocation2 + $0x168] sm:$0x1] %vm622, 0.0
        %639 = vst.msk [vmem:[#allocation2 + $0x180] sm:$0x1] %vm622, 0.0
        %640 = vst.msk [vmem:[#allocation2 + $0x198] sm:$0x1] %vm622, 0.0
        %641 = vst.msk [vmem:[#allocation2 + $0x11] sm:$0x1] %vm622, 0.0
        %642 = vst.msk [vmem:[#allocation2 + $0x29] sm:$0x1] %vm622, 0.0
        %643 = vst.msk [vmem:[#allocation2 + $0x41] sm:$0x1] %vm622, 0.0
        %644 = vst.msk [vmem:[#allocation2 + $0x59] sm:$0x1] %vm622, 0.0
        %645 = vst.msk [vmem:[#allocation2 + $0x71] sm:$0x1] %vm622, 0.0
        %646 = vst.msk [vmem:[#allocation2 + $0x89] sm:$0x1] %vm622, 0.0
        %647 = vst.msk [vmem:[#allocation2 + $0xa1] sm:$0x1] %vm622, 0.0
        %648 = vst.msk [vmem:[#allocation2 + $0xb9] sm:$0x1] %vm622, 0.0
        %649 = vst.msk [vmem:[#allocation2 + $0xd1] sm:$0x1] %vm622, 0.0
        %650 = vst.msk [vmem:[#allocation2 + $0xe9] sm:$0x1] %vm622, 0.0
        %651 = vst.msk [vmem:[#allocation2 + $0x101] sm:$0x1] %vm622, 0.0
        %652 = vst.msk [vmem:[#allocation2 + $0x119] sm:$0x1] %vm622, 0.0
        %653 = vst.msk [vmem:[#allocation2 + $0x131] sm:$0x1] %vm622, 0.0
        %654 = vst.msk [vmem:[#allocation2 + $0x149] sm:$0x1] %vm622, 0.0
        %655 = vst.msk [vmem:[#allocation2 + $0x161] sm:$0x1] %vm622, 0.0
        %656 = vst.msk [vmem:[#allocation2 + $0x179] sm:$0x1] %vm622, 0.0
        %657 = vst.msk [vmem:[#allocation2 + $0x191] sm:$0x1] %vm622, 0.0
        %658 = vst.msk [vmem:[#allocation2 + $0x1a9] sm:$0x1] %vm622, 0.0
        %s659 = scalar_lea.vmem [#allocation2], 24
        %660 = vst.msk [vmem:[%s659 + $0x1] sm:$0xff] %vm368, %v582
        %661 = vst.msk [vmem:[%s659 + $0x9] sm:$0xff] %vm368, %v583
        %662 = vst.msk [vmem:[%s659 + $0x19] sm:$0xff] %vm368, %v584
        %663 = vst.msk [vmem:[%s659 + $0x21] sm:$0xff] %vm368, %v585
        %664 = vst.msk [vmem:[%s659 + $0x31] sm:$0xff] %vm368, %v586
        %665 = vst.msk [vmem:[%s659 + $0x39] sm:$0xff] %vm368, %v587
        %666 = vst.msk [vmem:[%s659 + $0x49] sm:$0xff] %vm368, %v588
        %667 = vst.msk [vmem:[%s659 + $0x51] sm:$0xff] %vm368, %v589
        %668 = vst.msk [vmem:[%s659 + $0x61] sm:$0xff] %vm368, %v590
        %669 = vst.msk [vmem:[%s659 + $0x69] sm:$0xff] %vm368, %v591
        %670 = vst.msk [vmem:[%s659 + $0x79] sm:$0xff] %vm368, %v592
        %671 = vst.msk [vmem:[%s659 + $0x81] sm:$0xff] %vm368, %v593
        %672 = vst.msk [vmem:[%s659 + $0x91] sm:$0xff] %vm368, %v594
        %673 = vst.msk [vmem:[%s659 + $0x99] sm:$0xff] %vm368, %v595
        %674 = vst.msk [vmem:[%s659 + $0xa9] sm:$0xff] %vm368, %v596
        %675 = vst.msk [vmem:[%s659 + $0xb1] sm:$0xff] %vm368, %v597
        %676 = vst.msk [vmem:[%s659 + $0xc1] sm:$0xff] %vm368, %v598
        %677 = vst.msk [vmem:[%s659 + $0xc9] sm:$0xff] %vm368, %v599
        %678 = vst.msk [vmem:[%s659 + $0xd9] sm:$0xff] %vm368, %v600
        %679 = vst.msk [vmem:[%s659 + $0xe1] sm:$0xff] %vm368, %v601
        %680 = vst.msk [vmem:[%s659 + $0xf1] sm:$0xff] %vm368, %v602
        %681 = vst.msk [vmem:[%s659 + $0xf9] sm:$0xff] %vm368, %v603
        %682 = vst.msk [vmem:[%s659 + $0x109] sm:$0xff] %vm368, %v604
        %683 = vst.msk [vmem:[%s659 + $0x111] sm:$0xff] %vm368, %v605
        %684 = vst.msk [vmem:[%s659 + $0x121] sm:$0xff] %vm368, %v606
        %685 = vst.msk [vmem:[%s659 + $0x129] sm:$0xff] %vm368, %v607
        %686 = vst.msk [vmem:[%s659 + $0x139] sm:$0xff] %vm368, %v608
        %687 = vst.msk [vmem:[%s659 + $0x141] sm:$0xff] %vm368, %v609
        %688 = vst.msk [vmem:[%s659 + $0x151] sm:$0xff] %vm368, %v610
        %689 = vst.msk [vmem:[%s659 + $0x159] sm:$0xff] %vm368, %v611
        %690 = vst.msk [vmem:[%s659 + $0x169] sm:$0xff] %vm368, %v612
        %691 = vst.msk [vmem:[%s659 + $0x171] sm:$0xff] %vm368, %v613
        %v692 = vld [vmem:[#allocation2] sm:$0xff]
        %v693 = vld [vmem:[#allocation2 + $0x8] sm:$0xff]
        %v694 = vld [vmem:[#allocation2 + $0x18] sm:$0xff]
        %v695 = vld [vmem:[#allocation2 + $0x20] sm:$0xff]
        %v696 = vld [vmem:[#allocation2 + $0x30] sm:$0xff]
        %v697 = vld [vmem:[#allocation2 + $0x38] sm:$0xff]
        %v698 = vld [vmem:[#allocation2 + $0x48] sm:$0xff]
        %v699 = vld [vmem:[#allocation2 + $0x50] sm:$0xff]
        %v700 = vld [vmem:[#allocation2 + $0x60] sm:$0xff]
        %v701 = vld [vmem:[#allocation2 + $0x68] sm:$0xff]
        %v702 = vld [vmem:[#allocation2 + $0x78] sm:$0xff]
        %v703 = vld [vmem:[#allocation2 + $0x80] sm:$0xff]
        %v704 = vld [vmem:[#allocation2 + $0x90] sm:$0xff]
        %v705 = vld [vmem:[#allocation2 + $0x98] sm:$0xff]
        %v706 = vld [vmem:[#allocation2 + $0xa8] sm:$0xff]
        %v707 = vld [vmem:[#allocation2 + $0xb0] sm:$0xff]
        %v708 = vld [vmem:[#allocation2 + $0xc0] sm:$0xff]
        %v709 = vld [vmem:[#allocation2 + $0xc8] sm:$0xff]
        %v710 = vld [vmem:[#allocation2 + $0xd8] sm:$0xff]
        %v711 = vld [vmem:[#allocation2 + $0xe0] sm:$0xff]
        %v712 = vld [vmem:[#allocation2 + $0xf0] sm:$0xff]
        %v713 = vld [vmem:[#allocation2 + $0xf8] sm:$0xff]
        %v714 = vld [vmem:[#allocation2 + $0x108] sm:$0xff]
        %v715 = vld [vmem:[#allocation2 + $0x110] sm:$0xff]
        %v716 = vld [vmem:[#allocation2 + $0x120] sm:$0xff]
        %v717 = vld [vmem:[#allocation2 + $0x128] sm:$0xff]
        %v718 = vld [vmem:[#allocation2 + $0x138] sm:$0xff]
        %v719 = vld [vmem:[#allocation2 + $0x140] sm:$0xff]
        %v720 = vld [vmem:[#allocation2 + $0x150] sm:$0xff]
        %v721 = vld [vmem:[#allocation2 + $0x158] sm:$0xff]
        %v722 = vld [vmem:[#allocation2 + $0x168] sm:$0xff]
        %v723 = vld [vmem:[#allocation2 + $0x170] sm:$0xff]
        %v724 = vld [vmem:[%s3] sm:$0xf]
        %v725 = vld [vmem:[#allocation2 + $0x1] sm:$0xff]
        %v726 = vld [vmem:[#allocation2 + $0x9] sm:$0xff]
        %v727 = vld [vmem:[#allocation2 + $0x19] sm:$0xff]
        %v728 = vld [vmem:[#allocation2 + $0x21] sm:$0xff]
        %v729 = vld [vmem:[#allocation2 + $0x31] sm:$0xff]
        %v730 = vld [vmem:[#allocation2 + $0x39] sm:$0xff]
        %v731 = vld [vmem:[#allocation2 + $0x49] sm:$0xff]
        %v732 = vld [vmem:[#allocation2 + $0x51] sm:$0xff]
        %v733 = vld [vmem:[#allocation2 + $0x61] sm:$0xff]
        %v734 = vld [vmem:[#allocation2 + $0x69] sm:$0xff]
        %v735 = vld [vmem:[#allocation2 + $0x79] sm:$0xff]
        %v736 = vld [vmem:[#allocation2 + $0x81] sm:$0xff]
        %v737 = vld [vmem:[#allocation2 + $0x91] sm:$0xff]
        %v738 = vld [vmem:[#allocation2 + $0x99] sm:$0xff]
        %v739 = vld [vmem:[#allocation2 + $0xa9] sm:$0xff]
        %v740 = vld [vmem:[#allocation2 + $0xb1] sm:$0xff]
        %v741 = vld [vmem:[#allocation2 + $0xc1] sm:$0xff]
        %v742 = vld [vmem:[#allocation2 + $0xc9] sm:$0xff]
        %v743 = vld [vmem:[#allocation2 + $0xd9] sm:$0xff]
        %v744 = vld [vmem:[#allocation2 + $0xe1] sm:$0xff]
        %v745 = vld [vmem:[#allocation2 + $0xf1] sm:$0xff]
        %v746 = vld [vmem:[#allocation2 + $0xf9] sm:$0xff]
        %v747 = vld [vmem:[#allocation2 + $0x109] sm:$0xff]
        %v748 = vld [vmem:[#allocation2 + $0x111] sm:$0xff]
        %v749 = vld [vmem:[#allocation2 + $0x121] sm:$0xff]
        %v750 = vld [vmem:[#allocation2 + $0x129] sm:$0xff]
        %v751 = vld [vmem:[#allocation2 + $0x139] sm:$0xff]
        %v752 = vld [vmem:[#allocation2 + $0x141] sm:$0xff]
        %v753 = vld [vmem:[#allocation2 + $0x151] sm:$0xff]
        %v754 = vld [vmem:[#allocation2 + $0x159] sm:$0xff]
        %v755 = vld [vmem:[#allocation2 + $0x169] sm:$0xff]
        %v756 = vld [vmem:[#allocation2 + $0x171] sm:$0xff]
        %s757 = scalar_lea.vmem %s3, 4
        %v758 = vld [vmem:[%s757] sm:$0xf]
        %v760 = vsel %vm368, %v725, 0
        %v763 = vsel %vm368, %v726, 0
        %v766 = vsel %vm368, %v727, 0
        %v769 = vsel %vm368, %v728, 0
        %v772 = vsel %vm368, %v729, 0
        %v775 = vsel %vm368, %v730, 0
        %v778 = vsel %vm368, %v731, 0
        %v781 = vsel %vm368, %v732, 0
        %v784 = vsel %vm368, %v733, 0
        %v787 = vsel %vm368, %v734, 0
        %v790 = vsel %vm368, %v735, 0
        %v793 = vsel %vm368, %v736, 0
        %v796 = vsel %vm368, %v737, 0
        %v799 = vsel %vm368, %v738, 0
        %v802 = vsel %vm368, %v739, 0
        %v805 = vsel %vm368, %v740, 0
        %v808 = vsel %vm368, %v741, 0
        %v811 = vsel %vm368, %v742, 0
        %v814 = vsel %vm368, %v743, 0
        %v817 = vsel %vm368, %v744, 0
        %v820 = vsel %vm368, %v745, 0
        %v823 = vsel %vm368, %v746, 0
        %v826 = vsel %vm368, %v747, 0
        %v829 = vsel %vm368, %v748, 0
        %v832 = vsel %vm368, %v749, 0
        %v835 = vsel %vm368, %v750, 0
        %v838 = vsel %vm368, %v751, 0
        %v841 = vsel %vm368, %v752, 0
        %v844 = vsel %vm368, %v753, 0
        %v847 = vsel %vm368, %v754, 0
        %v850 = vsel %vm368, %v755, 0
        %v853 = vsel %vm368, %v756, 0
        %v856 = vsel %vm465, %v758, 0
        %858 = vmatpush.msra.mxu0 0.0
        %859 = vmatpush.msra.mxu0 0.0
        %860 = vmatpush.msra.mxu0 0.0
        %861 = vmatpush.msra.mxu0 0.0
        %862 = vmatpush.msra.mxu0 0.0
        %863 = vmatpush.msra.mxu0 0.0
        %864 = vmatpush.msra.mxu0 0.0
        %865 = vmatpush.msra.mxu0 0.0
        %866 = vmatpush.msra.mxu0 0.0
        %867 = vmatpush.msra.mxu0 0.0
        %868 = vmatpush.msra.mxu0 0.0
        %869 = vmatpush.msra.mxu0 0.0
        %870 = vmatpush.msra.mxu0 0.0
        %871 = vmatpush.msra.mxu0 0.0
        %872 = vmatpush.msra.mxu0 0.0
        %873 = vmatpush.msra.mxu0 %v856
        %874 = vmatmul.f32.gmra.mxu0 %v760
        %v875 = vpop.f32.mrf.mxu0
        %v876 = vadd.f32 0.0, %v875
        %877 = vmatmul.f32.gmra.mxu0 %v763
        %v878 = vpop.f32.mrf.mxu0
        %v879 = vadd.f32 0.0, %v878
        %880 = vmatmul.f32.gmra.mxu0 %v766
        %v881 = vpop.f32.mrf.mxu0
        %v882 = vadd.f32 0.0, %v881
        %883 = vmatmul.f32.gmra.mxu0 %v769
        %v884 = vpop.f32.mrf.mxu0
        %v885 = vadd.f32 0.0, %v884
        %886 = vmatmul.f32.gmra.mxu0 %v772
        %v887 = vpop.f32.mrf.mxu0
        %v888 = vadd.f32 0.0, %v887
        %889 = vmatmul.f32.gmra.mxu0 %v775
        %v890 = vpop.f32.mrf.mxu0
        %v891 = vadd.f32 0.0, %v890
        %892 = vmatmul.f32.gmra.mxu0 %v778
        %v893 = vpop.f32.mrf.mxu0
        %v894 = vadd.f32 0.0, %v893
        %895 = vmatmul.f32.gmra.mxu0 %v781
        %v896 = vpop.f32.mrf.mxu0
        %v897 = vadd.f32 0.0, %v896
        %898 = vmatmul.f32.gmra.mxu0 %v784
        %v899 = vpop.f32.mrf.mxu0
        %v900 = vadd.f32 0.0, %v899
        %901 = vmatmul.f32.gmra.mxu0 %v787
        %v902 = vpop.f32.mrf.mxu0
        %v903 = vadd.f32 0.0, %v902
        %904 = vmatmul.f32.gmra.mxu0 %v790
        %v905 = vpop.f32.mrf.mxu0
        %v906 = vadd.f32 0.0, %v905
        %907 = vmatmul.f32.gmra.mxu0 %v793
        %v908 = vpop.f32.mrf.mxu0
        %v909 = vadd.f32 0.0, %v908
        %910 = vmatmul.f32.gmra.mxu0 %v796
        %v911 = vpop.f32.mrf.mxu0
        %v912 = vadd.f32 0.0, %v911
        %913 = vmatmul.f32.gmra.mxu0 %v799
        %v914 = vpop.f32.mrf.mxu0
        %v915 = vadd.f32 0.0, %v914
        %916 = vmatmul.f32.gmra.mxu0 %v802
        %v917 = vpop.f32.mrf.mxu0
        %v918 = vadd.f32 0.0, %v917
        %919 = vmatmul.f32.gmra.mxu0 %v805
        %v920 = vpop.f32.mrf.mxu0
        %v921 = vadd.f32 0.0, %v920
        %922 = vmatmul.f32.gmra.mxu0 %v808
        %v923 = vpop.f32.mrf.mxu0
        %v924 = vadd.f32 0.0, %v923
        %925 = vmatmul.f32.gmra.mxu0 %v811
        %v926 = vpop.f32.mrf.mxu0
        %v927 = vadd.f32 0.0, %v926
        %928 = vmatmul.f32.gmra.mxu0 %v814
        %v929 = vpop.f32.mrf.mxu0
        %v930 = vadd.f32 0.0, %v929
        %931 = vmatmul.f32.gmra.mxu0 %v817
        %v932 = vpop.f32.mrf.mxu0
        %v933 = vadd.f32 0.0, %v932
        %934 = vmatmul.f32.gmra.mxu0 %v820
        %v935 = vpop.f32.mrf.mxu0
        %v936 = vadd.f32 0.0, %v935
        %937 = vmatmul.f32.gmra.mxu0 %v823
        %v938 = vpop.f32.mrf.mxu0
        %v939 = vadd.f32 0.0, %v938
        %940 = vmatmul.f32.gmra.mxu0 %v826
        %v941 = vpop.f32.mrf.mxu0
        %v942 = vadd.f32 0.0, %v941
        %943 = vmatmul.f32.gmra.mxu0 %v829
        %v944 = vpop.f32.mrf.mxu0
        %v945 = vadd.f32 0.0, %v944
        %946 = vmatmul.f32.gmra.mxu0 %v832
        %v947 = vpop.f32.mrf.mxu0
        %v948 = vadd.f32 0.0, %v947
        %949 = vmatmul.f32.gmra.mxu0 %v835
        %v950 = vpop.f32.mrf.mxu0
        %v951 = vadd.f32 0.0, %v950
        %952 = vmatmul.f32.gmra.mxu0 %v838
        %v953 = vpop.f32.mrf.mxu0
        %v954 = vadd.f32 0.0, %v953
        %955 = vmatmul.f32.gmra.mxu0 %v841
        %v956 = vpop.f32.mrf.mxu0
        %v957 = vadd.f32 0.0, %v956
        %958 = vmatmul.f32.gmra.mxu0 %v844
        %v959 = vpop.f32.mrf.mxu0
        %v960 = vadd.f32 0.0, %v959
        %961 = vmatmul.f32.gmra.mxu0 %v847
        %v962 = vpop.f32.mrf.mxu0
        %v963 = vadd.f32 0.0, %v962
        %964 = vmatmul.f32.gmra.mxu0 %v850
        %v965 = vpop.f32.mrf.mxu0
        %v966 = vadd.f32 0.0, %v965
        %967 = vmatmul.f32.gmra.mxu0 %v853
        %v968 = vpop.f32.mrf.mxu0
        %v969 = vadd.f32 0.0, %v968
        %970 = vdwg.mxu0
        %v972 = vsel %vm368, %v692, 0
        %v975 = vsel %vm368, %v693, 0
        %v978 = vsel %vm368, %v694, 0
        %v981 = vsel %vm368, %v695, 0
        %v984 = vsel %vm368, %v696, 0
        %v987 = vsel %vm368, %v697, 0
        %v990 = vsel %vm368, %v698, 0
        %v993 = vsel %vm368, %v699, 0
        %v996 = vsel %vm368, %v700, 0
        %v999 = vsel %vm368, %v701, 0
        %v1002 = vsel %vm368, %v702, 0
        %v1005 = vsel %vm368, %v703, 0
        %v1008 = vsel %vm368, %v704, 0
        %v1011 = vsel %vm368, %v705, 0
        %v1014 = vsel %vm368, %v706, 0
        %v1017 = vsel %vm368, %v707, 0
        %v1020 = vsel %vm368, %v708, 0
        %v1023 = vsel %vm368, %v709, 0
        %v1026 = vsel %vm368, %v710, 0
        %v1029 = vsel %vm368, %v711, 0
        %v1032 = vsel %vm368, %v712, 0
        %v1035 = vsel %vm368, %v713, 0
        %v1038 = vsel %vm368, %v714, 0
        %v1041 = vsel %vm368, %v715, 0
        %v1044 = vsel %vm368, %v716, 0
        %v1047 = vsel %vm368, %v717, 0
        %v1050 = vsel %vm368, %v718, 0
        %v1053 = vsel %vm368, %v719, 0
        %v1056 = vsel %vm368, %v720, 0
        %v1059 = vsel %vm368, %v721, 0
        %v1062 = vsel %vm368, %v722, 0
        %v1065 = vsel %vm368, %v723, 0
        %v1068 = vsel %vm465, %v724, 0
        %1070 = vmatpush.msra.mxu0 0.0
        %1071 = vmatpush.msra.mxu0 0.0
        %1072 = vmatpush.msra.mxu0 0.0
        %1073 = vmatpush.msra.mxu0 0.0
        %1074 = vmatpush.msra.mxu0 0.0
        %1075 = vmatpush.msra.mxu0 0.0
        %1076 = vmatpush.msra.mxu0 0.0
        %1077 = vmatpush.msra.mxu0 0.0
        %1078 = vmatpush.msra.mxu0 0.0
        %1079 = vmatpush.msra.mxu0 0.0
        %1080 = vmatpush.msra.mxu0 0.0
        %1081 = vmatpush.msra.mxu0 0.0
        %1082 = vmatpush.msra.mxu0 0.0
        %1083 = vmatpush.msra.mxu0 0.0
        %1084 = vmatpush.msra.mxu0 0.0
        %1085 = vmatpush.msra.mxu0 %v1068
        %1086 = vmatmul.f32.gmra.mxu0 %v972
        %v1087 = vpop.f32.mrf.mxu0
        %v1088 = vadd.f32 %v876, %v1087
        %1089 = vmatmul.f32.gmra.mxu0 %v975
        %v1090 = vpop.f32.mrf.mxu0
        %v1091 = vadd.f32 %v879, %v1090
        %1092 = vmatmul.f32.gmra.mxu0 %v978
        %v1093 = vpop.f32.mrf.mxu0
        %v1094 = vadd.f32 %v882, %v1093
        %1095 = vmatmul.f32.gmra.mxu0 %v981
        %v1096 = vpop.f32.mrf.mxu0
        %v1097 = vadd.f32 %v885, %v1096
        %1098 = vmatmul.f32.gmra.mxu0 %v984
        %v1099 = vpop.f32.mrf.mxu0
        %v1100 = vadd.f32 %v888, %v1099
        %1101 = vmatmul.f32.gmra.mxu0 %v987
        %v1102 = vpop.f32.mrf.mxu0
        %v1103 = vadd.f32 %v891, %v1102
        %1104 = vmatmul.f32.gmra.mxu0 %v990
        %v1105 = vpop.f32.mrf.mxu0
        %v1106 = vadd.f32 %v894, %v1105
        %1107 = vmatmul.f32.gmra.mxu0 %v993
        %v1108 = vpop.f32.mrf.mxu0
        %v1109 = vadd.f32 %v897, %v1108
        %1110 = vmatmul.f32.gmra.mxu0 %v996
        %v1111 = vpop.f32.mrf.mxu0
        %v1112 = vadd.f32 %v900, %v1111
        %1113 = vmatmul.f32.gmra.mxu0 %v999
        %v1114 = vpop.f32.mrf.mxu0
        %v1115 = vadd.f32 %v903, %v1114
        %1116 = vmatmul.f32.gmra.mxu0 %v1002
        %v1117 = vpop.f32.mrf.mxu0
        %v1118 = vadd.f32 %v906, %v1117
        %1119 = vmatmul.f32.gmra.mxu0 %v1005
        %v1120 = vpop.f32.mrf.mxu0
        %v1121 = vadd.f32 %v909, %v1120
        %1122 = vmatmul.f32.gmra.mxu0 %v1008
        %v1123 = vpop.f32.mrf.mxu0
        %v1124 = vadd.f32 %v912, %v1123
        %1125 = vmatmul.f32.gmra.mxu0 %v1011
        %v1126 = vpop.f32.mrf.mxu0
        %v1127 = vadd.f32 %v915, %v1126
        %1128 = vmatmul.f32.gmra.mxu0 %v1014
        %v1129 = vpop.f32.mrf.mxu0
        %v1130 = vadd.f32 %v918, %v1129
        %1131 = vmatmul.f32.gmra.mxu0 %v1017
        %v1132 = vpop.f32.mrf.mxu0
        %v1133 = vadd.f32 %v921, %v1132
        %1134 = vmatmul.f32.gmra.mxu0 %v1020
        %v1135 = vpop.f32.mrf.mxu0
        %v1136 = vadd.f32 %v924, %v1135
        %1137 = vmatmul.f32.gmra.mxu0 %v1023
        %v1138 = vpop.f32.mrf.mxu0
        %v1139 = vadd.f32 %v927, %v1138
        %1140 = vmatmul.f32.gmra.mxu0 %v1026
        %v1141 = vpop.f32.mrf.mxu0
        %v1142 = vadd.f32 %v930, %v1141
        %1143 = vmatmul.f32.gmra.mxu0 %v1029
        %v1144 = vpop.f32.mrf.mxu0
        %v1145 = vadd.f32 %v933, %v1144
        %1146 = vmatmul.f32.gmra.mxu0 %v1032
        %v1147 = vpop.f32.mrf.mxu0
        %v1148 = vadd.f32 %v936, %v1147
        %1149 = vmatmul.f32.gmra.mxu0 %v1035
        %v1150 = vpop.f32.mrf.mxu0
        %v1151 = vadd.f32 %v939, %v1150
        %1152 = vmatmul.f32.gmra.mxu0 %v1038
        %v1153 = vpop.f32.mrf.mxu0
        %v1154 = vadd.f32 %v942, %v1153
        %1155 = vmatmul.f32.gmra.mxu0 %v1041
        %v1156 = vpop.f32.mrf.mxu0
        %v1157 = vadd.f32 %v945, %v1156
        %1158 = vmatmul.f32.gmra.mxu0 %v1044
        %v1159 = vpop.f32.mrf.mxu0
        %v1160 = vadd.f32 %v948, %v1159
        %1161 = vmatmul.f32.gmra.mxu0 %v1047
        %v1162 = vpop.f32.mrf.mxu0
        %v1163 = vadd.f32 %v951, %v1162
        %1164 = vmatmul.f32.gmra.mxu0 %v1050
        %v1165 = vpop.f32.mrf.mxu0
        %v1166 = vadd.f32 %v954, %v1165
        %1167 = vmatmul.f32.gmra.mxu0 %v1053
        %v1168 = vpop.f32.mrf.mxu0
        %v1169 = vadd.f32 %v957, %v1168
        %1170 = vmatmul.f32.gmra.mxu0 %v1056
        %v1171 = vpop.f32.mrf.mxu0
        %v1172 = vadd.f32 %v960, %v1171
        %1173 = vmatmul.f32.gmra.mxu0 %v1059
        %v1174 = vpop.f32.mrf.mxu0
        %v1175 = vadd.f32 %v963, %v1174
        %1176 = vmatmul.f32.gmra.mxu0 %v1062
        %v1177 = vpop.f32.mrf.mxu0
        %v1178 = vadd.f32 %v966, %v1177
        %1179 = vmatmul.f32.gmra.mxu0 %v1065
        %v1180 = vpop.f32.mrf.mxu0
        %v1181 = vadd.f32 %v969, %v1180
        %1182 = vdwg.mxu0
        %v1183 = vld [vmem:[#allocation2 + $0x2] sm:$0xff]
        %v1184 = vld [vmem:[#allocation2 + $0xa] sm:$0xff]
        %v1185 = vld [vmem:[#allocation2 + $0x1a] sm:$0xff]
        %v1186 = vld [vmem:[#allocation2 + $0x22] sm:$0xff]
        %v1187 = vld [vmem:[#allocation2 + $0x32] sm:$0xff]
        %v1188 = vld [vmem:[#allocation2 + $0x3a] sm:$0xff]
        %v1189 = vld [vmem:[#allocation2 + $0x4a] sm:$0xff]
        %v1190 = vld [vmem:[#allocation2 + $0x52] sm:$0xff]
        %v1191 = vld [vmem:[#allocation2 + $0x62] sm:$0xff]
        %v1192 = vld [vmem:[#allocation2 + $0x6a] sm:$0xff]
        %v1193 = vld [vmem:[#allocation2 + $0x7a] sm:$0xff]
        %v1194 = vld [vmem:[#allocation2 + $0x82] sm:$0xff]
        %v1195 = vld [vmem:[#allocation2 + $0x92] sm:$0xff]
        %v1196 = vld [vmem:[#allocation2 + $0x9a] sm:$0xff]
        %v1197 = vld [vmem:[#allocation2 + $0xaa] sm:$0xff]
        %v1198 = vld [vmem:[#allocation2 + $0xb2] sm:$0xff]
        %v1199 = vld [vmem:[#allocation2 + $0xc2] sm:$0xff]
        %v1200 = vld [vmem:[#allocation2 + $0xca] sm:$0xff]
        %v1201 = vld [vmem:[#allocation2 + $0xda] sm:$0xff]
        %v1202 = vld [vmem:[#allocation2 + $0xe2] sm:$0xff]
        %v1203 = vld [vmem:[#allocation2 + $0xf2] sm:$0xff]
        %v1204 = vld [vmem:[#allocation2 + $0xfa] sm:$0xff]
        %v1205 = vld [vmem:[#allocation2 + $0x10a] sm:$0xff]
        %v1206 = vld [vmem:[#allocation2 + $0x112] sm:$0xff]
        %v1207 = vld [vmem:[#allocation2 + $0x122] sm:$0xff]
        %v1208 = vld [vmem:[#allocation2 + $0x12a] sm:$0xff]
        %v1209 = vld [vmem:[#allocation2 + $0x13a] sm:$0xff]
        %v1210 = vld [vmem:[#allocation2 + $0x142] sm:$0xff]
        %v1211 = vld [vmem:[#allocation2 + $0x152] sm:$0xff]
        %v1212 = vld [vmem:[#allocation2 + $0x15a] sm:$0xff]
        %v1213 = vld [vmem:[#allocation2 + $0x16a] sm:$0xff]
        %v1214 = vld [vmem:[#allocation2 + $0x172] sm:$0xff]
        %s1215 = scalar_lea.vmem %s3, 8
        %v1216 = vld [vmem:[%s1215] sm:$0xf]
        %v1218 = vsel %vm368, %v1183, 0
        %v1221 = vsel %vm368, %v1184, 0
        %v1224 = vsel %vm368, %v1185, 0
        %v1227 = vsel %vm368, %v1186, 0
        %v1230 = vsel %vm368, %v1187, 0
        %v1233 = vsel %vm368, %v1188, 0
        %v1236 = vsel %vm368, %v1189, 0
        %v1239 = vsel %vm368, %v1190, 0
        %v1242 = vsel %vm368, %v1191, 0
        %v1245 = vsel %vm368, %v1192, 0
        %v1248 = vsel %vm368, %v1193, 0
        %v1251 = vsel %vm368, %v1194, 0
        %v1254 = vsel %vm368, %v1195, 0
        %v1257 = vsel %vm368, %v1196, 0
        %v1260 = vsel %vm368, %v1197, 0
        %v1263 = vsel %vm368, %v1198, 0
        %v1266 = vsel %vm368, %v1199, 0
        %v1269 = vsel %vm368, %v1200, 0
        %v1272 = vsel %vm368, %v1201, 0
        %v1275 = vsel %vm368, %v1202, 0
        %v1278 = vsel %vm368, %v1203, 0
        %v1281 = vsel %vm368, %v1204, 0
        %v1284 = vsel %vm368, %v1205, 0
        %v1287 = vsel %vm368, %v1206, 0
        %v1290 = vsel %vm368, %v1207, 0
        %v1293 = vsel %vm368, %v1208, 0
        %v1296 = vsel %vm368, %v1209, 0
        %v1299 = vsel %vm368, %v1210, 0
        %v1302 = vsel %vm368, %v1211, 0
        %v1305 = vsel %vm368, %v1212, 0
        %v1308 = vsel %vm368, %v1213, 0
        %v1311 = vsel %vm368, %v1214, 0
        %v1314 = vsel %vm465, %v1216, 0
        %1316 = vmatpush.msra.mxu0 0.0
        %1317 = vmatpush.msra.mxu0 0.0
        %1318 = vmatpush.msra.mxu0 0.0
        %1319 = vmatpush.msra.mxu0 0.0
        %1320 = vmatpush.msra.mxu0 0.0
        %1321 = vmatpush.msra.mxu0 0.0
        %1322 = vmatpush.msra.mxu0 0.0
        %1323 = vmatpush.msra.mxu0 0.0
        %1324 = vmatpush.msra.mxu0 0.0
        %1325 = vmatpush.msra.mxu0 0.0
        %1326 = vmatpush.msra.mxu0 0.0
        %1327 = vmatpush.msra.mxu0 0.0
        %1328 = vmatpush.msra.mxu0 0.0
        %1329 = vmatpush.msra.mxu0 0.0
        %1330 = vmatpush.msra.mxu0 0.0
        %1331 = vmatpush.msra.mxu0 %v1314
        %1332 = vmatmul.f32.gmra.mxu0 %v1218
        %v1333 = vpop.f32.mrf.mxu0
        %v1334 = vadd.f32 0.0, %v1333
        %1335 = vmatmul.f32.gmra.mxu0 %v1221
        %v1336 = vpop.f32.mrf.mxu0
        %v1337 = vadd.f32 0.0, %v1336
        %1338 = vmatmul.f32.gmra.mxu0 %v1224
        %v1339 = vpop.f32.mrf.mxu0
        %v1340 = vadd.f32 0.0, %v1339
        %1341 = vmatmul.f32.gmra.mxu0 %v1227
        %v1342 = vpop.f32.mrf.mxu0
        %v1343 = vadd.f32 0.0, %v1342
        %1344 = vmatmul.f32.gmra.mxu0 %v1230
        %v1345 = vpop.f32.mrf.mxu0
        %v1346 = vadd.f32 0.0, %v1345
        %1347 = vmatmul.f32.gmra.mxu0 %v1233
        %v1348 = vpop.f32.mrf.mxu0
        %v1349 = vadd.f32 0.0, %v1348
        %1350 = vmatmul.f32.gmra.mxu0 %v1236
        %v1351 = vpop.f32.mrf.mxu0
        %v1352 = vadd.f32 0.0, %v1351
        %1353 = vmatmul.f32.gmra.mxu0 %v1239
        %v1354 = vpop.f32.mrf.mxu0
        %v1355 = vadd.f32 0.0, %v1354
        %1356 = vmatmul.f32.gmra.mxu0 %v1242
        %v1357 = vpop.f32.mrf.mxu0
        %v1358 = vadd.f32 0.0, %v1357
        %1359 = vmatmul.f32.gmra.mxu0 %v1245
        %v1360 = vpop.f32.mrf.mxu0
        %v1361 = vadd.f32 0.0, %v1360
        %1362 = vmatmul.f32.gmra.mxu0 %v1248
        %v1363 = vpop.f32.mrf.mxu0
        %v1364 = vadd.f32 0.0, %v1363
        %1365 = vmatmul.f32.gmra.mxu0 %v1251
        %v1366 = vpop.f32.mrf.mxu0
        %v1367 = vadd.f32 0.0, %v1366
        %1368 = vmatmul.f32.gmra.mxu0 %v1254
        %v1369 = vpop.f32.mrf.mxu0
        %v1370 = vadd.f32 0.0, %v1369
        %1371 = vmatmul.f32.gmra.mxu0 %v1257
        %v1372 = vpop.f32.mrf.mxu0
        %v1373 = vadd.f32 0.0, %v1372
        %1374 = vmatmul.f32.gmra.mxu0 %v1260
        %v1375 = vpop.f32.mrf.mxu0
        %v1376 = vadd.f32 0.0, %v1375
        %1377 = vmatmul.f32.gmra.mxu0 %v1263
        %v1378 = vpop.f32.mrf.mxu0
        %v1379 = vadd.f32 0.0, %v1378
        %1380 = vmatmul.f32.gmra.mxu0 %v1266
        %v1381 = vpop.f32.mrf.mxu0
        %v1382 = vadd.f32 0.0, %v1381
        %1383 = vmatmul.f32.gmra.mxu0 %v1269
        %v1384 = vpop.f32.mrf.mxu0
        %v1385 = vadd.f32 0.0, %v1384
        %1386 = vmatmul.f32.gmra.mxu0 %v1272
        %v1387 = vpop.f32.mrf.mxu0
        %v1388 = vadd.f32 0.0, %v1387
        %1389 = vmatmul.f32.gmra.mxu0 %v1275
        %v1390 = vpop.f32.mrf.mxu0
        %v1391 = vadd.f32 0.0, %v1390
        %1392 = vmatmul.f32.gmra.mxu0 %v1278
        %v1393 = vpop.f32.mrf.mxu0
        %v1394 = vadd.f32 0.0, %v1393
        %1395 = vmatmul.f32.gmra.mxu0 %v1281
        %v1396 = vpop.f32.mrf.mxu0
        %v1397 = vadd.f32 0.0, %v1396
        %1398 = vmatmul.f32.gmra.mxu0 %v1284
        %v1399 = vpop.f32.mrf.mxu0
        %v1400 = vadd.f32 0.0, %v1399
        %1401 = vmatmul.f32.gmra.mxu0 %v1287
        %v1402 = vpop.f32.mrf.mxu0
        %v1403 = vadd.f32 0.0, %v1402
        %1404 = vmatmul.f32.gmra.mxu0 %v1290
        %v1405 = vpop.f32.mrf.mxu0
        %v1406 = vadd.f32 0.0, %v1405
        %1407 = vmatmul.f32.gmra.mxu0 %v1293
        %v1408 = vpop.f32.mrf.mxu0
        %v1409 = vadd.f32 0.0, %v1408
        %1410 = vmatmul.f32.gmra.mxu0 %v1296
        %v1411 = vpop.f32.mrf.mxu0
        %v1412 = vadd.f32 0.0, %v1411
        %1413 = vmatmul.f32.gmra.mxu0 %v1299
        %v1414 = vpop.f32.mrf.mxu0
        %v1415 = vadd.f32 0.0, %v1414
        %1416 = vmatmul.f32.gmra.mxu0 %v1302
        %v1417 = vpop.f32.mrf.mxu0
        %v1418 = vadd.f32 0.0, %v1417
        %1419 = vmatmul.f32.gmra.mxu0 %v1305
        %v1420 = vpop.f32.mrf.mxu0
        %v1421 = vadd.f32 0.0, %v1420
        %1422 = vmatmul.f32.gmra.mxu0 %v1308
        %v1423 = vpop.f32.mrf.mxu0
        %v1424 = vadd.f32 0.0, %v1423
        %1425 = vmatmul.f32.gmra.mxu0 %v1311
        %v1426 = vpop.f32.mrf.mxu0
        %v1427 = vadd.f32 0.0, %v1426
        %1428 = vdwg.mxu0
        %v1429 = vadd.f32 %v1088, %v1334
        %v1430 = vadd.f32 %v1091, %v1337
        %v1431 = vadd.f32 %v1094, %v1340
        %v1432 = vadd.f32 %v1097, %v1343
        %v1433 = vadd.f32 %v1100, %v1346
        %v1434 = vadd.f32 %v1103, %v1349
        %v1435 = vadd.f32 %v1106, %v1352
        %v1436 = vadd.f32 %v1109, %v1355
        %v1437 = vadd.f32 %v1112, %v1358
        %v1438 = vadd.f32 %v1115, %v1361
        %v1439 = vadd.f32 %v1118, %v1364
        %v1440 = vadd.f32 %v1121, %v1367
        %v1441 = vadd.f32 %v1124, %v1370
        %v1442 = vadd.f32 %v1127, %v1373
        %v1443 = vadd.f32 %v1130, %v1376
        %v1444 = vadd.f32 %v1133, %v1379
        %v1445 = vadd.f32 %v1136, %v1382
        %v1446 = vadd.f32 %v1139, %v1385
        %v1447 = vadd.f32 %v1142, %v1388
        %v1448 = vadd.f32 %v1145, %v1391
        %v1449 = vadd.f32 %v1148, %v1394
        %v1450 = vadd.f32 %v1151, %v1397
        %v1451 = vadd.f32 %v1154, %v1400
        %v1452 = vadd.f32 %v1157, %v1403
        %v1453 = vadd.f32 %v1160, %v1406
        %v1454 = vadd.f32 %v1163, %v1409
        %v1455 = vadd.f32 %v1166, %v1412
        %v1456 = vadd.f32 %v1169, %v1415
        %v1457 = vadd.f32 %v1172, %v1418
        %v1458 = vadd.f32 %v1175, %v1421
        %v1459 = vadd.f32 %v1178, %v1424
        %v1460 = vadd.f32 %v1181, %v1427
        %v1461 = vld [vmem:[%s659] sm:$0xff]
        %v1462 = vld [vmem:[%s659 + $0x8] sm:$0xff]
        %v1463 = vld [vmem:[%s659 + $0x18] sm:$0xff]
        %v1464 = vld [vmem:[%s659 + $0x20] sm:$0xff]
        %v1465 = vld [vmem:[%s659 + $0x30] sm:$0xff]
        %v1466 = vld [vmem:[%s659 + $0x38] sm:$0xff]
        %v1467 = vld [vmem:[%s659 + $0x48] sm:$0xff]
        %v1468 = vld [vmem:[%s659 + $0x50] sm:$0xff]
        %v1469 = vld [vmem:[%s659 + $0x60] sm:$0xff]
        %v1470 = vld [vmem:[%s659 + $0x68] sm:$0xff]
        %v1471 = vld [vmem:[%s659 + $0x78] sm:$0xff]
        %v1472 = vld [vmem:[%s659 + $0x80] sm:$0xff]
        %v1473 = vld [vmem:[%s659 + $0x90] sm:$0xff]
        %v1474 = vld [vmem:[%s659 + $0x98] sm:$0xff]
        %v1475 = vld [vmem:[%s659 + $0xa8] sm:$0xff]
        %v1476 = vld [vmem:[%s659 + $0xb0] sm:$0xff]
        %v1477 = vld [vmem:[%s659 + $0xc0] sm:$0xff]
        %v1478 = vld [vmem:[%s659 + $0xc8] sm:$0xff]
        %v1479 = vld [vmem:[%s659 + $0xd8] sm:$0xff]
        %v1480 = vld [vmem:[%s659 + $0xe0] sm:$0xff]
        %v1481 = vld [vmem:[%s659 + $0xf0] sm:$0xff]
        %v1482 = vld [vmem:[%s659 + $0xf8] sm:$0xff]
        %v1483 = vld [vmem:[%s659 + $0x108] sm:$0xff]
        %v1484 = vld [vmem:[%s659 + $0x110] sm:$0xff]
        %v1485 = vld [vmem:[%s659 + $0x120] sm:$0xff]
        %v1486 = vld [vmem:[%s659 + $0x128] sm:$0xff]
        %v1487 = vld [vmem:[%s659 + $0x138] sm:$0xff]
        %v1488 = vld [vmem:[%s659 + $0x140] sm:$0xff]
        %v1489 = vld [vmem:[%s659 + $0x150] sm:$0xff]
        %v1490 = vld [vmem:[%s659 + $0x158] sm:$0xff]
        %v1491 = vld [vmem:[%s659 + $0x168] sm:$0xff]
        %v1492 = vld [vmem:[%s659 + $0x170] sm:$0xff]
        %s1493 = scalar_lea.vmem %s3, 12
        %v1494 = vld [vmem:[%s1493] sm:$0xf]
        %v1496 = vsel %vm368, %v1461, 0
        %v1499 = vsel %vm368, %v1462, 0
        %v1502 = vsel %vm368, %v1463, 0
        %v1505 = vsel %vm368, %v1464, 0
        %v1508 = vsel %vm368, %v1465, 0
        %v1511 = vsel %vm368, %v1466, 0
        %v1514 = vsel %vm368, %v1467, 0
        %v1517 = vsel %vm368, %v1468, 0
        %v1520 = vsel %vm368, %v1469, 0
        %v1523 = vsel %vm368, %v1470, 0
        %v1526 = vsel %vm368, %v1471, 0
        %v1529 = vsel %vm368, %v1472, 0
        %v1532 = vsel %vm368, %v1473, 0
        %v1535 = vsel %vm368, %v1474, 0
        %v1538 = vsel %vm368, %v1475, 0
        %v1541 = vsel %vm368, %v1476, 0
        %v1544 = vsel %vm368, %v1477, 0
        %v1547 = vsel %vm368, %v1478, 0
        %v1550 = vsel %vm368, %v1479, 0
        %v1553 = vsel %vm368, %v1480, 0
        %v1556 = vsel %vm368, %v1481, 0
        %v1559 = vsel %vm368, %v1482, 0
        %v1562 = vsel %vm368, %v1483, 0
        %v1565 = vsel %vm368, %v1484, 0
        %v1568 = vsel %vm368, %v1485, 0
        %v1571 = vsel %vm368, %v1486, 0
        %v1574 = vsel %vm368, %v1487, 0
        %v1577 = vsel %vm368, %v1488, 0
        %v1580 = vsel %vm368, %v1489, 0
        %v1583 = vsel %vm368, %v1490, 0
        %v1586 = vsel %vm368, %v1491, 0
        %v1589 = vsel %vm368, %v1492, 0
        %v1592 = vsel %vm465, %v1494, 0
        %1594 = vmatpush.msra.mxu0 0.0
        %1595 = vmatpush.msra.mxu0 0.0
        %1596 = vmatpush.msra.mxu0 0.0
        %1597 = vmatpush.msra.mxu0 0.0
        %1598 = vmatpush.msra.mxu0 0.0
        %1599 = vmatpush.msra.mxu0 0.0
        %1600 = vmatpush.msra.mxu0 0.0
        %1601 = vmatpush.msra.mxu0 0.0
        %1602 = vmatpush.msra.mxu0 0.0
        %1603 = vmatpush.msra.mxu0 0.0
        %1604 = vmatpush.msra.mxu0 0.0
        %1605 = vmatpush.msra.mxu0 0.0
        %1606 = vmatpush.msra.mxu0 0.0
        %1607 = vmatpush.msra.mxu0 0.0
        %1608 = vmatpush.msra.mxu0 0.0
        %1609 = vmatpush.msra.mxu0 %v1592
        %1610 = vmatmul.f32.gmra.mxu0 %v1496
        %v1611 = vpop.f32.mrf.mxu0
        %v1612 = vadd.f32 0.0, %v1611
        %1613 = vmatmul.f32.gmra.mxu0 %v1499
        %v1614 = vpop.f32.mrf.mxu0
        %v1615 = vadd.f32 0.0, %v1614
        %1616 = vmatmul.f32.gmra.mxu0 %v1502
        %v1617 = vpop.f32.mrf.mxu0
        %v1618 = vadd.f32 0.0, %v1617
        %1619 = vmatmul.f32.gmra.mxu0 %v1505
        %v1620 = vpop.f32.mrf.mxu0
        %v1621 = vadd.f32 0.0, %v1620
        %1622 = vmatmul.f32.gmra.mxu0 %v1508
        %v1623 = vpop.f32.mrf.mxu0
        %v1624 = vadd.f32 0.0, %v1623
        %1625 = vmatmul.f32.gmra.mxu0 %v1511
        %v1626 = vpop.f32.mrf.mxu0
        %v1627 = vadd.f32 0.0, %v1626
        %1628 = vmatmul.f32.gmra.mxu0 %v1514
        %v1629 = vpop.f32.mrf.mxu0
        %v1630 = vadd.f32 0.0, %v1629
        %1631 = vmatmul.f32.gmra.mxu0 %v1517
        %v1632 = vpop.f32.mrf.mxu0
        %v1633 = vadd.f32 0.0, %v1632
        %1634 = vmatmul.f32.gmra.mxu0 %v1520
        %v1635 = vpop.f32.mrf.mxu0
        %v1636 = vadd.f32 0.0, %v1635
        %1637 = vmatmul.f32.gmra.mxu0 %v1523
        %v1638 = vpop.f32.mrf.mxu0
        %v1639 = vadd.f32 0.0, %v1638
        %1640 = vmatmul.f32.gmra.mxu0 %v1526
        %v1641 = vpop.f32.mrf.mxu0
        %v1642 = vadd.f32 0.0, %v1641
        %1643 = vmatmul.f32.gmra.mxu0 %v1529
        %v1644 = vpop.f32.mrf.mxu0
        %v1645 = vadd.f32 0.0, %v1644
        %1646 = vmatmul.f32.gmra.mxu0 %v1532
        %v1647 = vpop.f32.mrf.mxu0
        %v1648 = vadd.f32 0.0, %v1647
        %1649 = vmatmul.f32.gmra.mxu0 %v1535
        %v1650 = vpop.f32.mrf.mxu0
        %v1651 = vadd.f32 0.0, %v1650
        %1652 = vmatmul.f32.gmra.mxu0 %v1538
        %v1653 = vpop.f32.mrf.mxu0
        %v1654 = vadd.f32 0.0, %v1653
        %1655 = vmatmul.f32.gmra.mxu0 %v1541
        %v1656 = vpop.f32.mrf.mxu0
        %v1657 = vadd.f32 0.0, %v1656
        %1658 = vmatmul.f32.gmra.mxu0 %v1544
        %v1659 = vpop.f32.mrf.mxu0
        %v1660 = vadd.f32 0.0, %v1659
        %1661 = vmatmul.f32.gmra.mxu0 %v1547
        %v1662 = vpop.f32.mrf.mxu0
        %v1663 = vadd.f32 0.0, %v1662
        %1664 = vmatmul.f32.gmra.mxu0 %v1550
        %v1665 = vpop.f32.mrf.mxu0
        %v1666 = vadd.f32 0.0, %v1665
        %1667 = vmatmul.f32.gmra.mxu0 %v1553
        %v1668 = vpop.f32.mrf.mxu0
        %v1669 = vadd.f32 0.0, %v1668
        %1670 = vmatmul.f32.gmra.mxu0 %v1556
        %v1671 = vpop.f32.mrf.mxu0
        %v1672 = vadd.f32 0.0, %v1671
        %1673 = vmatmul.f32.gmra.mxu0 %v1559
        %v1674 = vpop.f32.mrf.mxu0
        %v1675 = vadd.f32 0.0, %v1674
        %1676 = vmatmul.f32.gmra.mxu0 %v1562
        %v1677 = vpop.f32.mrf.mxu0
        %v1678 = vadd.f32 0.0, %v1677
        %1679 = vmatmul.f32.gmra.mxu0 %v1565
        %v1680 = vpop.f32.mrf.mxu0
        %v1681 = vadd.f32 0.0, %v1680
        %1682 = vmatmul.f32.gmra.mxu0 %v1568
        %v1683 = vpop.f32.mrf.mxu0
        %v1684 = vadd.f32 0.0, %v1683
        %1685 = vmatmul.f32.gmra.mxu0 %v1571
        %v1686 = vpop.f32.mrf.mxu0
        %v1687 = vadd.f32 0.0, %v1686
        %1688 = vmatmul.f32.gmra.mxu0 %v1574
        %v1689 = vpop.f32.mrf.mxu0
        %v1690 = vadd.f32 0.0, %v1689
        %1691 = vmatmul.f32.gmra.mxu0 %v1577
        %v1692 = vpop.f32.mrf.mxu0
        %v1693 = vadd.f32 0.0, %v1692
        %1694 = vmatmul.f32.gmra.mxu0 %v1580
        %v1695 = vpop.f32.mrf.mxu0
        %v1696 = vadd.f32 0.0, %v1695
        %1697 = vmatmul.f32.gmra.mxu0 %v1583
        %v1698 = vpop.f32.mrf.mxu0
        %v1699 = vadd.f32 0.0, %v1698
        %1700 = vmatmul.f32.gmra.mxu0 %v1586
        %v1701 = vpop.f32.mrf.mxu0
        %v1702 = vadd.f32 0.0, %v1701
        %1703 = vmatmul.f32.gmra.mxu0 %v1589
        %v1704 = vpop.f32.mrf.mxu0
        %v1705 = vadd.f32 0.0, %v1704
        %1706 = vdwg.mxu0
        %v1707 = vadd.f32 %v1429, %v1612
        %v1708 = vadd.f32 %v1430, %v1615
        %v1709 = vadd.f32 %v1431, %v1618
        %v1710 = vadd.f32 %v1432, %v1621
        %v1711 = vadd.f32 %v1433, %v1624
        %v1712 = vadd.f32 %v1434, %v1627
        %v1713 = vadd.f32 %v1435, %v1630
        %v1714 = vadd.f32 %v1436, %v1633
        %v1715 = vadd.f32 %v1437, %v1636
        %v1716 = vadd.f32 %v1438, %v1639
        %v1717 = vadd.f32 %v1439, %v1642
        %v1718 = vadd.f32 %v1440, %v1645
        %v1719 = vadd.f32 %v1441, %v1648
        %v1720 = vadd.f32 %v1442, %v1651
        %v1721 = vadd.f32 %v1443, %v1654
        %v1722 = vadd.f32 %v1444, %v1657
        %v1723 = vadd.f32 %v1445, %v1660
        %v1724 = vadd.f32 %v1446, %v1663
        %v1725 = vadd.f32 %v1447, %v1666
        %v1726 = vadd.f32 %v1448, %v1669
        %v1727 = vadd.f32 %v1449, %v1672
        %v1728 = vadd.f32 %v1450, %v1675
        %v1729 = vadd.f32 %v1451, %v1678
        %v1730 = vadd.f32 %v1452, %v1681
        %v1731 = vadd.f32 %v1453, %v1684
        %v1732 = vadd.f32 %v1454, %v1687
        %v1733 = vadd.f32 %v1455, %v1690
        %v1734 = vadd.f32 %v1456, %v1693
        %v1735 = vadd.f32 %v1457, %v1696
        %v1736 = vadd.f32 %v1458, %v1699
        %v1737 = vadd.f32 %v1459, %v1702
        %v1738 = vadd.f32 %v1460, %v1705
        %v1739 = vld [vmem:[%s659 + $0x1] sm:$0xff]
        %v1740 = vld [vmem:[%s659 + $0x9] sm:$0xff]
        %v1741 = vld [vmem:[%s659 + $0x19] sm:$0xff]
        %v1742 = vld [vmem:[%s659 + $0x21] sm:$0xff]
        %v1743 = vld [vmem:[%s659 + $0x31] sm:$0xff]
        %v1744 = vld [vmem:[%s659 + $0x39] sm:$0xff]
        %v1745 = vld [vmem:[%s659 + $0x49] sm:$0xff]
        %v1746 = vld [vmem:[%s659 + $0x51] sm:$0xff]
        %v1747 = vld [vmem:[%s659 + $0x61] sm:$0xff]
        %v1748 = vld [vmem:[%s659 + $0x69] sm:$0xff]
        %v1749 = vld [vmem:[%s659 + $0x79] sm:$0xff]
        %v1750 = vld [vmem:[%s659 + $0x81] sm:$0xff]
        %v1751 = vld [vmem:[%s659 + $0x91] sm:$0xff]
        %v1752 = vld [vmem:[%s659 + $0x99] sm:$0xff]
        %v1753 = vld [vmem:[%s659 + $0xa9] sm:$0xff]
        %v1754 = vld [vmem:[%s659 + $0xb1] sm:$0xff]
        %v1755 = vld [vmem:[%s659 + $0xc1] sm:$0xff]
        %v1756 = vld [vmem:[%s659 + $0xc9] sm:$0xff]
        %v1757 = vld [vmem:[%s659 + $0xd9] sm:$0xff]
        %v1758 = vld [vmem:[%s659 + $0xe1] sm:$0xff]
        %v1759 = vld [vmem:[%s659 + $0xf1] sm:$0xff]
        %v1760 = vld [vmem:[%s659 + $0xf9] sm:$0xff]
        %v1761 = vld [vmem:[%s659 + $0x109] sm:$0xff]
        %v1762 = vld [vmem:[%s659 + $0x111] sm:$0xff]
        %v1763 = vld [vmem:[%s659 + $0x121] sm:$0xff]
        %v1764 = vld [vmem:[%s659 + $0x129] sm:$0xff]
        %v1765 = vld [vmem:[%s659 + $0x139] sm:$0xff]
        %v1766 = vld [vmem:[%s659 + $0x141] sm:$0xff]
        %v1767 = vld [vmem:[%s659 + $0x151] sm:$0xff]
        %v1768 = vld [vmem:[%s659 + $0x159] sm:$0xff]
        %v1769 = vld [vmem:[%s659 + $0x169] sm:$0xff]
        %v1770 = vld [vmem:[%s659 + $0x171] sm:$0xff]
        %s1771 = scalar_lea.vmem %s3, 16
        %v1772 = vld [vmem:[%s1771] sm:$0xf]
        %v1774 = vsel %vm368, %v1739, 0
        %v1777 = vsel %vm368, %v1740, 0
        %v1780 = vsel %vm368, %v1741, 0
        %v1783 = vsel %vm368, %v1742, 0
        %v1786 = vsel %vm368, %v1743, 0
        %v1789 = vsel %vm368, %v1744, 0
        %v1792 = vsel %vm368, %v1745, 0
        %v1795 = vsel %vm368, %v1746, 0
        %v1798 = vsel %vm368, %v1747, 0
        %v1801 = vsel %vm368, %v1748, 0
        %v1804 = vsel %vm368, %v1749, 0
        %v1807 = vsel %vm368, %v1750, 0
        %v1810 = vsel %vm368, %v1751, 0
        %v1813 = vsel %vm368, %v1752, 0
        %v1816 = vsel %vm368, %v1753, 0
        %v1819 = vsel %vm368, %v1754, 0
        %v1822 = vsel %vm368, %v1755, 0
        %v1825 = vsel %vm368, %v1756, 0
        %v1828 = vsel %vm368, %v1757, 0
        %v1831 = vsel %vm368, %v1758, 0
        %v1834 = vsel %vm368, %v1759, 0
        %v1837 = vsel %vm368, %v1760, 0
        %v1840 = vsel %vm368, %v1761, 0
        %v1843 = vsel %vm368, %v1762, 0
        %v1846 = vsel %vm368, %v1763, 0
        %v1849 = vsel %vm368, %v1764, 0
        %v1852 = vsel %vm368, %v1765, 0
        %v1855 = vsel %vm368, %v1766, 0
        %v1858 = vsel %vm368, %v1767, 0
        %v1861 = vsel %vm368, %v1768, 0
        %v1864 = vsel %vm368, %v1769, 0
        %v1867 = vsel %vm368, %v1770, 0
        %v1870 = vsel %vm465, %v1772, 0
        %1872 = vmatpush.msra.mxu0 0.0
        %1873 = vmatpush.msra.mxu0 0.0
        %1874 = vmatpush.msra.mxu0 0.0
        %1875 = vmatpush.msra.mxu0 0.0
        %1876 = vmatpush.msra.mxu0 0.0
        %1877 = vmatpush.msra.mxu0 0.0
        %1878 = vmatpush.msra.mxu0 0.0
        %1879 = vmatpush.msra.mxu0 0.0
        %1880 = vmatpush.msra.mxu0 0.0
        %1881 = vmatpush.msra.mxu0 0.0
        %1882 = vmatpush.msra.mxu0 0.0
        %1883 = vmatpush.msra.mxu0 0.0
        %1884 = vmatpush.msra.mxu0 0.0
        %1885 = vmatpush.msra.mxu0 0.0
        %1886 = vmatpush.msra.mxu0 0.0
        %1887 = vmatpush.msra.mxu0 %v1870
        %1888 = vmatmul.f32.gmra.mxu0 %v1774
        %v1889 = vpop.f32.mrf.mxu0
        %v1890 = vadd.f32 0.0, %v1889
        %1891 = vmatmul.f32.gmra.mxu0 %v1777
        %v1892 = vpop.f32.mrf.mxu0
        %v1893 = vadd.f32 0.0, %v1892
        %1894 = vmatmul.f32.gmra.mxu0 %v1780
        %v1895 = vpop.f32.mrf.mxu0
        %v1896 = vadd.f32 0.0, %v1895
        %1897 = vmatmul.f32.gmra.mxu0 %v1783
        %v1898 = vpop.f32.mrf.mxu0
        %v1899 = vadd.f32 0.0, %v1898
        %1900 = vmatmul.f32.gmra.mxu0 %v1786
        %v1901 = vpop.f32.mrf.mxu0
        %v1902 = vadd.f32 0.0, %v1901
        %1903 = vmatmul.f32.gmra.mxu0 %v1789
        %v1904 = vpop.f32.mrf.mxu0
        %v1905 = vadd.f32 0.0, %v1904
        %1906 = vmatmul.f32.gmra.mxu0 %v1792
        %v1907 = vpop.f32.mrf.mxu0
        %v1908 = vadd.f32 0.0, %v1907
        %1909 = vmatmul.f32.gmra.mxu0 %v1795
        %v1910 = vpop.f32.mrf.mxu0
        %v1911 = vadd.f32 0.0, %v1910
        %1912 = vmatmul.f32.gmra.mxu0 %v1798
        %v1913 = vpop.f32.mrf.mxu0
        %v1914 = vadd.f32 0.0, %v1913
        %1915 = vmatmul.f32.gmra.mxu0 %v1801
        %v1916 = vpop.f32.mrf.mxu0
        %v1917 = vadd.f32 0.0, %v1916
        %1918 = vmatmul.f32.gmra.mxu0 %v1804
        %v1919 = vpop.f32.mrf.mxu0
        %v1920 = vadd.f32 0.0, %v1919
        %1921 = vmatmul.f32.gmra.mxu0 %v1807
        %v1922 = vpop.f32.mrf.mxu0
        %v1923 = vadd.f32 0.0, %v1922
        %1924 = vmatmul.f32.gmra.mxu0 %v1810
        %v1925 = vpop.f32.mrf.mxu0
        %v1926 = vadd.f32 0.0, %v1925
        %1927 = vmatmul.f32.gmra.mxu0 %v1813
        %v1928 = vpop.f32.mrf.mxu0
        %v1929 = vadd.f32 0.0, %v1928
        %1930 = vmatmul.f32.gmra.mxu0 %v1816
        %v1931 = vpop.f32.mrf.mxu0
        %v1932 = vadd.f32 0.0, %v1931
        %1933 = vmatmul.f32.gmra.mxu0 %v1819
        %v1934 = vpop.f32.mrf.mxu0
        %v1935 = vadd.f32 0.0, %v1934
        %1936 = vmatmul.f32.gmra.mxu0 %v1822
        %v1937 = vpop.f32.mrf.mxu0
        %v1938 = vadd.f32 0.0, %v1937
        %1939 = vmatmul.f32.gmra.mxu0 %v1825
        %v1940 = vpop.f32.mrf.mxu0
        %v1941 = vadd.f32 0.0, %v1940
        %1942 = vmatmul.f32.gmra.mxu0 %v1828
        %v1943 = vpop.f32.mrf.mxu0
        %v1944 = vadd.f32 0.0, %v1943
        %1945 = vmatmul.f32.gmra.mxu0 %v1831
        %v1946 = vpop.f32.mrf.mxu0
        %v1947 = vadd.f32 0.0, %v1946
        %1948 = vmatmul.f32.gmra.mxu0 %v1834
        %v1949 = vpop.f32.mrf.mxu0
        %v1950 = vadd.f32 0.0, %v1949
        %1951 = vmatmul.f32.gmra.mxu0 %v1837
        %v1952 = vpop.f32.mrf.mxu0
        %v1953 = vadd.f32 0.0, %v1952
        %1954 = vmatmul.f32.gmra.mxu0 %v1840
        %v1955 = vpop.f32.mrf.mxu0
        %v1956 = vadd.f32 0.0, %v1955
        %1957 = vmatmul.f32.gmra.mxu0 %v1843
        %v1958 = vpop.f32.mrf.mxu0
        %v1959 = vadd.f32 0.0, %v1958
        %1960 = vmatmul.f32.gmra.mxu0 %v1846
        %v1961 = vpop.f32.mrf.mxu0
        %v1962 = vadd.f32 0.0, %v1961
        %1963 = vmatmul.f32.gmra.mxu0 %v1849
        %v1964 = vpop.f32.mrf.mxu0
        %v1965 = vadd.f32 0.0, %v1964
        %1966 = vmatmul.f32.gmra.mxu0 %v1852
        %v1967 = vpop.f32.mrf.mxu0
        %v1968 = vadd.f32 0.0, %v1967
        %1969 = vmatmul.f32.gmra.mxu0 %v1855
        %v1970 = vpop.f32.mrf.mxu0
        %v1971 = vadd.f32 0.0, %v1970
        %1972 = vmatmul.f32.gmra.mxu0 %v1858
        %v1973 = vpop.f32.mrf.mxu0
        %v1974 = vadd.f32 0.0, %v1973
        %1975 = vmatmul.f32.gmra.mxu0 %v1861
        %v1976 = vpop.f32.mrf.mxu0
        %v1977 = vadd.f32 0.0, %v1976
        %1978 = vmatmul.f32.gmra.mxu0 %v1864
        %v1979 = vpop.f32.mrf.mxu0
        %v1980 = vadd.f32 0.0, %v1979
        %1981 = vmatmul.f32.gmra.mxu0 %v1867
        %v1982 = vpop.f32.mrf.mxu0
        %v1983 = vadd.f32 0.0, %v1982
        %1984 = vdwg.mxu0
        %v1985 = vadd.f32 %v1707, %v1890
        %v1986 = vadd.f32 %v1708, %v1893
        %v1987 = vadd.f32 %v1709, %v1896
        %v1988 = vadd.f32 %v1710, %v1899
        %v1989 = vadd.f32 %v1711, %v1902
        %v1990 = vadd.f32 %v1712, %v1905
        %v1991 = vadd.f32 %v1713, %v1908
        %v1992 = vadd.f32 %v1714, %v1911
        %v1993 = vadd.f32 %v1715, %v1914
        %v1994 = vadd.f32 %v1716, %v1917
        %v1995 = vadd.f32 %v1717, %v1920
        %v1996 = vadd.f32 %v1718, %v1923
        %v1997 = vadd.f32 %v1719, %v1926
        %v1998 = vadd.f32 %v1720, %v1929
        %v1999 = vadd.f32 %v1721, %v1932
        %v2000 = vadd.f32 %v1722, %v1935
        %v2001 = vadd.f32 %v1723, %v1938
        %v2002 = vadd.f32 %v1724, %v1941
        %v2003 = vadd.f32 %v1725, %v1944
        %v2004 = vadd.f32 %v1726, %v1947
        %v2005 = vadd.f32 %v1727, %v1950
        %v2006 = vadd.f32 %v1728, %v1953
        %v2007 = vadd.f32 %v1729, %v1956
        %v2008 = vadd.f32 %v1730, %v1959
        %v2009 = vadd.f32 %v1731, %v1962
        %v2010 = vadd.f32 %v1732, %v1965
        %v2011 = vadd.f32 %v1733, %v1968
        %v2012 = vadd.f32 %v1734, %v1971
        %v2013 = vadd.f32 %v1735, %v1974
        %v2014 = vadd.f32 %v1736, %v1977
        %v2015 = vadd.f32 %v1737, %v1980
        %v2016 = vadd.f32 %v1738, %v1983
        %v2017 = vld [vmem:[%s659 + $0x2] sm:$0xff]
        %v2018 = vld [vmem:[%s659 + $0xa] sm:$0xff]
        %v2019 = vld [vmem:[%s659 + $0x1a] sm:$0xff]
        %v2020 = vld [vmem:[%s659 + $0x22] sm:$0xff]
        %v2021 = vld [vmem:[%s659 + $0x32] sm:$0xff]
        %v2022 = vld [vmem:[%s659 + $0x3a] sm:$0xff]
        %v2023 = vld [vmem:[%s659 + $0x4a] sm:$0xff]
        %v2024 = vld [vmem:[%s659 + $0x52] sm:$0xff]
        %v2025 = vld [vmem:[%s659 + $0x62] sm:$0xff]
        %v2026 = vld [vmem:[%s659 + $0x6a] sm:$0xff]
        %v2027 = vld [vmem:[%s659 + $0x7a] sm:$0xff]
        %v2028 = vld [vmem:[%s659 + $0x82] sm:$0xff]
        %v2029 = vld [vmem:[%s659 + $0x92] sm:$0xff]
        %v2030 = vld [vmem:[%s659 + $0x9a] sm:$0xff]
        %v2031 = vld [vmem:[%s659 + $0xaa] sm:$0xff]
        %v2032 = vld [vmem:[%s659 + $0xb2] sm:$0xff]
        %v2033 = vld [vmem:[%s659 + $0xc2] sm:$0xff]
        %v2034 = vld [vmem:[%s659 + $0xca] sm:$0xff]
        %v2035 = vld [vmem:[%s659 + $0xda] sm:$0xff]
        %v2036 = vld [vmem:[%s659 + $0xe2] sm:$0xff]
        %v2037 = vld [vmem:[%s659 + $0xf2] sm:$0xff]
        %v2038 = vld [vmem:[%s659 + $0xfa] sm:$0xff]
        %v2039 = vld [vmem:[%s659 + $0x10a] sm:$0xff]
        %v2040 = vld [vmem:[%s659 + $0x112] sm:$0xff]
        %v2041 = vld [vmem:[%s659 + $0x122] sm:$0xff]
        %v2042 = vld [vmem:[%s659 + $0x12a] sm:$0xff]
        %v2043 = vld [vmem:[%s659 + $0x13a] sm:$0xff]
        %v2044 = vld [vmem:[%s659 + $0x142] sm:$0xff]
        %v2045 = vld [vmem:[%s659 + $0x152] sm:$0xff]
        %v2046 = vld [vmem:[%s659 + $0x15a] sm:$0xff]
        %v2047 = vld [vmem:[%s659 + $0x16a] sm:$0xff]
        %v2048 = vld [vmem:[%s659 + $0x172] sm:$0xff]
        %s2049 = scalar_lea.vmem %s3, 20
        %v2050 = vld [vmem:[%s2049] sm:$0xf]
        %v2052 = vsel %vm368, %v2017, 0
        %v2055 = vsel %vm368, %v2018, 0
        %v2058 = vsel %vm368, %v2019, 0
        %v2061 = vsel %vm368, %v2020, 0
        %v2064 = vsel %vm368, %v2021, 0
        %v2067 = vsel %vm368, %v2022, 0
        %v2070 = vsel %vm368, %v2023, 0
        %v2073 = vsel %vm368, %v2024, 0
        %v2076 = vsel %vm368, %v2025, 0
        %v2079 = vsel %vm368, %v2026, 0
        %v2082 = vsel %vm368, %v2027, 0
        %v2085 = vsel %vm368, %v2028, 0
        %v2088 = vsel %vm368, %v2029, 0
        %v2091 = vsel %vm368, %v2030, 0
        %v2094 = vsel %vm368, %v2031, 0
        %v2097 = vsel %vm368, %v2032, 0
        %v2100 = vsel %vm368, %v2033, 0
        %v2103 = vsel %vm368, %v2034, 0
        %v2106 = vsel %vm368, %v2035, 0
        %v2109 = vsel %vm368, %v2036, 0
        %v2112 = vsel %vm368, %v2037, 0
        %v2115 = vsel %vm368, %v2038, 0
        %v2118 = vsel %vm368, %v2039, 0
        %v2121 = vsel %vm368, %v2040, 0
        %v2124 = vsel %vm368, %v2041, 0
        %v2127 = vsel %vm368, %v2042, 0
        %v2130 = vsel %vm368, %v2043, 0
        %v2133 = vsel %vm368, %v2044, 0
        %v2136 = vsel %vm368, %v2045, 0
        %v2139 = vsel %vm368, %v2046, 0
        %v2142 = vsel %vm368, %v2047, 0
        %v2145 = vsel %vm368, %v2048, 0
        %v2148 = vsel %vm465, %v2050, 0
        %2150 = vmatpush.msra.mxu0 0.0
        %2151 = vmatpush.msra.mxu0 0.0
        %2152 = vmatpush.msra.mxu0 0.0
        %2153 = vmatpush.msra.mxu0 0.0
        %2154 = vmatpush.msra.mxu0 0.0
        %2155 = vmatpush.msra.mxu0 0.0
        %2156 = vmatpush.msra.mxu0 0.0
        %2157 = vmatpush.msra.mxu0 0.0
        %2158 = vmatpush.msra.mxu0 0.0
        %2159 = vmatpush.msra.mxu0 0.0
        %2160 = vmatpush.msra.mxu0 0.0
        %2161 = vmatpush.msra.mxu0 0.0
        %2162 = vmatpush.msra.mxu0 0.0
        %2163 = vmatpush.msra.mxu0 0.0
        %2164 = vmatpush.msra.mxu0 0.0
        %2165 = vmatpush.msra.mxu0 %v2148
        %2166 = vmatmul.f32.gmra.mxu0 %v2052
        %v2167 = vpop.f32.mrf.mxu0
        %v2168 = vadd.f32 0.0, %v2167
        %2169 = vmatmul.f32.gmra.mxu0 %v2055
        %v2170 = vpop.f32.mrf.mxu0
        %v2171 = vadd.f32 0.0, %v2170
        %2172 = vmatmul.f32.gmra.mxu0 %v2058
        %v2173 = vpop.f32.mrf.mxu0
        %v2174 = vadd.f32 0.0, %v2173
        %2175 = vmatmul.f32.gmra.mxu0 %v2061
        %v2176 = vpop.f32.mrf.mxu0
        %v2177 = vadd.f32 0.0, %v2176
        %2178 = vmatmul.f32.gmra.mxu0 %v2064
        %v2179 = vpop.f32.mrf.mxu0
        %v2180 = vadd.f32 0.0, %v2179
        %2181 = vmatmul.f32.gmra.mxu0 %v2067
        %v2182 = vpop.f32.mrf.mxu0
        %v2183 = vadd.f32 0.0, %v2182
        %2184 = vmatmul.f32.gmra.mxu0 %v2070
        %v2185 = vpop.f32.mrf.mxu0
        %v2186 = vadd.f32 0.0, %v2185
        %2187 = vmatmul.f32.gmra.mxu0 %v2073
        %v2188 = vpop.f32.mrf.mxu0
        %v2189 = vadd.f32 0.0, %v2188
        %2190 = vmatmul.f32.gmra.mxu0 %v2076
        %v2191 = vpop.f32.mrf.mxu0
        %v2192 = vadd.f32 0.0, %v2191
        %2193 = vmatmul.f32.gmra.mxu0 %v2079
        %v2194 = vpop.f32.mrf.mxu0
        %v2195 = vadd.f32 0.0, %v2194
        %2196 = vmatmul.f32.gmra.mxu0 %v2082
        %v2197 = vpop.f32.mrf.mxu0
        %v2198 = vadd.f32 0.0, %v2197
        %2199 = vmatmul.f32.gmra.mxu0 %v2085
        %v2200 = vpop.f32.mrf.mxu0
        %v2201 = vadd.f32 0.0, %v2200
        %2202 = vmatmul.f32.gmra.mxu0 %v2088
        %v2203 = vpop.f32.mrf.mxu0
        %v2204 = vadd.f32 0.0, %v2203
        %2205 = vmatmul.f32.gmra.mxu0 %v2091
        %v2206 = vpop.f32.mrf.mxu0
        %v2207 = vadd.f32 0.0, %v2206
        %2208 = vmatmul.f32.gmra.mxu0 %v2094
        %v2209 = vpop.f32.mrf.mxu0
        %v2210 = vadd.f32 0.0, %v2209
        %2211 = vmatmul.f32.gmra.mxu0 %v2097
        %v2212 = vpop.f32.mrf.mxu0
        %v2213 = vadd.f32 0.0, %v2212
        %2214 = vmatmul.f32.gmra.mxu0 %v2100
        %v2215 = vpop.f32.mrf.mxu0
        %v2216 = vadd.f32 0.0, %v2215
        %2217 = vmatmul.f32.gmra.mxu0 %v2103
        %v2218 = vpop.f32.mrf.mxu0
        %v2219 = vadd.f32 0.0, %v2218
        %2220 = vmatmul.f32.gmra.mxu0 %v2106
        %v2221 = vpop.f32.mrf.mxu0
        %v2222 = vadd.f32 0.0, %v2221
        %2223 = vmatmul.f32.gmra.mxu0 %v2109
        %v2224 = vpop.f32.mrf.mxu0
        %v2225 = vadd.f32 0.0, %v2224
        %2226 = vmatmul.f32.gmra.mxu0 %v2112
        %v2227 = vpop.f32.mrf.mxu0
        %v2228 = vadd.f32 0.0, %v2227
        %2229 = vmatmul.f32.gmra.mxu0 %v2115
        %v2230 = vpop.f32.mrf.mxu0
        %v2231 = vadd.f32 0.0, %v2230
        %2232 = vmatmul.f32.gmra.mxu0 %v2118
        %v2233 = vpop.f32.mrf.mxu0
        %v2234 = vadd.f32 0.0, %v2233
        %2235 = vmatmul.f32.gmra.mxu0 %v2121
        %v2236 = vpop.f32.mrf.mxu0
        %v2237 = vadd.f32 0.0, %v2236
        %2238 = vmatmul.f32.gmra.mxu0 %v2124
        %v2239 = vpop.f32.mrf.mxu0
        %v2240 = vadd.f32 0.0, %v2239
        %2241 = vmatmul.f32.gmra.mxu0 %v2127
        %v2242 = vpop.f32.mrf.mxu0
        %v2243 = vadd.f32 0.0, %v2242
        %2244 = vmatmul.f32.gmra.mxu0 %v2130
        %v2245 = vpop.f32.mrf.mxu0
        %v2246 = vadd.f32 0.0, %v2245
        %2247 = vmatmul.f32.gmra.mxu0 %v2133
        %v2248 = vpop.f32.mrf.mxu0
        %v2249 = vadd.f32 0.0, %v2248
        %2250 = vmatmul.f32.gmra.mxu0 %v2136
        %v2251 = vpop.f32.mrf.mxu0
        %v2252 = vadd.f32 0.0, %v2251
        %2253 = vmatmul.f32.gmra.mxu0 %v2139
        %v2254 = vpop.f32.mrf.mxu0
        %v2255 = vadd.f32 0.0, %v2254
        %2256 = vmatmul.f32.gmra.mxu0 %v2142
        %v2257 = vpop.f32.mrf.mxu0
        %v2258 = vadd.f32 0.0, %v2257
        %2259 = vmatmul.f32.gmra.mxu0 %v2145
        %v2260 = vpop.f32.mrf.mxu0
        %v2261 = vadd.f32 0.0, %v2260
        %2262 = vdwg.mxu0
        %v2263 = vadd.f32 %v1985, %v2168
        %v2264 = vadd.f32 %v1986, %v2171
        %v2265 = vadd.f32 %v1987, %v2174
        %v2266 = vadd.f32 %v1988, %v2177
        %v2267 = vadd.f32 %v1989, %v2180
        %v2268 = vadd.f32 %v1990, %v2183
        %v2269 = vadd.f32 %v1991, %v2186
        %v2270 = vadd.f32 %v1992, %v2189
        %v2271 = vadd.f32 %v1993, %v2192
        %v2272 = vadd.f32 %v1994, %v2195
        %v2273 = vadd.f32 %v1995, %v2198
        %v2274 = vadd.f32 %v1996, %v2201
        %v2275 = vadd.f32 %v1997, %v2204
        %v2276 = vadd.f32 %v1998, %v2207
        %v2277 = vadd.f32 %v1999, %v2210
        %v2278 = vadd.f32 %v2000, %v2213
        %v2279 = vadd.f32 %v2001, %v2216
        %v2280 = vadd.f32 %v2002, %v2219
        %v2281 = vadd.f32 %v2003, %v2222
        %v2282 = vadd.f32 %v2004, %v2225
        %v2283 = vadd.f32 %v2005, %v2228
        %v2284 = vadd.f32 %v2006, %v2231
        %v2285 = vadd.f32 %v2007, %v2234
        %v2286 = vadd.f32 %v2008, %v2237
        %v2287 = vadd.f32 %v2009, %v2240
        %v2288 = vadd.f32 %v2010, %v2243
        %v2289 = vadd.f32 %v2011, %v2246
        %v2290 = vadd.f32 %v2012, %v2249
        %v2291 = vadd.f32 %v2013, %v2252
        %v2292 = vadd.f32 %v2014, %v2255
        %v2293 = vadd.f32 %v2015, %v2258
        %v2294 = vadd.f32 %v2016, %v2261
        %s2295 = scalar_lea.vmem [#allocation2], 48
        %v2296 = vld [vmem:[%s2295] sm:$0xff]
        %v2297 = vld [vmem:[%s2295 + $0x8] sm:$0xff]
        %v2298 = vld [vmem:[%s2295 + $0x18] sm:$0xff]
        %v2299 = vld [vmem:[%s2295 + $0x20] sm:$0xff]
        %v2300 = vld [vmem:[%s2295 + $0x30] sm:$0xff]
        %v2301 = vld [vmem:[%s2295 + $0x38] sm:$0xff]
        %v2302 = vld [vmem:[%s2295 + $0x48] sm:$0xff]
        %v2303 = vld [vmem:[%s2295 + $0x50] sm:$0xff]
        %v2304 = vld [vmem:[%s2295 + $0x60] sm:$0xff]
        %v2305 = vld [vmem:[%s2295 + $0x68] sm:$0xff]
        %v2306 = vld [vmem:[%s2295 + $0x78] sm:$0xff]
        %v2307 = vld [vmem:[%s2295 + $0x80] sm:$0xff]
        %v2308 = vld [vmem:[%s2295 + $0x90] sm:$0xff]
        %v2309 = vld [vmem:[%s2295 + $0x98] sm:$0xff]
        %v2310 = vld [vmem:[%s2295 + $0xa8] sm:$0xff]
        %v2311 = vld [vmem:[%s2295 + $0xb0] sm:$0xff]
        %v2312 = vld [vmem:[%s2295 + $0xc0] sm:$0xff]
        %v2313 = vld [vmem:[%s2295 + $0xc8] sm:$0xff]
        %v2314 = vld [vmem:[%s2295 + $0xd8] sm:$0xff]
        %v2315 = vld [vmem:[%s2295 + $0xe0] sm:$0xff]
        %v2316 = vld [vmem:[%s2295 + $0xf0] sm:$0xff]
        %v2317 = vld [vmem:[%s2295 + $0xf8] sm:$0xff]
        %v2318 = vld [vmem:[%s2295 + $0x108] sm:$0xff]
        %v2319 = vld [vmem:[%s2295 + $0x110] sm:$0xff]
        %v2320 = vld [vmem:[%s2295 + $0x120] sm:$0xff]
        %v2321 = vld [vmem:[%s2295 + $0x128] sm:$0xff]
        %v2322 = vld [vmem:[%s2295 + $0x138] sm:$0xff]
        %v2323 = vld [vmem:[%s2295 + $0x140] sm:$0xff]
        %v2324 = vld [vmem:[%s2295 + $0x150] sm:$0xff]
        %v2325 = vld [vmem:[%s2295 + $0x158] sm:$0xff]
        %v2326 = vld [vmem:[%s2295 + $0x168] sm:$0xff]
        %v2327 = vld [vmem:[%s2295 + $0x170] sm:$0xff]
        %s2328 = scalar_lea.vmem %s3, 24
        %v2329 = vld [vmem:[%s2328] sm:$0xf]
        %v2331 = vsel %vm368, %v2296, 0
        %v2334 = vsel %vm368, %v2297, 0
        %v2337 = vsel %vm368, %v2298, 0
        %v2340 = vsel %vm368, %v2299, 0
        %v2343 = vsel %vm368, %v2300, 0
        %v2346 = vsel %vm368, %v2301, 0
        %v2349 = vsel %vm368, %v2302, 0
        %v2352 = vsel %vm368, %v2303, 0
        %v2355 = vsel %vm368, %v2304, 0
        %v2358 = vsel %vm368, %v2305, 0
        %v2361 = vsel %vm368, %v2306, 0
        %v2364 = vsel %vm368, %v2307, 0
        %v2367 = vsel %vm368, %v2308, 0
        %v2370 = vsel %vm368, %v2309, 0
        %v2373 = vsel %vm368, %v2310, 0
        %v2376 = vsel %vm368, %v2311, 0
        %v2379 = vsel %vm368, %v2312, 0
        %v2382 = vsel %vm368, %v2313, 0
        %v2385 = vsel %vm368, %v2314, 0
        %v2388 = vsel %vm368, %v2315, 0
        %v2391 = vsel %vm368, %v2316, 0
        %v2394 = vsel %vm368, %v2317, 0
        %v2397 = vsel %vm368, %v2318, 0
        %v2400 = vsel %vm368, %v2319, 0
        %v2403 = vsel %vm368, %v2320, 0
        %v2406 = vsel %vm368, %v2321, 0
        %v2409 = vsel %vm368, %v2322, 0
        %v2412 = vsel %vm368, %v2323, 0
        %v2415 = vsel %vm368, %v2324, 0
        %v2418 = vsel %vm368, %v2325, 0
        %v2421 = vsel %vm368, %v2326, 0
        %v2424 = vsel %vm368, %v2327, 0
        %v2427 = vsel %vm465, %v2329, 0
        %2429 = vmatpush.msra.mxu0 0.0
        %2430 = vmatpush.msra.mxu0 0.0
        %2431 = vmatpush.msra.mxu0 0.0
        %2432 = vmatpush.msra.mxu0 0.0
        %2433 = vmatpush.msra.mxu0 0.0
        %2434 = vmatpush.msra.mxu0 0.0
        %2435 = vmatpush.msra.mxu0 0.0
        %2436 = vmatpush.msra.mxu0 0.0
        %2437 = vmatpush.msra.mxu0 0.0
        %2438 = vmatpush.msra.mxu0 0.0
        %2439 = vmatpush.msra.mxu0 0.0
        %2440 = vmatpush.msra.mxu0 0.0
        %2441 = vmatpush.msra.mxu0 0.0
        %2442 = vmatpush.msra.mxu0 0.0
        %2443 = vmatpush.msra.mxu0 0.0
        %2444 = vmatpush.msra.mxu0 %v2427
        %2445 = vmatmul.f32.gmra.mxu0 %v2331
        %v2446 = vpop.f32.mrf.mxu0
        %v2447 = vadd.f32 0.0, %v2446
        %2448 = vmatmul.f32.gmra.mxu0 %v2334
        %v2449 = vpop.f32.mrf.mxu0
        %v2450 = vadd.f32 0.0, %v2449
        %2451 = vmatmul.f32.gmra.mxu0 %v2337
        %v2452 = vpop.f32.mrf.mxu0
        %v2453 = vadd.f32 0.0, %v2452
        %2454 = vmatmul.f32.gmra.mxu0 %v2340
        %v2455 = vpop.f32.mrf.mxu0
        %v2456 = vadd.f32 0.0, %v2455
        %2457 = vmatmul.f32.gmra.mxu0 %v2343
        %v2458 = vpop.f32.mrf.mxu0
        %v2459 = vadd.f32 0.0, %v2458
        %2460 = vmatmul.f32.gmra.mxu0 %v2346
        %v2461 = vpop.f32.mrf.mxu0
        %v2462 = vadd.f32 0.0, %v2461
        %2463 = vmatmul.f32.gmra.mxu0 %v2349
        %v2464 = vpop.f32.mrf.mxu0
        %v2465 = vadd.f32 0.0, %v2464
        %2466 = vmatmul.f32.gmra.mxu0 %v2352
        %v2467 = vpop.f32.mrf.mxu0
        %v2468 = vadd.f32 0.0, %v2467
        %2469 = vmatmul.f32.gmra.mxu0 %v2355
        %v2470 = vpop.f32.mrf.mxu0
        %v2471 = vadd.f32 0.0, %v2470
        %2472 = vmatmul.f32.gmra.mxu0 %v2358
        %v2473 = vpop.f32.mrf.mxu0
        %v2474 = vadd.f32 0.0, %v2473
        %2475 = vmatmul.f32.gmra.mxu0 %v2361
        %v2476 = vpop.f32.mrf.mxu0
        %v2477 = vadd.f32 0.0, %v2476
        %2478 = vmatmul.f32.gmra.mxu0 %v2364
        %v2479 = vpop.f32.mrf.mxu0
        %v2480 = vadd.f32 0.0, %v2479
        %2481 = vmatmul.f32.gmra.mxu0 %v2367
        %v2482 = vpop.f32.mrf.mxu0
        %v2483 = vadd.f32 0.0, %v2482
        %2484 = vmatmul.f32.gmra.mxu0 %v2370
        %v2485 = vpop.f32.mrf.mxu0
        %v2486 = vadd.f32 0.0, %v2485
        %2487 = vmatmul.f32.gmra.mxu0 %v2373
        %v2488 = vpop.f32.mrf.mxu0
        %v2489 = vadd.f32 0.0, %v2488
        %2490 = vmatmul.f32.gmra.mxu0 %v2376
        %v2491 = vpop.f32.mrf.mxu0
        %v2492 = vadd.f32 0.0, %v2491
        %2493 = vmatmul.f32.gmra.mxu0 %v2379
        %v2494 = vpop.f32.mrf.mxu0
        %v2495 = vadd.f32 0.0, %v2494
        %2496 = vmatmul.f32.gmra.mxu0 %v2382
        %v2497 = vpop.f32.mrf.mxu0
        %v2498 = vadd.f32 0.0, %v2497
        %2499 = vmatmul.f32.gmra.mxu0 %v2385
        %v2500 = vpop.f32.mrf.mxu0
        %v2501 = vadd.f32 0.0, %v2500
        %2502 = vmatmul.f32.gmra.mxu0 %v2388
        %v2503 = vpop.f32.mrf.mxu0
        %v2504 = vadd.f32 0.0, %v2503
        %2505 = vmatmul.f32.gmra.mxu0 %v2391
        %v2506 = vpop.f32.mrf.mxu0
        %v2507 = vadd.f32 0.0, %v2506
        %2508 = vmatmul.f32.gmra.mxu0 %v2394
        %v2509 = vpop.f32.mrf.mxu0
        %v2510 = vadd.f32 0.0, %v2509
        %2511 = vmatmul.f32.gmra.mxu0 %v2397
        %v2512 = vpop.f32.mrf.mxu0
        %v2513 = vadd.f32 0.0, %v2512
        %2514 = vmatmul.f32.gmra.mxu0 %v2400
        %v2515 = vpop.f32.mrf.mxu0
        %v2516 = vadd.f32 0.0, %v2515
        %2517 = vmatmul.f32.gmra.mxu0 %v2403
        %v2518 = vpop.f32.mrf.mxu0
        %v2519 = vadd.f32 0.0, %v2518
        %2520 = vmatmul.f32.gmra.mxu0 %v2406
        %v2521 = vpop.f32.mrf.mxu0
        %v2522 = vadd.f32 0.0, %v2521
        %2523 = vmatmul.f32.gmra.mxu0 %v2409
        %v2524 = vpop.f32.mrf.mxu0
        %v2525 = vadd.f32 0.0, %v2524
        %2526 = vmatmul.f32.gmra.mxu0 %v2412
        %v2527 = vpop.f32.mrf.mxu0
        %v2528 = vadd.f32 0.0, %v2527
        %2529 = vmatmul.f32.gmra.mxu0 %v2415
        %v2530 = vpop.f32.mrf.mxu0
        %v2531 = vadd.f32 0.0, %v2530
        %2532 = vmatmul.f32.gmra.mxu0 %v2418
        %v2533 = vpop.f32.mrf.mxu0
        %v2534 = vadd.f32 0.0, %v2533
        %2535 = vmatmul.f32.gmra.mxu0 %v2421
        %v2536 = vpop.f32.mrf.mxu0
        %v2537 = vadd.f32 0.0, %v2536
        %2538 = vmatmul.f32.gmra.mxu0 %v2424
        %v2539 = vpop.f32.mrf.mxu0
        %v2540 = vadd.f32 0.0, %v2539
        %2541 = vdwg.mxu0
        %v2542 = vadd.f32 %v2263, %v2447
        %v2543 = vadd.f32 %v2264, %v2450
        %v2544 = vadd.f32 %v2265, %v2453
        %v2545 = vadd.f32 %v2266, %v2456
        %v2546 = vadd.f32 %v2267, %v2459
        %v2547 = vadd.f32 %v2268, %v2462
        %v2548 = vadd.f32 %v2269, %v2465
        %v2549 = vadd.f32 %v2270, %v2468
        %v2550 = vadd.f32 %v2271, %v2471
        %v2551 = vadd.f32 %v2272, %v2474
        %v2552 = vadd.f32 %v2273, %v2477
        %v2553 = vadd.f32 %v2274, %v2480
        %v2554 = vadd.f32 %v2275, %v2483
        %v2555 = vadd.f32 %v2276, %v2486
        %v2556 = vadd.f32 %v2277, %v2489
        %v2557 = vadd.f32 %v2278, %v2492
        %v2558 = vadd.f32 %v2279, %v2495
        %v2559 = vadd.f32 %v2280, %v2498
        %v2560 = vadd.f32 %v2281, %v2501
        %v2561 = vadd.f32 %v2282, %v2504
        %v2562 = vadd.f32 %v2283, %v2507
        %v2563 = vadd.f32 %v2284, %v2510
        %v2564 = vadd.f32 %v2285, %v2513
        %v2565 = vadd.f32 %v2286, %v2516
        %v2566 = vadd.f32 %v2287, %v2519
        %v2567 = vadd.f32 %v2288, %v2522
        %v2568 = vadd.f32 %v2289, %v2525
        %v2569 = vadd.f32 %v2290, %v2528
        %v2570 = vadd.f32 %v2291, %v2531
        %v2571 = vadd.f32 %v2292, %v2534
        %v2572 = vadd.f32 %v2293, %v2537
        %v2573 = vadd.f32 %v2294, %v2540
        %v2574 = vld [vmem:[%s2295 + $0x1] sm:$0xff]
        %v2575 = vld [vmem:[%s2295 + $0x9] sm:$0xff]
        %v2576 = vld [vmem:[%s2295 + $0x19] sm:$0xff]
        %v2577 = vld [vmem:[%s2295 + $0x21] sm:$0xff]
        %v2578 = vld [vmem:[%s2295 + $0x31] sm:$0xff]
        %v2579 = vld [vmem:[%s2295 + $0x39] sm:$0xff]
        %v2580 = vld [vmem:[%s2295 + $0x49] sm:$0xff]
        %v2581 = vld [vmem:[%s2295 + $0x51] sm:$0xff]
        %v2582 = vld [vmem:[%s2295 + $0x61] sm:$0xff]
        %v2583 = vld [vmem:[%s2295 + $0x69] sm:$0xff]
        %v2584 = vld [vmem:[%s2295 + $0x79] sm:$0xff]
        %v2585 = vld [vmem:[%s2295 + $0x81] sm:$0xff]
        %v2586 = vld [vmem:[%s2295 + $0x91] sm:$0xff]
        %v2587 = vld [vmem:[%s2295 + $0x99] sm:$0xff]
        %v2588 = vld [vmem:[%s2295 + $0xa9] sm:$0xff]
        %v2589 = vld [vmem:[%s2295 + $0xb1] sm:$0xff]
        %v2590 = vld [vmem:[%s2295 + $0xc1] sm:$0xff]
        %v2591 = vld [vmem:[%s2295 + $0xc9] sm:$0xff]
        %v2592 = vld [vmem:[%s2295 + $0xd9] sm:$0xff]
        %v2593 = vld [vmem:[%s2295 + $0xe1] sm:$0xff]
        %v2594 = vld [vmem:[%s2295 + $0xf1] sm:$0xff]
        %v2595 = vld [vmem:[%s2295 + $0xf9] sm:$0xff]
        %v2596 = vld [vmem:[%s2295 + $0x109] sm:$0xff]
        %v2597 = vld [vmem:[%s2295 + $0x111] sm:$0xff]
        %v2598 = vld [vmem:[%s2295 + $0x121] sm:$0xff]
        %v2599 = vld [vmem:[%s2295 + $0x129] sm:$0xff]
        %v2600 = vld [vmem:[%s2295 + $0x139] sm:$0xff]
        %v2601 = vld [vmem:[%s2295 + $0x141] sm:$0xff]
        %v2602 = vld [vmem:[%s2295 + $0x151] sm:$0xff]
        %v2603 = vld [vmem:[%s2295 + $0x159] sm:$0xff]
        %v2604 = vld [vmem:[%s2295 + $0x169] sm:$0xff]
        %v2605 = vld [vmem:[%s2295 + $0x171] sm:$0xff]
        %s2606 = scalar_lea.vmem %s3, 28
        %v2607 = vld [vmem:[%s2606] sm:$0xf]
        %v2609 = vsel %vm368, %v2574, 0
        %v2612 = vsel %vm368, %v2575, 0
        %v2615 = vsel %vm368, %v2576, 0
        %v2618 = vsel %vm368, %v2577, 0
        %v2621 = vsel %vm368, %v2578, 0
        %v2624 = vsel %vm368, %v2579, 0
        %v2627 = vsel %vm368, %v2580, 0
        %v2630 = vsel %vm368, %v2581, 0
        %v2633 = vsel %vm368, %v2582, 0
        %v2636 = vsel %vm368, %v2583, 0
        %v2639 = vsel %vm368, %v2584, 0
        %v2642 = vsel %vm368, %v2585, 0
        %v2645 = vsel %vm368, %v2586, 0
        %v2648 = vsel %vm368, %v2587, 0
        %v2651 = vsel %vm368, %v2588, 0
        %v2654 = vsel %vm368, %v2589, 0
        %v2657 = vsel %vm368, %v2590, 0
        %v2660 = vsel %vm368, %v2591, 0
        %v2663 = vsel %vm368, %v2592, 0
        %v2666 = vsel %vm368, %v2593, 0
        %v2669 = vsel %vm368, %v2594, 0
        %v2672 = vsel %vm368, %v2595, 0
        %v2675 = vsel %vm368, %v2596, 0
        %v2678 = vsel %vm368, %v2597, 0
        %v2681 = vsel %vm368, %v2598, 0
        %v2684 = vsel %vm368, %v2599, 0
        %v2687 = vsel %vm368, %v2600, 0
        %v2690 = vsel %vm368, %v2601, 0
        %v2693 = vsel %vm368, %v2602, 0
        %v2696 = vsel %vm368, %v2603, 0
        %v2699 = vsel %vm368, %v2604, 0
        %v2702 = vsel %vm368, %v2605, 0
        %v2705 = vsel %vm465, %v2607, 0
        %2707 = vmatpush.msra.mxu0 0.0
        %2708 = vmatpush.msra.mxu0 0.0
        %2709 = vmatpush.msra.mxu0 0.0
        %2710 = vmatpush.msra.mxu0 0.0
        %2711 = vmatpush.msra.mxu0 0.0
        %2712 = vmatpush.msra.mxu0 0.0
        %2713 = vmatpush.msra.mxu0 0.0
        %2714 = vmatpush.msra.mxu0 0.0
        %2715 = vmatpush.msra.mxu0 0.0
        %2716 = vmatpush.msra.mxu0 0.0
        %2717 = vmatpush.msra.mxu0 0.0
        %2718 = vmatpush.msra.mxu0 0.0
        %2719 = vmatpush.msra.mxu0 0.0
        %2720 = vmatpush.msra.mxu0 0.0
        %2721 = vmatpush.msra.mxu0 0.0
        %2722 = vmatpush.msra.mxu0 %v2705
        %2723 = vmatmul.f32.gmra.mxu0 %v2609
        %v2724 = vpop.f32.mrf.mxu0
        %v2725 = vadd.f32 0.0, %v2724
        %2726 = vmatmul.f32.gmra.mxu0 %v2612
        %v2727 = vpop.f32.mrf.mxu0
        %v2728 = vadd.f32 0.0, %v2727
        %2729 = vmatmul.f32.gmra.mxu0 %v2615
        %v2730 = vpop.f32.mrf.mxu0
        %v2731 = vadd.f32 0.0, %v2730
        %2732 = vmatmul.f32.gmra.mxu0 %v2618
        %v2733 = vpop.f32.mrf.mxu0
        %v2734 = vadd.f32 0.0, %v2733
        %2735 = vmatmul.f32.gmra.mxu0 %v2621
        %v2736 = vpop.f32.mrf.mxu0
        %v2737 = vadd.f32 0.0, %v2736
        %2738 = vmatmul.f32.gmra.mxu0 %v2624
        %v2739 = vpop.f32.mrf.mxu0
        %v2740 = vadd.f32 0.0, %v2739
        %2741 = vmatmul.f32.gmra.mxu0 %v2627
        %v2742 = vpop.f32.mrf.mxu0
        %v2743 = vadd.f32 0.0, %v2742
        %2744 = vmatmul.f32.gmra.mxu0 %v2630
        %v2745 = vpop.f32.mrf.mxu0
        %v2746 = vadd.f32 0.0, %v2745
        %2747 = vmatmul.f32.gmra.mxu0 %v2633
        %v2748 = vpop.f32.mrf.mxu0
        %v2749 = vadd.f32 0.0, %v2748
        %2750 = vmatmul.f32.gmra.mxu0 %v2636
        %v2751 = vpop.f32.mrf.mxu0
        %v2752 = vadd.f32 0.0, %v2751
        %2753 = vmatmul.f32.gmra.mxu0 %v2639
        %v2754 = vpop.f32.mrf.mxu0
        %v2755 = vadd.f32 0.0, %v2754
        %2756 = vmatmul.f32.gmra.mxu0 %v2642
        %v2757 = vpop.f32.mrf.mxu0
        %v2758 = vadd.f32 0.0, %v2757
        %2759 = vmatmul.f32.gmra.mxu0 %v2645
        %v2760 = vpop.f32.mrf.mxu0
        %v2761 = vadd.f32 0.0, %v2760
        %2762 = vmatmul.f32.gmra.mxu0 %v2648
        %v2763 = vpop.f32.mrf.mxu0
        %v2764 = vadd.f32 0.0, %v2763
        %2765 = vmatmul.f32.gmra.mxu0 %v2651
        %v2766 = vpop.f32.mrf.mxu0
        %v2767 = vadd.f32 0.0, %v2766
        %2768 = vmatmul.f32.gmra.mxu0 %v2654
        %v2769 = vpop.f32.mrf.mxu0
        %v2770 = vadd.f32 0.0, %v2769
        %2771 = vmatmul.f32.gmra.mxu0 %v2657
        %v2772 = vpop.f32.mrf.mxu0
        %v2773 = vadd.f32 0.0, %v2772
        %2774 = vmatmul.f32.gmra.mxu0 %v2660
        %v2775 = vpop.f32.mrf.mxu0
        %v2776 = vadd.f32 0.0, %v2775
        %2777 = vmatmul.f32.gmra.mxu0 %v2663
        %v2778 = vpop.f32.mrf.mxu0
        %v2779 = vadd.f32 0.0, %v2778
        %2780 = vmatmul.f32.gmra.mxu0 %v2666
        %v2781 = vpop.f32.mrf.mxu0
        %v2782 = vadd.f32 0.0, %v2781
        %2783 = vmatmul.f32.gmra.mxu0 %v2669
        %v2784 = vpop.f32.mrf.mxu0
        %v2785 = vadd.f32 0.0, %v2784
        %2786 = vmatmul.f32.gmra.mxu0 %v2672
        %v2787 = vpop.f32.mrf.mxu0
        %v2788 = vadd.f32 0.0, %v2787
        %2789 = vmatmul.f32.gmra.mxu0 %v2675
        %v2790 = vpop.f32.mrf.mxu0
        %v2791 = vadd.f32 0.0, %v2790
        %2792 = vmatmul.f32.gmra.mxu0 %v2678
        %v2793 = vpop.f32.mrf.mxu0
        %v2794 = vadd.f32 0.0, %v2793
        %2795 = vmatmul.f32.gmra.mxu0 %v2681
        %v2796 = vpop.f32.mrf.mxu0
        %v2797 = vadd.f32 0.0, %v2796
        %2798 = vmatmul.f32.gmra.mxu0 %v2684
        %v2799 = vpop.f32.mrf.mxu0
        %v2800 = vadd.f32 0.0, %v2799
        %2801 = vmatmul.f32.gmra.mxu0 %v2687
        %v2802 = vpop.f32.mrf.mxu0
        %v2803 = vadd.f32 0.0, %v2802
        %2804 = vmatmul.f32.gmra.mxu0 %v2690
        %v2805 = vpop.f32.mrf.mxu0
        %v2806 = vadd.f32 0.0, %v2805
        %2807 = vmatmul.f32.gmra.mxu0 %v2693
        %v2808 = vpop.f32.mrf.mxu0
        %v2809 = vadd.f32 0.0, %v2808
        %2810 = vmatmul.f32.gmra.mxu0 %v2696
        %v2811 = vpop.f32.mrf.mxu0
        %v2812 = vadd.f32 0.0, %v2811
        %2813 = vmatmul.f32.gmra.mxu0 %v2699
        %v2814 = vpop.f32.mrf.mxu0
        %v2815 = vadd.f32 0.0, %v2814
        %2816 = vmatmul.f32.gmra.mxu0 %v2702
        %v2817 = vpop.f32.mrf.mxu0
        %v2818 = vadd.f32 0.0, %v2817
        %2819 = vdwg.mxu0
        %v2820 = vadd.f32 %v2542, %v2725
        %v2821 = vadd.f32 %v2543, %v2728
        %v2822 = vadd.f32 %v2544, %v2731
        %v2823 = vadd.f32 %v2545, %v2734
        %v2824 = vadd.f32 %v2546, %v2737
        %v2825 = vadd.f32 %v2547, %v2740
        %v2826 = vadd.f32 %v2548, %v2743
        %v2827 = vadd.f32 %v2549, %v2746
        %v2828 = vadd.f32 %v2550, %v2749
        %v2829 = vadd.f32 %v2551, %v2752
        %v2830 = vadd.f32 %v2552, %v2755
        %v2831 = vadd.f32 %v2553, %v2758
        %v2832 = vadd.f32 %v2554, %v2761
        %v2833 = vadd.f32 %v2555, %v2764
        %v2834 = vadd.f32 %v2556, %v2767
        %v2835 = vadd.f32 %v2557, %v2770
        %v2836 = vadd.f32 %v2558, %v2773
        %v2837 = vadd.f32 %v2559, %v2776
        %v2838 = vadd.f32 %v2560, %v2779
        %v2839 = vadd.f32 %v2561, %v2782
        %v2840 = vadd.f32 %v2562, %v2785
        %v2841 = vadd.f32 %v2563, %v2788
        %v2842 = vadd.f32 %v2564, %v2791
        %v2843 = vadd.f32 %v2565, %v2794
        %v2844 = vadd.f32 %v2566, %v2797
        %v2845 = vadd.f32 %v2567, %v2800
        %v2846 = vadd.f32 %v2568, %v2803
        %v2847 = vadd.f32 %v2569, %v2806
        %v2848 = vadd.f32 %v2570, %v2809
        %v2849 = vadd.f32 %v2571, %v2812
        %v2850 = vadd.f32 %v2572, %v2815
        %v2851 = vadd.f32 %v2573, %v2818
        %v2852 = vld [vmem:[%s2295 + $0x2] sm:$0xff]
        %v2853 = vld [vmem:[%s2295 + $0xa] sm:$0xff]
        %v2854 = vld [vmem:[%s2295 + $0x1a] sm:$0xff]
        %v2855 = vld [vmem:[%s2295 + $0x22] sm:$0xff]
        %v2856 = vld [vmem:[%s2295 + $0x32] sm:$0xff]
        %v2857 = vld [vmem:[%s2295 + $0x3a] sm:$0xff]
        %v2858 = vld [vmem:[%s2295 + $0x4a] sm:$0xff]
        %v2859 = vld [vmem:[%s2295 + $0x52] sm:$0xff]
        %v2860 = vld [vmem:[%s2295 + $0x62] sm:$0xff]
        %v2861 = vld [vmem:[%s2295 + $0x6a] sm:$0xff]
        %v2862 = vld [vmem:[%s2295 + $0x7a] sm:$0xff]
        %v2863 = vld [vmem:[%s2295 + $0x82] sm:$0xff]
        %v2864 = vld [vmem:[%s2295 + $0x92] sm:$0xff]
        %v2865 = vld [vmem:[%s2295 + $0x9a] sm:$0xff]
        %v2866 = vld [vmem:[%s2295 + $0xaa] sm:$0xff]
        %v2867 = vld [vmem:[%s2295 + $0xb2] sm:$0xff]
        %v2868 = vld [vmem:[%s2295 + $0xc2] sm:$0xff]
        %v2869 = vld [vmem:[%s2295 + $0xca] sm:$0xff]
        %v2870 = vld [vmem:[%s2295 + $0xda] sm:$0xff]
        %v2871 = vld [vmem:[%s2295 + $0xe2] sm:$0xff]
        %v2872 = vld [vmem:[%s2295 + $0xf2] sm:$0xff]
        %v2873 = vld [vmem:[%s2295 + $0xfa] sm:$0xff]
        %v2874 = vld [vmem:[%s2295 + $0x10a] sm:$0xff]
        %v2875 = vld [vmem:[%s2295 + $0x112] sm:$0xff]
        %v2876 = vld [vmem:[%s2295 + $0x122] sm:$0xff]
        %v2877 = vld [vmem:[%s2295 + $0x12a] sm:$0xff]
        %v2878 = vld [vmem:[%s2295 + $0x13a] sm:$0xff]
        %v2879 = vld [vmem:[%s2295 + $0x142] sm:$0xff]
        %v2880 = vld [vmem:[%s2295 + $0x152] sm:$0xff]
        %v2881 = vld [vmem:[%s2295 + $0x15a] sm:$0xff]
        %v2882 = vld [vmem:[%s2295 + $0x16a] sm:$0xff]
        %v2883 = vld [vmem:[%s2295 + $0x172] sm:$0xff]
        %s2884 = scalar_lea.vmem %s3, 32
        %v2885 = vld [vmem:[%s2884] sm:$0xf]
        %v2887 = vsel %vm368, %v2852, 0
        %v2890 = vsel %vm368, %v2853, 0
        %v2893 = vsel %vm368, %v2854, 0
        %v2896 = vsel %vm368, %v2855, 0
        %v2899 = vsel %vm368, %v2856, 0
        %v2902 = vsel %vm368, %v2857, 0
        %v2905 = vsel %vm368, %v2858, 0
        %v2908 = vsel %vm368, %v2859, 0
        %v2911 = vsel %vm368, %v2860, 0
        %v2914 = vsel %vm368, %v2861, 0
        %v2917 = vsel %vm368, %v2862, 0
        %v2920 = vsel %vm368, %v2863, 0
        %v2923 = vsel %vm368, %v2864, 0
        %v2926 = vsel %vm368, %v2865, 0
        %v2929 = vsel %vm368, %v2866, 0
        %v2932 = vsel %vm368, %v2867, 0
        %v2935 = vsel %vm368, %v2868, 0
        %v2938 = vsel %vm368, %v2869, 0
        %v2941 = vsel %vm368, %v2870, 0
        %v2944 = vsel %vm368, %v2871, 0
        %v2947 = vsel %vm368, %v2872, 0
        %v2950 = vsel %vm368, %v2873, 0
        %v2953 = vsel %vm368, %v2874, 0
        %v2956 = vsel %vm368, %v2875, 0
        %v2959 = vsel %vm368, %v2876, 0
        %v2962 = vsel %vm368, %v2877, 0
        %v2965 = vsel %vm368, %v2878, 0
        %v2968 = vsel %vm368, %v2879, 0
        %v2971 = vsel %vm368, %v2880, 0
        %v2974 = vsel %vm368, %v2881, 0
        %v2977 = vsel %vm368, %v2882, 0
        %v2980 = vsel %vm368, %v2883, 0
        %v2983 = vsel %vm465, %v2885, 0
        %2985 = vmatpush.msra.mxu0 0.0
        %2986 = vmatpush.msra.mxu0 0.0
        %2987 = vmatpush.msra.mxu0 0.0
        %2988 = vmatpush.msra.mxu0 0.0
        %2989 = vmatpush.msra.mxu0 0.0
        %2990 = vmatpush.msra.mxu0 0.0
        %2991 = vmatpush.msra.mxu0 0.0
        %2992 = vmatpush.msra.mxu0 0.0
        %2993 = vmatpush.msra.mxu0 0.0
        %2994 = vmatpush.msra.mxu0 0.0
        %2995 = vmatpush.msra.mxu0 0.0
        %2996 = vmatpush.msra.mxu0 0.0
        %2997 = vmatpush.msra.mxu0 0.0
        %2998 = vmatpush.msra.mxu0 0.0
        %2999 = vmatpush.msra.mxu0 0.0
        %3000 = vmatpush.msra.mxu0 %v2983
        %3001 = vmatmul.f32.gmra.mxu0 %v2887
        %v3002 = vpop.f32.mrf.mxu0
        %v3003 = vadd.f32 0.0, %v3002
        %3004 = vmatmul.f32.gmra.mxu0 %v2890
        %v3005 = vpop.f32.mrf.mxu0
        %v3006 = vadd.f32 0.0, %v3005
        %3007 = vmatmul.f32.gmra.mxu0 %v2893
        %v3008 = vpop.f32.mrf.mxu0
        %v3009 = vadd.f32 0.0, %v3008
        %3010 = vmatmul.f32.gmra.mxu0 %v2896
        %v3011 = vpop.f32.mrf.mxu0
        %v3012 = vadd.f32 0.0, %v3011
        %3013 = vmatmul.f32.gmra.mxu0 %v2899
        %v3014 = vpop.f32.mrf.mxu0
        %v3015 = vadd.f32 0.0, %v3014
        %3016 = vmatmul.f32.gmra.mxu0 %v2902
        %v3017 = vpop.f32.mrf.mxu0
        %v3018 = vadd.f32 0.0, %v3017
        %3019 = vmatmul.f32.gmra.mxu0 %v2905
        %v3020 = vpop.f32.mrf.mxu0
        %v3021 = vadd.f32 0.0, %v3020
        %3022 = vmatmul.f32.gmra.mxu0 %v2908
        %v3023 = vpop.f32.mrf.mxu0
        %v3024 = vadd.f32 0.0, %v3023
        %3025 = vmatmul.f32.gmra.mxu0 %v2911
        %v3026 = vpop.f32.mrf.mxu0
        %v3027 = vadd.f32 0.0, %v3026
        %3028 = vmatmul.f32.gmra.mxu0 %v2914
        %v3029 = vpop.f32.mrf.mxu0
        %v3030 = vadd.f32 0.0, %v3029
        %3031 = vmatmul.f32.gmra.mxu0 %v2917
        %v3032 = vpop.f32.mrf.mxu0
        %v3033 = vadd.f32 0.0, %v3032
        %3034 = vmatmul.f32.gmra.mxu0 %v2920
        %v3035 = vpop.f32.mrf.mxu0
        %v3036 = vadd.f32 0.0, %v3035
        %3037 = vmatmul.f32.gmra.mxu0 %v2923
        %v3038 = vpop.f32.mrf.mxu0
        %v3039 = vadd.f32 0.0, %v3038
        %3040 = vmatmul.f32.gmra.mxu0 %v2926
        %v3041 = vpop.f32.mrf.mxu0
        %v3042 = vadd.f32 0.0, %v3041
        %3043 = vmatmul.f32.gmra.mxu0 %v2929
        %v3044 = vpop.f32.mrf.mxu0
        %v3045 = vadd.f32 0.0, %v3044
        %3046 = vmatmul.f32.gmra.mxu0 %v2932
        %v3047 = vpop.f32.mrf.mxu0
        %v3048 = vadd.f32 0.0, %v3047
        %3049 = vmatmul.f32.gmra.mxu0 %v2935
        %v3050 = vpop.f32.mrf.mxu0
        %v3051 = vadd.f32 0.0, %v3050
        %3052 = vmatmul.f32.gmra.mxu0 %v2938
        %v3053 = vpop.f32.mrf.mxu0
        %v3054 = vadd.f32 0.0, %v3053
        %3055 = vmatmul.f32.gmra.mxu0 %v2941
        %v3056 = vpop.f32.mrf.mxu0
        %v3057 = vadd.f32 0.0, %v3056
        %3058 = vmatmul.f32.gmra.mxu0 %v2944
        %v3059 = vpop.f32.mrf.mxu0
        %v3060 = vadd.f32 0.0, %v3059
        %3061 = vmatmul.f32.gmra.mxu0 %v2947
        %v3062 = vpop.f32.mrf.mxu0
        %v3063 = vadd.f32 0.0, %v3062
        %3064 = vmatmul.f32.gmra.mxu0 %v2950
        %v3065 = vpop.f32.mrf.mxu0
        %v3066 = vadd.f32 0.0, %v3065
        %3067 = vmatmul.f32.gmra.mxu0 %v2953
        %v3068 = vpop.f32.mrf.mxu0
        %v3069 = vadd.f32 0.0, %v3068
        %3070 = vmatmul.f32.gmra.mxu0 %v2956
        %v3071 = vpop.f32.mrf.mxu0
        %v3072 = vadd.f32 0.0, %v3071
        %3073 = vmatmul.f32.gmra.mxu0 %v2959
        %v3074 = vpop.f32.mrf.mxu0
        %v3075 = vadd.f32 0.0, %v3074
        %3076 = vmatmul.f32.gmra.mxu0 %v2962
        %v3077 = vpop.f32.mrf.mxu0
        %v3078 = vadd.f32 0.0, %v3077
        %3079 = vmatmul.f32.gmra.mxu0 %v2965
        %v3080 = vpop.f32.mrf.mxu0
        %v3081 = vadd.f32 0.0, %v3080
        %3082 = vmatmul.f32.gmra.mxu0 %v2968
        %v3083 = vpop.f32.mrf.mxu0
        %v3084 = vadd.f32 0.0, %v3083
        %3085 = vmatmul.f32.gmra.mxu0 %v2971
        %v3086 = vpop.f32.mrf.mxu0
        %v3087 = vadd.f32 0.0, %v3086
        %3088 = vmatmul.f32.gmra.mxu0 %v2974
        %v3089 = vpop.f32.mrf.mxu0
        %v3090 = vadd.f32 0.0, %v3089
        %3091 = vmatmul.f32.gmra.mxu0 %v2977
        %v3092 = vpop.f32.mrf.mxu0
        %v3093 = vadd.f32 0.0, %v3092
        %3094 = vmatmul.f32.gmra.mxu0 %v2980
        %v3095 = vpop.f32.mrf.mxu0
        %v3096 = vadd.f32 0.0, %v3095
        %3097 = vdwg.mxu0
        %v3098 = vadd.f32 %v2820, %v3003
        %v3099 = vadd.f32 %v2821, %v3006
        %v3100 = vadd.f32 %v2822, %v3009
        %v3101 = vadd.f32 %v2823, %v3012
        %v3102 = vadd.f32 %v2824, %v3015
        %v3103 = vadd.f32 %v2825, %v3018
        %v3104 = vadd.f32 %v2826, %v3021
        %v3105 = vadd.f32 %v2827, %v3024
        %v3106 = vadd.f32 %v2828, %v3027
        %v3107 = vadd.f32 %v2829, %v3030
        %v3108 = vadd.f32 %v2830, %v3033
        %v3109 = vadd.f32 %v2831, %v3036
        %v3110 = vadd.f32 %v2832, %v3039
        %v3111 = vadd.f32 %v2833, %v3042
        %v3112 = vadd.f32 %v2834, %v3045
        %v3113 = vadd.f32 %v2835, %v3048
        %v3114 = vadd.f32 %v2836, %v3051
        %v3115 = vadd.f32 %v2837, %v3054
        %v3116 = vadd.f32 %v2838, %v3057
        %v3117 = vadd.f32 %v2839, %v3060
        %v3118 = vadd.f32 %v2840, %v3063
        %v3119 = vadd.f32 %v2841, %v3066
        %v3120 = vadd.f32 %v2842, %v3069
        %v3121 = vadd.f32 %v2843, %v3072
        %v3122 = vadd.f32 %v2844, %v3075
        %v3123 = vadd.f32 %v2845, %v3078
        %v3124 = vadd.f32 %v2846, %v3081
        %v3125 = vadd.f32 %v2847, %v3084
        %v3126 = vadd.f32 %v2848, %v3087
        %v3127 = vadd.f32 %v2849, %v3090
        %v3128 = vadd.f32 %v2850, %v3093
        %v3129 = vadd.f32 %v2851, %v3096
        %v3130 = vld [vmem:[%s4] sm:$0x1]
        %v3132 = vperm.slane %v3130, 0
        %v3134 = vadd.f32 %v3098, %v3132
        %v3135 = vadd.f32 %v3099, %v3132
        %v3136 = vadd.f32 %v3100, %v3132
        %v3137 = vadd.f32 %v3101, %v3132
        %v3138 = vadd.f32 %v3102, %v3132
        %v3139 = vadd.f32 %v3103, %v3132
        %v3140 = vadd.f32 %v3104, %v3132
        %v3141 = vadd.f32 %v3105, %v3132
        %v3142 = vadd.f32 %v3106, %v3132
        %v3143 = vadd.f32 %v3107, %v3132
        %v3144 = vadd.f32 %v3108, %v3132
        %v3145 = vadd.f32 %v3109, %v3132
        %v3146 = vadd.f32 %v3110, %v3132
        %v3147 = vadd.f32 %v3111, %v3132
        %v3148 = vadd.f32 %v3112, %v3132
        %v3149 = vadd.f32 %v3113, %v3132
        %v3150 = vadd.f32 %v3114, %v3132
        %v3151 = vadd.f32 %v3115, %v3132
        %v3152 = vadd.f32 %v3116, %v3132
        %v3153 = vadd.f32 %v3117, %v3132
        %v3154 = vadd.f32 %v3118, %v3132
        %v3155 = vadd.f32 %v3119, %v3132
        %v3156 = vadd.f32 %v3120, %v3132
        %v3157 = vadd.f32 %v3121, %v3132
        %v3158 = vadd.f32 %v3122, %v3132
        %v3159 = vadd.f32 %v3123, %v3132
        %v3160 = vadd.f32 %v3124, %v3132
        %v3161 = vadd.f32 %v3125, %v3132
        %v3162 = vadd.f32 %v3126, %v3132
        %v3163 = vadd.f32 %v3127, %v3132
        %v3164 = vadd.f32 %v3128, %v3132
        %v3165 = vadd.f32 %v3129, %v3132
        %v3166 = vmax.f32 %v3134, 0.0
        %v3167 = vmax.f32 %v3135, 0.0
        %v3168 = vmax.f32 %v3136, 0.0
        %v3169 = vmax.f32 %v3137, 0.0
        %v3170 = vmax.f32 %v3138, 0.0
        %v3171 = vmax.f32 %v3139, 0.0
        %v3172 = vmax.f32 %v3140, 0.0
        %v3173 = vmax.f32 %v3141, 0.0
        %v3174 = vmax.f32 %v3142, 0.0
        %v3175 = vmax.f32 %v3143, 0.0
        %v3176 = vmax.f32 %v3144, 0.0
        %v3177 = vmax.f32 %v3145, 0.0
        %v3178 = vmax.f32 %v3146, 0.0
        %v3179 = vmax.f32 %v3147, 0.0
        %v3180 = vmax.f32 %v3148, 0.0
        %v3181 = vmax.f32 %v3149, 0.0
        %v3182 = vmax.f32 %v3150, 0.0
        %v3183 = vmax.f32 %v3151, 0.0
        %v3184 = vmax.f32 %v3152, 0.0
        %v3185 = vmax.f32 %v3153, 0.0
        %v3186 = vmax.f32 %v3154, 0.0
        %v3187 = vmax.f32 %v3155, 0.0
        %v3188 = vmax.f32 %v3156, 0.0
        %v3189 = vmax.f32 %v3157, 0.0
        %v3190 = vmax.f32 %v3158, 0.0
        %v3191 = vmax.f32 %v3159, 0.0
        %v3192 = vmax.f32 %v3160, 0.0
        %v3193 = vmax.f32 %v3161, 0.0
        %v3194 = vmax.f32 %v3162, 0.0
        %v3195 = vmax.f32 %v3163, 0.0
        %v3196 = vmax.f32 %v3164, 0.0
        %v3197 = vmax.f32 %v3165, 0.0
        %v3198 = vld [vmem:[%s5] sm:$0xf]
        %v3199 = vld [vmem:[%s6] sm:$0x1]
        %v3201 = vperm.slane %v3199, 0
        %v3204 = vsel %vm368, %v3166, 0
        %v3207 = vsel %vm368, %v3167, 0
        %v3210 = vsel %vm368, %v3168, 0
        %v3213 = vsel %vm368, %v3169, 0
        %v3216 = vsel %vm368, %v3170, 0
        %v3219 = vsel %vm368, %v3171, 0
        %v3222 = vsel %vm368, %v3172, 0
        %v3225 = vsel %vm368, %v3173, 0
        %v3228 = vsel %vm368, %v3174, 0
        %v3231 = vsel %vm368, %v3175, 0
        %v3234 = vsel %vm368, %v3176, 0
        %v3237 = vsel %vm368, %v3177, 0
        %v3240 = vsel %vm368, %v3178, 0
        %v3243 = vsel %vm368, %v3179, 0
        %v3246 = vsel %vm368, %v3180, 0
        %v3249 = vsel %vm368, %v3181, 0
        %v3252 = vsel %vm368, %v3182, 0
        %v3255 = vsel %vm368, %v3183, 0
        %v3258 = vsel %vm368, %v3184, 0
        %v3261 = vsel %vm368, %v3185, 0
        %v3264 = vsel %vm368, %v3186, 0
        %v3267 = vsel %vm368, %v3187, 0
        %v3270 = vsel %vm368, %v3188, 0
        %v3273 = vsel %vm368, %v3189, 0
        %v3276 = vsel %vm368, %v3190, 0
        %v3279 = vsel %vm368, %v3191, 0
        %v3282 = vsel %vm368, %v3192, 0
        %v3285 = vsel %vm368, %v3193, 0
        %v3288 = vsel %vm368, %v3194, 0
        %v3291 = vsel %vm368, %v3195, 0
        %v3294 = vsel %vm368, %v3196, 0
        %v3297 = vsel %vm368, %v3197, 0
        %v3300 = vsel %vm465, %v3198, 0
        %3302 = vmatpush.msra.mxu0 0.0
        %3303 = vmatpush.msra.mxu0 0.0
        %3304 = vmatpush.msra.mxu0 0.0
        %3305 = vmatpush.msra.mxu0 0.0
        %3306 = vmatpush.msra.mxu0 0.0
        %3307 = vmatpush.msra.mxu0 0.0
        %3308 = vmatpush.msra.mxu0 0.0
        %3309 = vmatpush.msra.mxu0 0.0
        %3310 = vmatpush.msra.mxu0 0.0
        %3311 = vmatpush.msra.mxu0 0.0
        %3312 = vmatpush.msra.mxu0 0.0
        %3313 = vmatpush.msra.mxu0 0.0
        %3314 = vmatpush.msra.mxu0 0.0
        %3315 = vmatpush.msra.mxu0 0.0
        %3316 = vmatpush.msra.mxu0 0.0
        %3317 = vmatpush.msra.mxu0 %v3300
        %3318 = vmatmul.f32.gmra.mxu0 %v3204
        %v3319 = vpop.f32.mrf.mxu0
        %v3320 = vadd.f32 %v3201, %v3319
        %3321 = vmatmul.f32.gmra.mxu0 %v3207
        %v3322 = vpop.f32.mrf.mxu0
        %v3323 = vadd.f32 %v3201, %v3322
        %3324 = vmatmul.f32.gmra.mxu0 %v3210
        %v3325 = vpop.f32.mrf.mxu0
        %v3326 = vadd.f32 %v3201, %v3325
        %3327 = vmatmul.f32.gmra.mxu0 %v3213
        %v3328 = vpop.f32.mrf.mxu0
        %v3329 = vadd.f32 %v3201, %v3328
        %3330 = vmatmul.f32.gmra.mxu0 %v3216
        %v3331 = vpop.f32.mrf.mxu0
        %v3332 = vadd.f32 %v3201, %v3331
        %3333 = vmatmul.f32.gmra.mxu0 %v3219
        %v3334 = vpop.f32.mrf.mxu0
        %v3335 = vadd.f32 %v3201, %v3334
        %3336 = vmatmul.f32.gmra.mxu0 %v3222
        %v3337 = vpop.f32.mrf.mxu0
        %v3338 = vadd.f32 %v3201, %v3337
        %3339 = vmatmul.f32.gmra.mxu0 %v3225
        %v3340 = vpop.f32.mrf.mxu0
        %v3341 = vadd.f32 %v3201, %v3340
        %3342 = vmatmul.f32.gmra.mxu0 %v3228
        %v3343 = vpop.f32.mrf.mxu0
        %v3344 = vadd.f32 %v3201, %v3343
        %3345 = vmatmul.f32.gmra.mxu0 %v3231
        %v3346 = vpop.f32.mrf.mxu0
        %v3347 = vadd.f32 %v3201, %v3346
        %3348 = vmatmul.f32.gmra.mxu0 %v3234
        %v3349 = vpop.f32.mrf.mxu0
        %v3350 = vadd.f32 %v3201, %v3349
        %3351 = vmatmul.f32.gmra.mxu0 %v3237
        %v3352 = vpop.f32.mrf.mxu0
        %v3353 = vadd.f32 %v3201, %v3352
        %3354 = vmatmul.f32.gmra.mxu0 %v3240
        %v3355 = vpop.f32.mrf.mxu0
        %v3356 = vadd.f32 %v3201, %v3355
        %3357 = vmatmul.f32.gmra.mxu0 %v3243
        %v3358 = vpop.f32.mrf.mxu0
        %v3359 = vadd.f32 %v3201, %v3358
        %3360 = vmatmul.f32.gmra.mxu0 %v3246
        %v3361 = vpop.f32.mrf.mxu0
        %v3362 = vadd.f32 %v3201, %v3361
        %3363 = vmatmul.f32.gmra.mxu0 %v3249
        %v3364 = vpop.f32.mrf.mxu0
        %v3365 = vadd.f32 %v3201, %v3364
        %3366 = vmatmul.f32.gmra.mxu0 %v3252
        %v3367 = vpop.f32.mrf.mxu0
        %v3368 = vadd.f32 %v3201, %v3367
        %3369 = vmatmul.f32.gmra.mxu0 %v3255
        %v3370 = vpop.f32.mrf.mxu0
        %v3371 = vadd.f32 %v3201, %v3370
        %3372 = vmatmul.f32.gmra.mxu0 %v3258
        %v3373 = vpop.f32.mrf.mxu0
        %v3374 = vadd.f32 %v3201, %v3373
        %3375 = vmatmul.f32.gmra.mxu0 %v3261
        %v3376 = vpop.f32.mrf.mxu0
        %v3377 = vadd.f32 %v3201, %v3376
        %3378 = vmatmul.f32.gmra.mxu0 %v3264
        %v3379 = vpop.f32.mrf.mxu0
        %v3380 = vadd.f32 %v3201, %v3379
        %3381 = vmatmul.f32.gmra.mxu0 %v3267
        %v3382 = vpop.f32.mrf.mxu0
        %v3383 = vadd.f32 %v3201, %v3382
        %3384 = vmatmul.f32.gmra.mxu0 %v3270
        %v3385 = vpop.f32.mrf.mxu0
        %v3386 = vadd.f32 %v3201, %v3385
        %3387 = vmatmul.f32.gmra.mxu0 %v3273
        %v3388 = vpop.f32.mrf.mxu0
        %v3389 = vadd.f32 %v3201, %v3388
        %3390 = vmatmul.f32.gmra.mxu0 %v3276
        %v3391 = vpop.f32.mrf.mxu0
        %v3392 = vadd.f32 %v3201, %v3391
        %3393 = vmatmul.f32.gmra.mxu0 %v3279
        %v3394 = vpop.f32.mrf.mxu0
        %v3395 = vadd.f32 %v3201, %v3394
        %3396 = vmatmul.f32.gmra.mxu0 %v3282
        %v3397 = vpop.f32.mrf.mxu0
        %v3398 = vadd.f32 %v3201, %v3397
        %3399 = vmatmul.f32.gmra.mxu0 %v3285
        %v3400 = vpop.f32.mrf.mxu0
        %v3401 = vadd.f32 %v3201, %v3400
        %3402 = vmatmul.f32.gmra.mxu0 %v3288
        %v3403 = vpop.f32.mrf.mxu0
        %v3404 = vadd.f32 %v3201, %v3403
        %3405 = vmatmul.f32.gmra.mxu0 %v3291
        %v3406 = vpop.f32.mrf.mxu0
        %v3407 = vadd.f32 %v3201, %v3406
        %3408 = vmatmul.f32.gmra.mxu0 %v3294
        %v3409 = vpop.f32.mrf.mxu0
        %v3410 = vadd.f32 %v3201, %v3409
        %3411 = vmatmul.f32.gmra.mxu0 %v3297
        %v3412 = vpop.f32.mrf.mxu0
        %v3413 = vadd.f32 %v3201, %v3412
        %3414 = vdwg.mxu0
        %v3415 = vld [vmem:[%s7] sm:$0xf]
        %v3416 = vld [vmem:[%s8] sm:$0x1]
        %v3418 = vperm.slane %v3416, 0
        %v3421 = vsel %vm465, %v3415, 0
        %3423 = vmatpush.msra.mxu0 0.0
        %3424 = vmatpush.msra.mxu0 0.0
        %3425 = vmatpush.msra.mxu0 0.0
        %3426 = vmatpush.msra.mxu0 0.0
        %3427 = vmatpush.msra.mxu0 0.0
        %3428 = vmatpush.msra.mxu0 0.0
        %3429 = vmatpush.msra.mxu0 0.0
        %3430 = vmatpush.msra.mxu0 0.0
        %3431 = vmatpush.msra.mxu0 0.0
        %3432 = vmatpush.msra.mxu0 0.0
        %3433 = vmatpush.msra.mxu0 0.0
        %3434 = vmatpush.msra.mxu0 0.0
        %3435 = vmatpush.msra.mxu0 0.0
        %3436 = vmatpush.msra.mxu0 0.0
        %3437 = vmatpush.msra.mxu0 0.0
        %3438 = vmatpush.msra.mxu0 %v3421
        %3439 = vmatmul.f32.gmra.mxu0 %v370
        %v3440 = vpop.f32.mrf.mxu0
        %v3441 = vadd.f32 %v3418, %v3440
        %3442 = vmatmul.f32.gmra.mxu0 %v373
        %v3443 = vpop.f32.mrf.mxu0
        %v3444 = vadd.f32 %v3418, %v3443
        %3445 = vmatmul.f32.gmra.mxu0 %v376
        %v3446 = vpop.f32.mrf.mxu0
        %v3447 = vadd.f32 %v3418, %v3446
        %3448 = vmatmul.f32.gmra.mxu0 %v379
        %v3449 = vpop.f32.mrf.mxu0
        %v3450 = vadd.f32 %v3418, %v3449
        %3451 = vmatmul.f32.gmra.mxu0 %v382
        %v3452 = vpop.f32.mrf.mxu0
        %v3453 = vadd.f32 %v3418, %v3452
        %3454 = vmatmul.f32.gmra.mxu0 %v385
        %v3455 = vpop.f32.mrf.mxu0
        %v3456 = vadd.f32 %v3418, %v3455
        %3457 = vmatmul.f32.gmra.mxu0 %v388
        %v3458 = vpop.f32.mrf.mxu0
        %v3459 = vadd.f32 %v3418, %v3458
        %3460 = vmatmul.f32.gmra.mxu0 %v391
        %v3461 = vpop.f32.mrf.mxu0
        %v3462 = vadd.f32 %v3418, %v3461
        %3463 = vmatmul.f32.gmra.mxu0 %v394
        %v3464 = vpop.f32.mrf.mxu0
        %v3465 = vadd.f32 %v3418, %v3464
        %3466 = vmatmul.f32.gmra.mxu0 %v397
        %v3467 = vpop.f32.mrf.mxu0
        %v3468 = vadd.f32 %v3418, %v3467
        %3469 = vmatmul.f32.gmra.mxu0 %v400
        %v3470 = vpop.f32.mrf.mxu0
        %v3471 = vadd.f32 %v3418, %v3470
        %3472 = vmatmul.f32.gmra.mxu0 %v403
        %v3473 = vpop.f32.mrf.mxu0
        %v3474 = vadd.f32 %v3418, %v3473
        %3475 = vmatmul.f32.gmra.mxu0 %v406
        %v3476 = vpop.f32.mrf.mxu0
        %v3477 = vadd.f32 %v3418, %v3476
        %3478 = vmatmul.f32.gmra.mxu0 %v409
        %v3479 = vpop.f32.mrf.mxu0
        %v3480 = vadd.f32 %v3418, %v3479
        %3481 = vmatmul.f32.gmra.mxu0 %v412
        %v3482 = vpop.f32.mrf.mxu0
        %v3483 = vadd.f32 %v3418, %v3482
        %3484 = vmatmul.f32.gmra.mxu0 %v415
        %v3485 = vpop.f32.mrf.mxu0
        %v3486 = vadd.f32 %v3418, %v3485
        %3487 = vmatmul.f32.gmra.mxu0 %v418
        %v3488 = vpop.f32.mrf.mxu0
        %v3489 = vadd.f32 %v3418, %v3488
        %3490 = vmatmul.f32.gmra.mxu0 %v421
        %v3491 = vpop.f32.mrf.mxu0
        %v3492 = vadd.f32 %v3418, %v3491
        %3493 = vmatmul.f32.gmra.mxu0 %v424
        %v3494 = vpop.f32.mrf.mxu0
        %v3495 = vadd.f32 %v3418, %v3494
        %3496 = vmatmul.f32.gmra.mxu0 %v427
        %v3497 = vpop.f32.mrf.mxu0
        %v3498 = vadd.f32 %v3418, %v3497
        %3499 = vmatmul.f32.gmra.mxu0 %v430
        %v3500 = vpop.f32.mrf.mxu0
        %v3501 = vadd.f32 %v3418, %v3500
        %3502 = vmatmul.f32.gmra.mxu0 %v433
        %v3503 = vpop.f32.mrf.mxu0
        %v3504 = vadd.f32 %v3418, %v3503
        %3505 = vmatmul.f32.gmra.mxu0 %v436
        %v3506 = vpop.f32.mrf.mxu0
        %v3507 = vadd.f32 %v3418, %v3506
        %3508 = vmatmul.f32.gmra.mxu0 %v439
        %v3509 = vpop.f32.mrf.mxu0
        %v3510 = vadd.f32 %v3418, %v3509
        %3511 = vmatmul.f32.gmra.mxu0 %v442
        %v3512 = vpop.f32.mrf.mxu0
        %v3513 = vadd.f32 %v3418, %v3512
        %3514 = vmatmul.f32.gmra.mxu0 %v445
        %v3515 = vpop.f32.mrf.mxu0
        %v3516 = vadd.f32 %v3418, %v3515
        %3517 = vmatmul.f32.gmra.mxu0 %v448
        %v3518 = vpop.f32.mrf.mxu0
        %v3519 = vadd.f32 %v3418, %v3518
        %3520 = vmatmul.f32.gmra.mxu0 %v451
        %v3521 = vpop.f32.mrf.mxu0
        %v3522 = vadd.f32 %v3418, %v3521
        %3523 = vmatmul.f32.gmra.mxu0 %v454
        %v3524 = vpop.f32.mrf.mxu0
        %v3525 = vadd.f32 %v3418, %v3524
        %3526 = vmatmul.f32.gmra.mxu0 %v457
        %v3527 = vpop.f32.mrf.mxu0
        %v3528 = vadd.f32 %v3418, %v3527
        %3529 = vmatmul.f32.gmra.mxu0 %v460
        %v3530 = vpop.f32.mrf.mxu0
        %v3531 = vadd.f32 %v3418, %v3530
        %3532 = vmatmul.f32.gmra.mxu0 %v463
        %v3533 = vpop.f32.mrf.mxu0
        %v3534 = vadd.f32 %v3418, %v3533
        %3535 = vdwg.mxu0
        %v3536 = vadd.f32 %v3320, %v3441
        %v3537 = vadd.f32 %v3323, %v3444
        %v3538 = vadd.f32 %v3326, %v3447
        %v3539 = vadd.f32 %v3329, %v3450
        %v3540 = vadd.f32 %v3332, %v3453
        %v3541 = vadd.f32 %v3335, %v3456
        %v3542 = vadd.f32 %v3338, %v3459
        %v3543 = vadd.f32 %v3341, %v3462
        %v3544 = vadd.f32 %v3344, %v3465
        %v3545 = vadd.f32 %v3347, %v3468
        %v3546 = vadd.f32 %v3350, %v3471
        %v3547 = vadd.f32 %v3353, %v3474
        %v3548 = vadd.f32 %v3356, %v3477
        %v3549 = vadd.f32 %v3359, %v3480
        %v3550 = vadd.f32 %v3362, %v3483
        %v3551 = vadd.f32 %v3365, %v3486
        %v3552 = vadd.f32 %v3368, %v3489
        %v3553 = vadd.f32 %v3371, %v3492
        %v3554 = vadd.f32 %v3374, %v3495
        %v3555 = vadd.f32 %v3377, %v3498
        %v3556 = vadd.f32 %v3380, %v3501
        %v3557 = vadd.f32 %v3383, %v3504
        %v3558 = vadd.f32 %v3386, %v3507
        %v3559 = vadd.f32 %v3389, %v3510
        %v3560 = vadd.f32 %v3392, %v3513
        %v3561 = vadd.f32 %v3395, %v3516
        %v3562 = vadd.f32 %v3398, %v3519
        %v3563 = vadd.f32 %v3401, %v3522
        %v3564 = vadd.f32 %v3404, %v3525
        %v3565 = vadd.f32 %v3407, %v3528
        %v3566 = vadd.f32 %v3410, %v3531
        %v3567 = vadd.f32 %v3413, %v3534
        %v3568 = vmax.f32 %v3536, 0.0
        %v3569 = vmax.f32 %v3537, 0.0
        %v3570 = vmax.f32 %v3538, 0.0
        %v3571 = vmax.f32 %v3539, 0.0
        %v3572 = vmax.f32 %v3540, 0.0
        %v3573 = vmax.f32 %v3541, 0.0
        %v3574 = vmax.f32 %v3542, 0.0
        %v3575 = vmax.f32 %v3543, 0.0
        %v3576 = vmax.f32 %v3544, 0.0
        %v3577 = vmax.f32 %v3545, 0.0
        %v3578 = vmax.f32 %v3546, 0.0
        %v3579 = vmax.f32 %v3547, 0.0
        %v3580 = vmax.f32 %v3548, 0.0
        %v3581 = vmax.f32 %v3549, 0.0
        %v3582 = vmax.f32 %v3550, 0.0
        %v3583 = vmax.f32 %v3551, 0.0
        %v3584 = vmax.f32 %v3552, 0.0
        %v3585 = vmax.f32 %v3553, 0.0
        %v3586 = vmax.f32 %v3554, 0.0
        %v3587 = vmax.f32 %v3555, 0.0
        %v3588 = vmax.f32 %v3556, 0.0
        %v3589 = vmax.f32 %v3557, 0.0
        %v3590 = vmax.f32 %v3558, 0.0
        %v3591 = vmax.f32 %v3559, 0.0
        %v3592 = vmax.f32 %v3560, 0.0
        %v3593 = vmax.f32 %v3561, 0.0
        %v3594 = vmax.f32 %v3562, 0.0
        %v3595 = vmax.f32 %v3563, 0.0
        %v3596 = vmax.f32 %v3564, 0.0
        %v3597 = vmax.f32 %v3565, 0.0
        %v3598 = vmax.f32 %v3566, 0.0
        %v3599 = vmax.f32 %v3567, 0.0
        %vm3600 = vcmask 130048
        %3601 = vst.msk [vmem:[%s325] sm:$0xff] %vm3600, %v3568
        %3602 = vst.msk [vmem:[%s325 + $0x8] sm:$0xff] %vm3600, %v3569
        %3603 = vst.msk [vmem:[%s325 + $0x10] sm:$0xff] %vm3600, %v3570
        %3604 = vst.msk [vmem:[%s325 + $0x18] sm:$0xff] %vm3600, %v3571
        %3605 = vst.msk [vmem:[%s325 + $0x20] sm:$0xff] %vm3600, %v3572
        %3606 = vst.msk [vmem:[%s325 + $0x28] sm:$0xff] %vm3600, %v3573
        %3607 = vst.msk [vmem:[%s325 + $0x30] sm:$0xff] %vm3600, %v3574
        %3608 = vst.msk [vmem:[%s325 + $0x38] sm:$0xff] %vm3600, %v3575
        %3609 = vst.msk [vmem:[%s325 + $0x40] sm:$0xff] %vm3600, %v3576
        %3610 = vst.msk [vmem:[%s325 + $0x48] sm:$0xff] %vm3600, %v3577
        %3611 = vst.msk [vmem:[%s325 + $0x50] sm:$0xff] %vm3600, %v3578
        %3612 = vst.msk [vmem:[%s325 + $0x58] sm:$0xff] %vm3600, %v3579
        %3613 = vst.msk [vmem:[%s325 + $0x60] sm:$0xff] %vm3600, %v3580
        %3614 = vst.msk [vmem:[%s325 + $0x68] sm:$0xff] %vm3600, %v3581
        %3615 = vst.msk [vmem:[%s325 + $0x70] sm:$0xff] %vm3600, %v3582
        %3616 = vst.msk [vmem:[%s325 + $0x78] sm:$0xff] %vm3600, %v3583
        %3617 = vst.msk [vmem:[%s325 + $0x80] sm:$0xff] %vm3600, %v3584
        %3618 = vst.msk [vmem:[%s325 + $0x88] sm:$0xff] %vm3600, %v3585
        %3619 = vst.msk [vmem:[%s325 + $0x90] sm:$0xff] %vm3600, %v3586
        %3620 = vst.msk [vmem:[%s325 + $0x98] sm:$0xff] %vm3600, %v3587
        %3621 = vst.msk [vmem:[%s325 + $0xa0] sm:$0xff] %vm3600, %v3588
        %3622 = vst.msk [vmem:[%s325 + $0xa8] sm:$0xff] %vm3600, %v3589
        %3623 = vst.msk [vmem:[%s325 + $0xb0] sm:$0xff] %vm3600, %v3590
        %3624 = vst.msk [vmem:[%s325 + $0xb8] sm:$0xff] %vm3600, %v3591
        %3625 = vst.msk [vmem:[%s325 + $0xc0] sm:$0xff] %vm3600, %v3592
        %3626 = vst.msk [vmem:[%s325 + $0xc8] sm:$0xff] %vm3600, %v3593
        %3627 = vst.msk [vmem:[%s325 + $0xd0] sm:$0xff] %vm3600, %v3594
        %3628 = vst.msk [vmem:[%s325 + $0xd8] sm:$0xff] %vm3600, %v3595
        %3629 = vst.msk [vmem:[%s325 + $0xe0] sm:$0xff] %vm3600, %v3596
        %3630 = vst.msk [vmem:[%s325 + $0xe8] sm:$0xff] %vm3600, %v3597
        %3631 = vst.msk [vmem:[%s325 + $0xf0] sm:$0xff] %vm3600, %v3598
        %3632 = vst.msk [vmem:[%s325 + $0xf8] sm:$0xff] %vm3600, %v3599
        %s3633 = sand.u32 %s225, 1
        %s3634 = scalar_lea.sflag [#allocation4], %s3633
        %s3635 = sand.u32 %s225, 1
        %s3636 = smul.addr %s3635, 256
        %s3637 = scalar_lea.vmem [#allocation3], %s3636
        // Predicated region
        $region57: #{tpu_custom_call.1} parent=55 // pred_check
          %p3638 = pneg %p235
        $region58: #{tpu_custom_call.1} parent=55 // pred_check_branch
          %3640 = sbr.rel (%p3638) target = $region60
        $region59: #{tpu_custom_call.1} parent=55 // pred_region
          %3642 = vsyncadd %s3634, 0
          %s3643 = smul.addr %s23, 32
          %s3644 = smul.addr %s3643, 8
          %s3645 = scalar_lea.hbm %s9, %s3644
          %s3646 = sshll.u32 %s3637, 4
          %s3647 = int_to_ptr.vmem [resolvable:$true] %s3646
          %s3648 = sshll.u32 %s3645, 4
          %s3649 = int_to_ptr.hbm [resolvable:$true] %s3648
          %3654 = dma.vmem_to_hbm [thread:$0]  %s3647, 4096, %s3649, %s3634, 128, 128, 8
        $region60: #{tpu_custom_call.1} parent=55 // pred_fallthru
          _
      $region56: #{tpu_custom_call.1} parent=5 // pred_fallthru
        _
      %p3655 = scmp.le.s32.totalorder 2, %s18
      // Predicated region
      $region61: #{tpu_custom_call.1} parent=5 // pred_check
        %p3656 = pneg %p3655
      $region62: #{tpu_custom_call.1} parent=5 // pred_check_branch
        %3658 = sbr.rel (%p3656) target = $region64
      $region63: #{tpu_custom_call.1} parent=5 // pred_region
        %s3659 = ssub.s32 %s18, 2
        // Predicated region
        $region65: #{tpu_custom_call.1} parent=63 // pred_check
          %p3660 = pneg %p241
        $region66: #{tpu_custom_call.1} parent=63 // pred_check_branch
          %3662 = sbr.rel (%p3660) target = $region68
        $region67: #{tpu_custom_call.1} parent=63 // pred_region
          %s3663 = sand.u32 %s226, 1
          %s3664 = scalar_lea.sflag [#allocation4], %s3663
          %s3665 = sand.u32 %s226, 1
          %s3666 = smul.addr %s3665, 256
          %s3667 = scalar_lea.vmem [#allocation3], %s3666
          %3669 = dma.done %s3664, 4096
        $region68: #{tpu_custom_call.1} parent=63 // pred_fallthru
          _
      $region64: #{tpu_custom_call.1} parent=5 // pred_fallthru
        _
    $region6: #{tpu_custom_call.1} parent=1 // loop_footer
      %s22 = sadd.s32 1, %s18
    $region7: #{tpu_custom_call.1} parent=1 // loop_footer_branch
      %17 = sbr.rel target = $region3
    $region8: #{tpu_custom_call.1} parent=1 // loop_exit
      _
    %3670 = vsyncpa [#allocation4], 1
    %s3671 = scalar_lea.sflag [#allocation4], 1
    %3672 = vsyncpa %s3671, 1

</llo_original>
